<compile_context>
chip_gen: v6e
topology: v6e:2x2x1
jax: 0.10.0
libtpu: 0.0.40
codegen_flags: <defaults>
</compile_context>

<pallas_src>
import functools

import jax
import jax.numpy as jnp
import numpy as np
from jax.experimental import pallas as pl
from jax.experimental.pallas import tpu as pltpu


def _se_sigmoid_kernel(t_ref, p_ref, o_ref, *, ks, h, w, bt):
    """One batch tile (bt images) per grid step.

    t_ref : VMEM (ks, w+ks-1, w)       banded-Toeplitz weights (compute dtype)
    p_ref : VMEM (bt, h+ks-1, w+ks-1)  1.0-padded images (compute dtype)
    o_ref : VMEM (bt, h, w)            f32 output
    """
    for b in range(bt):                         # static unroll over the batch tile
        acc = jnp.zeros((h, w), jnp.float32)
        # Fully (statically) unrolled 41-tap row loop: each tap is one MXU matmul
        # of the (h, w+ks-1) row window against the precomputed (w+ks-1, w)
        # Toeplitz slice.  Static slices -> scheduler has full visibility to
        # overlap the next row load with the current matmul.
        for ky in range(ks):
            rows = p_ref[b, ky:ky + h, :]       # (h, w+ks-1) static sublane window
            acc = acc + jnp.dot(rows, t_ref[ky],
                                preferred_element_type=jnp.float32)
        o_ref[b] = acc


def _pick_batch_tile(n, hp, wp, h, w, itemsize, budget_bytes=8 << 20):
    """Largest divisor of n (capped so v7x megacore still sees >= 2 grid steps)
    whose double-buffered padded-input + output blocks fit a conservative VMEM budget."""
    cap = min(8, max(1, n // 2))
    best = 1
    for cand in range(1, cap + 1):
        if n % cand:
            continue
        need = 2 * cand * (hp * wp * itemsize + h * w * 4)   # double-buffered in + out
        if need <= budget_bytes:
            best = cand
    return best


def structuring_element_sigmoid(x, radius, *, gamma=1.0, max_radius=(20, 20),
                                compute_dtype=jnp.bfloat16):
    """Pallas TPU equivalent of StructuringElementSigmoid.forward.

    x: (N, 1, H, W) float32 (NCHW, single channel).  Returns (N, 1, H, W) float32.
    """
    n, c, h, w = x.shape
    assert c == 1, "the 41x41 conv kernel has in_channels == 1"
    ry, rx = max_radius
    ks = 2 * ry + 1
    assert ks == 2 * rx + 1, "square kernel assumed (as in the module defaults)"

    x = x.astype(jnp.float32)
    r = jnp.asarray(radius, jnpp_dtype := jnp.float32)  # noqa: F841 (dtype alias unused)
    gamma = float(gamma)

    # --- (1) Structuring element, built ONCE in plain JAX (hoisted out of the grid).
    xs = jnp.arange(-rx, rx + 1, dtype=jnp.float32)
    ys = jnp.arange(-ry, ry + 1, dtype=jnp.float32)
    X, Y = jnp.meshgrid(xs, ys, indexing="ij")            # matches torch.meshgrid (ij)
    kernel2d = jax.nn.sigmoid(-gamma * (X * X + Y * Y - r * r))        # (ks, ks) f32

    # --- (2) Banded-Toeplitz reformulation: T[ky] has shape (w+ks-1, w) with
    #         T[ky, p, xcol] = kernel2d[ky, p - xcol] for 0 <= p - xcol < ks, else 0,
    #         so (padded_rows @ T[ky])[y, xcol] = sum_kx padded_rows[y, xcol+kx]*K[ky,kx].
    hp, wp = h + 2 * ry, w + 2 * rx
    p_idx = jnp.arange(wp)[:, None]
    c_idx = jnp.arange(w)[None, :]
    diff = p_idx - c_idx                                   # (wp, w) -> kernel column kx
    valid = (diff >= 0) & (diff < ks)
    T = jnp.where(valid[None, :, :],
                  kernel2d[:, jnp.clip(diff, 0, ks - 1)],
                  0.0).astype(compute_dtype)               # (ks, wp, w)

    # --- (3) nn.ConstantPad2d(max_radius[0], 1.0): pad H and W with ones.
    padded = jnp.pad(x[:, 0], ((0, 0), (ry, ry), (rx, rx)),
                     constant_values=1.0).astype(compute_dtype)        # (n, hp, wp)

    itemsize = jnp.dtype(compute_dtype).itemsize
    bt = _pick_batch_tile(n, hp, wp, h, w, itemsize)
    grid = (n // bt,)

    kern = functools.partial(_se_sigmoid_kernel, ks=ks, h=h, w=w, bt=bt)

    out = pl.pallas_call(
        kern,
        out_shape=jax.ShapeDtypeStruct((n, h, w), jnp.float32),
        grid_spec=pltpu.PrefetchScalarGridSpec(
            num_scalar_prefetch=0,
            grid=grid,
            in_specs=[
                # Toeplitz weights: same block every step -> DMA'd once, stays in VMEM.
                pl.BlockSpec((ks, wp, w), lambda b: (0, 0, 0)),
                # Padded image batch tile.
                pl.BlockSpec((bt, hp, wp), lambda b: (b, 0, 0)),
            ],
            out_specs=pl.BlockSpec((bt, h, w), lambda b: (b, 0, 0)),
        ),
        compiler_params=pltpu.CompilerParams(
            # Batch tiles are fully independent (kernel build hoisted out),
            # so the grid axis can be sharded across v7x's two TensorCores.
            dimension_semantics=("parallel",),
        ),
    )(T, padded)

    return out[:, None, :, :]                              # back to NCHW


if __name__ == "__main__":
    key = jax.random.PRNGKey(0)
    # Shapes consistent with the module: batch=2, channels=1 (required), 16x16 spatial.
    x = jax.random.normal(key, (2, 1, 16, 16), dtype=jnp.float32)

    # Deterministic parameters: module defaults radius=0.5, gamma=1.0.
    radius = 0.5
    gamma = 1.0

    out = structuring_element_sigmoid(x, radius, gamma=gamma)
    out = jax.block_until_ready(out)
    assert out.shape == (2, 1, 16, 16)
    got = np.asarray(out)[:, 0]

    # --- Pure-numpy float64 reference of the module math (padding + 41x41 correlation).
    with np.errstate(over="ignore"):
        xs = np.arange(-20, 21, dtype=np.float64)
        Xg, Yg = np.meshgrid(xs, xs, indexing="ij")
        kmat = 1.0 / (1.0 + np.exp(gamma * (Xg ** 2 + Yg ** 2 - radius ** 2)))
    pad_full = np.pad(np.asarray(x, np.float64)[:, 0], ((0, 0), (20, 20), (20, 20)),
                      constant_values=1.0)

    def corr(pad, k):
        r = np.zeros((pad.shape[0], 16, 16), dtype=np.float64)
        for ky in range(41):
            for kx in range(41):
                r += pad[:, ky:ky + 16, kx:kx + 16] * k[ky, kx]
        return r

    ref_full = corr(pad_full, kmat)

    # bf16-quantized reference (same operand quantization as the MXU path, f64 accumulation):
    # verifies the Toeplitz correlation / accumulation logic tightly.
    def to_bf16(a):
        return np.asarray(
            jnp.asarray(np.asarray(a, np.float32)).astype(jnp.bfloat16).astype(jnp.float32),
            dtype=np.float64)

    ref_q = corr(to_bf16(pad_full), to_bf16(kmat.astype(np.float32)))

    np.testing.assert_allclose(got, ref_q, rtol=5e-3, atol=5e-3)    # correlation logic
    np.testing.assert_allclose(got, ref_full, rtol=5e-2, atol=5e-2)  # bf16 quantization sanity
    print("KERNEL_OK")
</pallas_src>

<mosaic_0001>
module attributes {stable_mosaic.version = 11 : i64} {
  func.func @_se_sigmoid_kernel(%arg0: i32, %arg1: memref<41x56x16xbf16, #tpu.memory_space<vmem>>, %arg2: memref<1x56x56xbf16, #tpu.memory_space<vmem>>, %arg3: memref<1x16x16xf32, #tpu.memory_space<vmem>>) attributes {dimension_semantics = [#tpu.dimension_semantics<parallel>], iteration_bounds = array<i64: 2>, scalar_prefetch = 0 : i64, scratch_operands = 0 : i64, tpu.core_type = #tpu.core_type<tc>, window_params = [{pipeline_mode = #tpu.pipeline_mode<synchronous>, transform_indices = @transform_0, window_bounds = array<i64: 41, 56, 16>}, {transform_indices = @transform_1, window_bounds = array<i64: 1, 56, 56>}, {transform_indices = @transform_2, window_bounds = array<i64: 1, 16, 16>}]} {
    %cst = arith.constant 0.000000e+00 : f32
    %0 = vector.broadcast %cst : f32 to vector<16x16xf32>
    %c0 = arith.constant 0 : index
    %c0_0 = arith.constant 0 : index
    %c0_1 = arith.constant 0 : index
    %1 = vector.load %arg2[%c0, %c0_0, %c0_1] : memref<1x56x56xbf16, #tpu.memory_space<vmem>>, vector<1x16x56xbf16>
    %2 = vector.shape_cast %1 : vector<1x16x56xbf16> to vector<16x56xbf16>
    %c0_2 = arith.constant 0 : index
    %c0_3 = arith.constant 0 : index
    %c0_4 = arith.constant 0 : index
    %3 = vector.load %arg1[%c0_2, %c0_3, %c0_4] : memref<41x56x16xbf16, #tpu.memory_space<vmem>>, vector<1x56x16xbf16>
    %4 = vector.shape_cast %3 : vector<1x56x16xbf16> to vector<56x16xbf16>
    %cst_5 = arith.constant dense<0.000000e+00> : vector<16x16xf32>
    %5 = tpu.matmul %2, %4, %cst_5 {dimension_numbers = #tpu.dot_dimension_numbers<[1], [0], [0], [1], [0, 0, 1, 1], [], []>} : vector<16x56xbf16>, vector<56x16xbf16>, vector<16x16xf32> -> vector<16x16xf32>
    %6 = arith.addf %0, %5 : vector<16x16xf32>
    %c0_6 = arith.constant 0 : index
    %c1 = arith.constant 1 : index
    %c0_7 = arith.constant 0 : index
    %7 = vector.load %arg2[%c0_6, %c1, %c0_7] : memref<1x56x56xbf16, #tpu.memory_space<vmem>>, vector<1x16x56xbf16>
    %8 = vector.shape_cast %7 : vector<1x16x56xbf16> to vector<16x56xbf16>
    %c1_8 = arith.constant 1 : index
    %c0_9 = arith.constant 0 : index
    %c0_10 = arith.constant 0 : index
    %9 = vector.load %arg1[%c1_8, %c0_9, %c0_10] : memref<41x56x16xbf16, #tpu.memory_space<vmem>>, vector<1x56x16xbf16>
    %10 = vector.shape_cast %9 : vector<1x56x16xbf16> to vector<56x16xbf16>
    %cst_11 = arith.constant dense<0.000000e+00> : vector<16x16xf32>
    %11 = tpu.matmul %8, %10, %cst_11 {dimension_numbers = #tpu.dot_dimension_numbers<[1], [0], [0], [1], [0, 0, 1, 1], [], []>} : vector<16x56xbf16>, vector<56x16xbf16>, vector<16x16xf32> -> vector<16x16xf32>
    %12 = arith.addf %6, %11 : vector<16x16xf32>
    %c0_12 = arith.constant 0 : index
    %c2 = arith.constant 2 : index
    %c0_13 = arith.constant 0 : index
    %13 = vector.load %arg2[%c0_12, %c2, %c0_13] : memref<1x56x56xbf16, #tpu.memory_space<vmem>>, vector<1x16x56xbf16>
    %14 = vector.shape_cast %13 : vector<1x16x56xbf16> to vector<16x56xbf16>
    %c2_14 = arith.constant 2 : index
    %c0_15 = arith.constant 0 : index
    %c0_16 = arith.constant 0 : index
    %15 = vector.load %arg1[%c2_14, %c0_15, %c0_16] : memref<41x56x16xbf16, #tpu.memory_space<vmem>>, vector<1x56x16xbf16>
    %16 = vector.shape_cast %15 : vector<1x56x16xbf16> to vector<56x16xbf16>
    %cst_17 = arith.constant dense<0.000000e+00> : vector<16x16xf32>
    %17 = tpu.matmul %14, %16, %cst_17 {dimension_numbers = #tpu.dot_dimension_numbers<[1], [0], [0], [1], [0, 0, 1, 1], [], []>} : vector<16x56xbf16>, vector<56x16xbf16>, vector<16x16xf32> -> vector<16x16xf32>
    %18 = arith.addf %12, %17 : vector<16x16xf32>
    %c0_18 = arith.constant 0 : index
    %c3 = arith.constant 3 : index
    %c0_19 = arith.constant 0 : index
    %19 = vector.load %arg2[%c0_18, %c3, %c0_19] : memref<1x56x56xbf16, #tpu.memory_space<vmem>>, vector<1x16x56xbf16>
    %20 = vector.shape_cast %19 : vector<1x16x56xbf16> to vector<16x56xbf16>
    %c3_20 = arith.constant 3 : index
    %c0_21 = arith.constant 0 : index
    %c0_22 = arith.constant 0 : index
    %21 = vector.load %arg1[%c3_20, %c0_21, %c0_22] : memref<41x56x16xbf16, #tpu.memory_space<vmem>>, vector<1x56x16xbf16>
    %22 = vector.shape_cast %21 : vector<1x56x16xbf16> to vector<56x16xbf16>
    %cst_23 = arith.constant dense<0.000000e+00> : vector<16x16xf32>
    %23 = tpu.matmul %20, %22, %cst_23 {dimension_numbers = #tpu.dot_dimension_numbers<[1], [0], [0], [1], [0, 0, 1, 1], [], []>} : vector<16x56xbf16>, vector<56x16xbf16>, vector<16x16xf32> -> vector<16x16xf32>
    %24 = arith.addf %18, %23 : vector<16x16xf32>
    %c0_24 = arith.constant 0 : index
    %c4 = arith.constant 4 : index
    %c0_25 = arith.constant 0 : index
    %25 = vector.load %arg2[%c0_24, %c4, %c0_25] : memref<1x56x56xbf16, #tpu.memory_space<vmem>>, vector<1x16x56xbf16>
    %26 = vector.shape_cast %25 : vector<1x16x56xbf16> to vector<16x56xbf16>
    %c4_26 = arith.constant 4 : index
    %c0_27 = arith.constant 0 : index
    %c0_28 = arith.constant 0 : index
    %27 = vector.load %arg1[%c4_26, %c0_27, %c0_28] : memref<41x56x16xbf16, #tpu.memory_space<vmem>>, vector<1x56x16xbf16>
    %28 = vector.shape_cast %27 : vector<1x56x16xbf16> to vector<56x16xbf16>
    %cst_29 = arith.constant dense<0.000000e+00> : vector<16x16xf32>
    %29 = tpu.matmul %26, %28, %cst_29 {dimension_numbers = #tpu.dot_dimension_numbers<[1], [0], [0], [1], [0, 0, 1, 1], [], []>} : vector<16x56xbf16>, vector<56x16xbf16>, vector<16x16xf32> -> vector<16x16xf32>
    %30 = arith.addf %24, %29 : vector<16x16xf32>
    %c0_30 = arith.constant 0 : index
    %c5 = arith.constant 5 : index
    %c0_31 = arith.constant 0 : index
    %31 = vector.load %arg2[%c0_30, %c5, %c0_31] : memref<1x56x56xbf16, #tpu.memory_space<vmem>>, vector<1x16x56xbf16>
    %32 = vector.shape_cast %31 : vector<1x16x56xbf16> to vector<16x56xbf16>
    %c5_32 = arith.constant 5 : index
    %c0_33 = arith.constant 0 : index
    %c0_34 = arith.constant 0 : index
    %33 = vector.load %arg1[%c5_32, %c0_33, %c0_34] : memref<41x56x16xbf16, #tpu.memory_space<vmem>>, vector<1x56x16xbf16>
    %34 = vector.shape_cast %33 : vector<1x56x16xbf16> to vector<56x16xbf16>
    %cst_35 = arith.constant dense<0.000000e+00> : vector<16x16xf32>
    %35 = tpu.matmul %32, %34, %cst_35 {dimension_numbers = #tpu.dot_dimension_numbers<[1], [0], [0], [1], [0, 0, 1, 1], [], []>} : vector<16x56xbf16>, vector<56x16xbf16>, vector<16x16xf32> -> vector<16x16xf32>
    %36 = arith.addf %30, %35 : vector<16x16xf32>
    %c0_36 = arith.constant 0 : index
    %c6 = arith.constant 6 : index
    %c0_37 = arith.constant 0 : index
    %37 = vector.load %arg2[%c0_36, %c6, %c0_37] : memref<1x56x56xbf16, #tpu.memory_space<vmem>>, vector<1x16x56xbf16>
    %38 = vector.shape_cast %37 : vector<1x16x56xbf16> to vector<16x56xbf16>
    %c6_38 = arith.constant 6 : index
    %c0_39 = arith.constant 0 : index
    %c0_40 = arith.constant 0 : index
    %39 = vector.load %arg1[%c6_38, %c0_39, %c0_40] : memref<41x56x16xbf16, #tpu.memory_space<vmem>>, vector<1x56x16xbf16>
    %40 = vector.shape_cast %39 : vector<1x56x16xbf16> to vector<56x16xbf16>
    %cst_41 = arith.constant dense<0.000000e+00> : vector<16x16xf32>
    %41 = tpu.matmul %38, %40, %cst_41 {dimension_numbers = #tpu.dot_dimension_numbers<[1], [0], [0], [1], [0, 0, 1, 1], [], []>} : vector<16x56xbf16>, vector<56x16xbf16>, vector<16x16xf32> -> vector<16x16xf32>
    %42 = arith.addf %36, %41 : vector<16x16xf32>
    %c0_42 = arith.constant 0 : index
    %c7 = arith.constant 7 : index
    %c0_43 = arith.constant 0 : index
    %43 = vector.load %arg2[%c0_42, %c7, %c0_43] : memref<1x56x56xbf16, #tpu.memory_space<vmem>>, vector<1x16x56xbf16>
    %44 = vector.shape_cast %43 : vector<1x16x56xbf16> to vector<16x56xbf16>
    %c7_44 = arith.constant 7 : index
    %c0_45 = arith.constant 0 : index
    %c0_46 = arith.constant 0 : index
    %45 = vector.load %arg1[%c7_44, %c0_45, %c0_46] : memref<41x56x16xbf16, #tpu.memory_space<vmem>>, vector<1x56x16xbf16>
    %46 = vector.shape_cast %45 : vector<1x56x16xbf16> to vector<56x16xbf16>
    %cst_47 = arith.constant dense<0.000000e+00> : vector<16x16xf32>
    %47 = tpu.matmul %44, %46, %cst_47 {dimension_numbers = #tpu.dot_dimension_numbers<[1], [0], [0], [1], [0, 0, 1, 1], [], []>} : vector<16x56xbf16>, vector<56x16xbf16>, vector<16x16xf32> -> vector<16x16xf32>
    %48 = arith.addf %42, %47 : vector<16x16xf32>
    %c0_48 = arith.constant 0 : index
    %c8 = arith.constant 8 : index
    %c0_49 = arith.constant 0 : index
    %49 = vector.load %arg2[%c0_48, %c8, %c0_49] : memref<1x56x56xbf16, #tpu.memory_space<vmem>>, vector<1x16x56xbf16>
    %50 = vector.shape_cast %49 : vector<1x16x56xbf16> to vector<16x56xbf16>
    %c8_50 = arith.constant 8 : index
    %c0_51 = arith.constant 0 : index
    %c0_52 = arith.constant 0 : index
    %51 = vector.load %arg1[%c8_50, %c0_51, %c0_52] : memref<41x56x16xbf16, #tpu.memory_space<vmem>>, vector<1x56x16xbf16>
    %52 = vector.shape_cast %51 : vector<1x56x16xbf16> to vector<56x16xbf16>
    %cst_53 = arith.constant dense<0.000000e+00> : vector<16x16xf32>
    %53 = tpu.matmul %50, %52, %cst_53 {dimension_numbers = #tpu.dot_dimension_numbers<[1], [0], [0], [1], [0, 0, 1, 1], [], []>} : vector<16x56xbf16>, vector<56x16xbf16>, vector<16x16xf32> -> vector<16x16xf32>
    %54 = arith.addf %48, %53 : vector<16x16xf32>
    %c0_54 = arith.constant 0 : index
    %c9 = arith.constant 9 : index
    %c0_55 = arith.constant 0 : index
    %55 = vector.load %arg2[%c0_54, %c9, %c0_55] : memref<1x56x56xbf16, #tpu.memory_space<vmem>>, vector<1x16x56xbf16>
    %56 = vector.shape_cast %55 : vector<1x16x56xbf16> to vector<16x56xbf16>
    %c9_56 = arith.constant 9 : index
    %c0_57 = arith.constant 0 : index
    %c0_58 = arith.constant 0 : index
    %57 = vector.load %arg1[%c9_56, %c0_57, %c0_58] : memref<41x56x16xbf16, #tpu.memory_space<vmem>>, vector<1x56x16xbf16>
    %58 = vector.shape_cast %57 : vector<1x56x16xbf16> to vector<56x16xbf16>
    %cst_59 = arith.constant dense<0.000000e+00> : vector<16x16xf32>
    %59 = tpu.matmul %56, %58, %cst_59 {dimension_numbers = #tpu.dot_dimension_numbers<[1], [0], [0], [1], [0, 0, 1, 1], [], []>} : vector<16x56xbf16>, vector<56x16xbf16>, vector<16x16xf32> -> vector<16x16xf32>
    %60 = arith.addf %54, %59 : vector<16x16xf32>
    %c0_60 = arith.constant 0 : index
    %c10 = arith.constant 10 : index
    %c0_61 = arith.constant 0 : index
    %61 = vector.load %arg2[%c0_60, %c10, %c0_61] : memref<1x56x56xbf16, #tpu.memory_space<vmem>>, vector<1x16x56xbf16>
    %62 = vector.shape_cast %61 : vector<1x16x56xbf16> to vector<16x56xbf16>
    %c10_62 = arith.constant 10 : index
    %c0_63 = arith.constant 0 : index
    %c0_64 = arith.constant 0 : index
    %63 = vector.load %arg1[%c10_62, %c0_63, %c0_64] : memref<41x56x16xbf16, #tpu.memory_space<vmem>>, vector<1x56x16xbf16>
    %64 = vector.shape_cast %63 : vector<1x56x16xbf16> to vector<56x16xbf16>
    %cst_65 = arith.constant dense<0.000000e+00> : vector<16x16xf32>
    %65 = tpu.matmul %62, %64, %cst_65 {dimension_numbers = #tpu.dot_dimension_numbers<[1], [0], [0], [1], [0, 0, 1, 1], [], []>} : vector<16x56xbf16>, vector<56x16xbf16>, vector<16x16xf32> -> vector<16x16xf32>
    %66 = arith.addf %60, %65 : vector<16x16xf32>
    %c0_66 = arith.constant 0 : index
    %c11 = arith.constant 11 : index
    %c0_67 = arith.constant 0 : index
    %67 = vector.load %arg2[%c0_66, %c11, %c0_67] : memref<1x56x56xbf16, #tpu.memory_space<vmem>>, vector<1x16x56xbf16>
    %68 = vector.shape_cast %67 : vector<1x16x56xbf16> to vector<16x56xbf16>
    %c11_68 = arith.constant 11 : index
    %c0_69 = arith.constant 0 : index
    %c0_70 = arith.constant 0 : index
    %69 = vector.load %arg1[%c11_68, %c0_69, %c0_70] : memref<41x56x16xbf16, #tpu.memory_space<vmem>>, vector<1x56x16xbf16>
    %70 = vector.shape_cast %69 : vector<1x56x16xbf16> to vector<56x16xbf16>
    %cst_71 = arith.constant dense<0.000000e+00> : vector<16x16xf32>
    %71 = tpu.matmul %68, %70, %cst_71 {dimension_numbers = #tpu.dot_dimension_numbers<[1], [0], [0], [1], [0, 0, 1, 1], [], []>} : vector<16x56xbf16>, vector<56x16xbf16>, vector<16x16xf32> -> vector<16x16xf32>
    %72 = arith.addf %66, %71 : vector<16x16xf32>
    %c0_72 = arith.constant 0 : index
    %c12 = arith.constant 12 : index
    %c0_73 = arith.constant 0 : index
    %73 = vector.load %arg2[%c0_72, %c12, %c0_73] : memref<1x56x56xbf16, #tpu.memory_space<vmem>>, vector<1x16x56xbf16>
    %74 = vector.shape_cast %73 : vector<1x16x56xbf16> to vector<16x56xbf16>
    %c12_74 = arith.constant 12 : index
    %c0_75 = arith.constant 0 : index
    %c0_76 = arith.constant 0 : index
    %75 = vector.load %arg1[%c12_74, %c0_75, %c0_76] : memref<41x56x16xbf16, #tpu.memory_space<vmem>>, vector<1x56x16xbf16>
    %76 = vector.shape_cast %75 : vector<1x56x16xbf16> to vector<56x16xbf16>
    %cst_77 = arith.constant dense<0.000000e+00> : vector<16x16xf32>
    %77 = tpu.matmul %74, %76, %cst_77 {dimension_numbers = #tpu.dot_dimension_numbers<[1], [0], [0], [1], [0, 0, 1, 1], [], []>} : vector<16x56xbf16>, vector<56x16xbf16>, vector<16x16xf32> -> vector<16x16xf32>
    %78 = arith.addf %72, %77 : vector<16x16xf32>
    %c0_78 = arith.constant 0 : index
    %c13 = arith.constant 13 : index
    %c0_79 = arith.constant 0 : index
    %79 = vector.load %arg2[%c0_78, %c13, %c0_79] : memref<1x56x56xbf16, #tpu.memory_space<vmem>>, vector<1x16x56xbf16>
    %80 = vector.shape_cast %79 : vector<1x16x56xbf16> to vector<16x56xbf16>
    %c13_80 = arith.constant 13 : index
    %c0_81 = arith.constant 0 : index
    %c0_82 = arith.constant 0 : index
    %81 = vector.load %arg1[%c13_80, %c0_81, %c0_82] : memref<41x56x16xbf16, #tpu.memory_space<vmem>>, vector<1x56x16xbf16>
    %82 = vector.shape_cast %81 : vector<1x56x16xbf16> to vector<56x16xbf16>
    %cst_83 = arith.constant dense<0.000000e+00> : vector<16x16xf32>
    %83 = tpu.matmul %80, %82, %cst_83 {dimension_numbers = #tpu.dot_dimension_numbers<[1], [0], [0], [1], [0, 0, 1, 1], [], []>} : vector<16x56xbf16>, vector<56x16xbf16>, vector<16x16xf32> -> vector<16x16xf32>
    %84 = arith.addf %78, %83 : vector<16x16xf32>
    %c0_84 = arith.constant 0 : index
    %c14 = arith.constant 14 : index
    %c0_85 = arith.constant 0 : index
    %85 = vector.load %arg2[%c0_84, %c14, %c0_85] : memref<1x56x56xbf16, #tpu.memory_space<vmem>>, vector<1x16x56xbf16>
    %86 = vector.shape_cast %85 : vector<1x16x56xbf16> to vector<16x56xbf16>
    %c14_86 = arith.constant 14 : index
    %c0_87 = arith.constant 0 : index
    %c0_88 = arith.constant 0 : index
    %87 = vector.load %arg1[%c14_86, %c0_87, %c0_88] : memref<41x56x16xbf16, #tpu.memory_space<vmem>>, vector<1x56x16xbf16>
    %88 = vector.shape_cast %87 : vector<1x56x16xbf16> to vector<56x16xbf16>
    %cst_89 = arith.constant dense<0.000000e+00> : vector<16x16xf32>
    %89 = tpu.matmul %86, %88, %cst_89 {dimension_numbers = #tpu.dot_dimension_numbers<[1], [0], [0], [1], [0, 0, 1, 1], [], []>} : vector<16x56xbf16>, vector<56x16xbf16>, vector<16x16xf32> -> vector<16x16xf32>
    %90 = arith.addf %84, %89 : vector<16x16xf32>
    %c0_90 = arith.constant 0 : index
    %c15 = arith.constant 15 : index
    %c0_91 = arith.constant 0 : index
    %91 = vector.load %arg2[%c0_90, %c15, %c0_91] : memref<1x56x56xbf16, #tpu.memory_space<vmem>>, vector<1x16x56xbf16>
    %92 = vector.shape_cast %91 : vector<1x16x56xbf16> to vector<16x56xbf16>
    %c15_92 = arith.constant 15 : index
    %c0_93 = arith.constant 0 : index
    %c0_94 = arith.constant 0 : index
    %93 = vector.load %arg1[%c15_92, %c0_93, %c0_94] : memref<41x56x16xbf16, #tpu.memory_space<vmem>>, vector<1x56x16xbf16>
    %94 = vector.shape_cast %93 : vector<1x56x16xbf16> to vector<56x16xbf16>
    %cst_95 = arith.constant dense<0.000000e+00> : vector<16x16xf32>
    %95 = tpu.matmul %92, %94, %cst_95 {dimension_numbers = #tpu.dot_dimension_numbers<[1], [0], [0], [1], [0, 0, 1, 1], [], []>} : vector<16x56xbf16>, vector<56x16xbf16>, vector<16x16xf32> -> vector<16x16xf32>
    %96 = arith.addf %90, %95 : vector<16x16xf32>
    %c0_96 = arith.constant 0 : index
    %c16 = arith.constant 16 : index
    %c0_97 = arith.constant 0 : index
    %97 = vector.load %arg2[%c0_96, %c16, %c0_97] : memref<1x56x56xbf16, #tpu.memory_space<vmem>>, vector<1x16x56xbf16>
    %98 = vector.shape_cast %97 : vector<1x16x56xbf16> to vector<16x56xbf16>
    %c16_98 = arith.constant 16 : index
    %c0_99 = arith.constant 0 : index
    %c0_100 = arith.constant 0 : index
    %99 = vector.load %arg1[%c16_98, %c0_99, %c0_100] : memref<41x56x16xbf16, #tpu.memory_space<vmem>>, vector<1x56x16xbf16>
    %100 = vector.shape_cast %99 : vector<1x56x16xbf16> to vector<56x16xbf16>
    %cst_101 = arith.constant dense<0.000000e+00> : vector<16x16xf32>
    %101 = tpu.matmul %98, %100, %cst_101 {dimension_numbers = #tpu.dot_dimension_numbers<[1], [0], [0], [1], [0, 0, 1, 1], [], []>} : vector<16x56xbf16>, vector<56x16xbf16>, vector<16x16xf32> -> vector<16x16xf32>
    %102 = arith.addf %96, %101 : vector<16x16xf32>
    %c0_102 = arith.constant 0 : index
    %c17 = arith.constant 17 : index
    %c0_103 = arith.constant 0 : index
    %103 = vector.load %arg2[%c0_102, %c17, %c0_103] : memref<1x56x56xbf16, #tpu.memory_space<vmem>>, vector<1x16x56xbf16>
    %104 = vector.shape_cast %103 : vector<1x16x56xbf16> to vector<16x56xbf16>
    %c17_104 = arith.constant 17 : index
    %c0_105 = arith.constant 0 : index
    %c0_106 = arith.constant 0 : index
    %105 = vector.load %arg1[%c17_104, %c0_105, %c0_106] : memref<41x56x16xbf16, #tpu.memory_space<vmem>>, vector<1x56x16xbf16>
    %106 = vector.shape_cast %105 : vector<1x56x16xbf16> to vector<56x16xbf16>
    %cst_107 = arith.constant dense<0.000000e+00> : vector<16x16xf32>
    %107 = tpu.matmul %104, %106, %cst_107 {dimension_numbers = #tpu.dot_dimension_numbers<[1], [0], [0], [1], [0, 0, 1, 1], [], []>} : vector<16x56xbf16>, vector<56x16xbf16>, vector<16x16xf32> -> vector<16x16xf32>
    %108 = arith.addf %102, %107 : vector<16x16xf32>
    %c0_108 = arith.constant 0 : index
    %c18 = arith.constant 18 : index
    %c0_109 = arith.constant 0 : index
    %109 = vector.load %arg2[%c0_108, %c18, %c0_109] : memref<1x56x56xbf16, #tpu.memory_space<vmem>>, vector<1x16x56xbf16>
    %110 = vector.shape_cast %109 : vector<1x16x56xbf16> to vector<16x56xbf16>
    %c18_110 = arith.constant 18 : index
    %c0_111 = arith.constant 0 : index
    %c0_112 = arith.constant 0 : index
    %111 = vector.load %arg1[%c18_110, %c0_111, %c0_112] : memref<41x56x16xbf16, #tpu.memory_space<vmem>>, vector<1x56x16xbf16>
    %112 = vector.shape_cast %111 : vector<1x56x16xbf16> to vector<56x16xbf16>
    %cst_113 = arith.constant dense<0.000000e+00> : vector<16x16xf32>
    %113 = tpu.matmul %110, %112, %cst_113 {dimension_numbers = #tpu.dot_dimension_numbers<[1], [0], [0], [1], [0, 0, 1, 1], [], []>} : vector<16x56xbf16>, vector<56x16xbf16>, vector<16x16xf32> -> vector<16x16xf32>
    %114 = arith.addf %108, %113 : vector<16x16xf32>
    %c0_114 = arith.constant 0 : index
    %c19 = arith.constant 19 : index
    %c0_115 = arith.constant 0 : index
    %115 = vector.load %arg2[%c0_114, %c19, %c0_115] : memref<1x56x56xbf16, #tpu.memory_space<vmem>>, vector<1x16x56xbf16>
    %116 = vector.shape_cast %115 : vector<1x16x56xbf16> to vector<16x56xbf16>
    %c19_116 = arith.constant 19 : index
    %c0_117 = arith.constant 0 : index
    %c0_118 = arith.constant 0 : index
    %117 = vector.load %arg1[%c19_116, %c0_117, %c0_118] : memref<41x56x16xbf16, #tpu.memory_space<vmem>>, vector<1x56x16xbf16>
    %118 = vector.shape_cast %117 : vector<1x56x16xbf16> to vector<56x16xbf16>
    %cst_119 = arith.constant dense<0.000000e+00> : vector<16x16xf32>
    %119 = tpu.matmul %116, %118, %cst_119 {dimension_numbers = #tpu.dot_dimension_numbers<[1], [0], [0], [1], [0, 0, 1, 1], [], []>} : vector<16x56xbf16>, vector<56x16xbf16>, vector<16x16xf32> -> vector<16x16xf32>
    %120 = arith.addf %114, %119 : vector<16x16xf32>
    %c0_120 = arith.constant 0 : index
    %c20 = arith.constant 20 : index
    %c0_121 = arith.constant 0 : index
    %121 = vector.load %arg2[%c0_120, %c20, %c0_121] : memref<1x56x56xbf16, #tpu.memory_space<vmem>>, vector<1x16x56xbf16>
    %122 = vector.shape_cast %121 : vector<1x16x56xbf16> to vector<16x56xbf16>
    %c20_122 = arith.constant 20 : index
    %c0_123 = arith.constant 0 : index
    %c0_124 = arith.constant 0 : index
    %123 = vector.load %arg1[%c20_122, %c0_123, %c0_124] : memref<41x56x16xbf16, #tpu.memory_space<vmem>>, vector<1x56x16xbf16>
    %124 = vector.shape_cast %123 : vector<1x56x16xbf16> to vector<56x16xbf16>
    %cst_125 = arith.constant dense<0.000000e+00> : vector<16x16xf32>
    %125 = tpu.matmul %122, %124, %cst_125 {dimension_numbers = #tpu.dot_dimension_numbers<[1], [0], [0], [1], [0, 0, 1, 1], [], []>} : vector<16x56xbf16>, vector<56x16xbf16>, vector<16x16xf32> -> vector<16x16xf32>
    %126 = arith.addf %120, %125 : vector<16x16xf32>
    %c0_126 = arith.constant 0 : index
    %c21 = arith.constant 21 : index
    %c0_127 = arith.constant 0 : index
    %127 = vector.load %arg2[%c0_126, %c21, %c0_127] : memref<1x56x56xbf16, #tpu.memory_space<vmem>>, vector<1x16x56xbf16>
    %128 = vector.shape_cast %127 : vector<1x16x56xbf16> to vector<16x56xbf16>
    %c21_128 = arith.constant 21 : index
    %c0_129 = arith.constant 0 : index
    %c0_130 = arith.constant 0 : index
    %129 = vector.load %arg1[%c21_128, %c0_129, %c0_130] : memref<41x56x16xbf16, #tpu.memory_space<vmem>>, vector<1x56x16xbf16>
    %130 = vector.shape_cast %129 : vector<1x56x16xbf16> to vector<56x16xbf16>
    %cst_131 = arith.constant dense<0.000000e+00> : vector<16x16xf32>
    %131 = tpu.matmul %128, %130, %cst_131 {dimension_numbers = #tpu.dot_dimension_numbers<[1], [0], [0], [1], [0, 0, 1, 1], [], []>} : vector<16x56xbf16>, vector<56x16xbf16>, vector<16x16xf32> -> vector<16x16xf32>
    %132 = arith.addf %126, %131 : vector<16x16xf32>
    %c0_132 = arith.constant 0 : index
    %c22 = arith.constant 22 : index
    %c0_133 = arith.constant 0 : index
    %133 = vector.load %arg2[%c0_132, %c22, %c0_133] : memref<1x56x56xbf16, #tpu.memory_space<vmem>>, vector<1x16x56xbf16>
    %134 = vector.shape_cast %133 : vector<1x16x56xbf16> to vector<16x56xbf16>
    %c22_134 = arith.constant 22 : index
    %c0_135 = arith.constant 0 : index
    %c0_136 = arith.constant 0 : index
    %135 = vector.load %arg1[%c22_134, %c0_135, %c0_136] : memref<41x56x16xbf16, #tpu.memory_space<vmem>>, vector<1x56x16xbf16>
    %136 = vector.shape_cast %135 : vector<1x56x16xbf16> to vector<56x16xbf16>
    %cst_137 = arith.constant dense<0.000000e+00> : vector<16x16xf32>
    %137 = tpu.matmul %134, %136, %cst_137 {dimension_numbers = #tpu.dot_dimension_numbers<[1], [0], [0], [1], [0, 0, 1, 1], [], []>} : vector<16x56xbf16>, vector<56x16xbf16>, vector<16x16xf32> -> vector<16x16xf32>
    %138 = arith.addf %132, %137 : vector<16x16xf32>
    %c0_138 = arith.constant 0 : index
    %c23 = arith.constant 23 : index
    %c0_139 = arith.constant 0 : index
    %139 = vector.load %arg2[%c0_138, %c23, %c0_139] : memref<1x56x56xbf16, #tpu.memory_space<vmem>>, vector<1x16x56xbf16>
    %140 = vector.shape_cast %139 : vector<1x16x56xbf16> to vector<16x56xbf16>
    %c23_140 = arith.constant 23 : index
    %c0_141 = arith.constant 0 : index
    %c0_142 = arith.constant 0 : index
    %141 = vector.load %arg1[%c23_140, %c0_141, %c0_142] : memref<41x56x16xbf16, #tpu.memory_space<vmem>>, vector<1x56x16xbf16>
    %142 = vector.shape_cast %141 : vector<1x56x16xbf16> to vector<56x16xbf16>
    %cst_143 = arith.constant dense<0.000000e+00> : vector<16x16xf32>
    %143 = tpu.matmul %140, %142, %cst_143 {dimension_numbers = #tpu.dot_dimension_numbers<[1], [0], [0], [1], [0, 0, 1, 1], [], []>} : vector<16x56xbf16>, vector<56x16xbf16>, vector<16x16xf32> -> vector<16x16xf32>
    %144 = arith.addf %138, %143 : vector<16x16xf32>
    %c0_144 = arith.constant 0 : index
    %c24 = arith.constant 24 : index
    %c0_145 = arith.constant 0 : index
    %145 = vector.load %arg2[%c0_144, %c24, %c0_145] : memref<1x56x56xbf16, #tpu.memory_space<vmem>>, vector<1x16x56xbf16>
    %146 = vector.shape_cast %145 : vector<1x16x56xbf16> to vector<16x56xbf16>
    %c24_146 = arith.constant 24 : index
    %c0_147 = arith.constant 0 : index
    %c0_148 = arith.constant 0 : index
    %147 = vector.load %arg1[%c24_146, %c0_147, %c0_148] : memref<41x56x16xbf16, #tpu.memory_space<vmem>>, vector<1x56x16xbf16>
    %148 = vector.shape_cast %147 : vector<1x56x16xbf16> to vector<56x16xbf16>
    %cst_149 = arith.constant dense<0.000000e+00> : vector<16x16xf32>
    %149 = tpu.matmul %146, %148, %cst_149 {dimension_numbers = #tpu.dot_dimension_numbers<[1], [0], [0], [1], [0, 0, 1, 1], [], []>} : vector<16x56xbf16>, vector<56x16xbf16>, vector<16x16xf32> -> vector<16x16xf32>
    %150 = arith.addf %144, %149 : vector<16x16xf32>
    %c0_150 = arith.constant 0 : index
    %c25 = arith.constant 25 : index
    %c0_151 = arith.constant 0 : index
    %151 = vector.load %arg2[%c0_150, %c25, %c0_151] : memref<1x56x56xbf16, #tpu.memory_space<vmem>>, vector<1x16x56xbf16>
    %152 = vector.shape_cast %151 : vector<1x16x56xbf16> to vector<16x56xbf16>
    %c25_152 = arith.constant 25 : index
    %c0_153 = arith.constant 0 : index
    %c0_154 = arith.constant 0 : index
    %153 = vector.load %arg1[%c25_152, %c0_153, %c0_154] : memref<41x56x16xbf16, #tpu.memory_space<vmem>>, vector<1x56x16xbf16>
    %154 = vector.shape_cast %153 : vector<1x56x16xbf16> to vector<56x16xbf16>
    %cst_155 = arith.constant dense<0.000000e+00> : vector<16x16xf32>
    %155 = tpu.matmul %152, %154, %cst_155 {dimension_numbers = #tpu.dot_dimension_numbers<[1], [0], [0], [1], [0, 0, 1, 1], [], []>} : vector<16x56xbf16>, vector<56x16xbf16>, vector<16x16xf32> -> vector<16x16xf32>
    %156 = arith.addf %150, %155 : vector<16x16xf32>
    %c0_156 = arith.constant 0 : index
    %c26 = arith.constant 26 : index
    %c0_157 = arith.constant 0 : index
    %157 = vector.load %arg2[%c0_156, %c26, %c0_157] : memref<1x56x56xbf16, #tpu.memory_space<vmem>>, vector<1x16x56xbf16>
    %158 = vector.shape_cast %157 : vector<1x16x56xbf16> to vector<16x56xbf16>
    %c26_158 = arith.constant 26 : index
    %c0_159 = arith.constant 0 : index
    %c0_160 = arith.constant 0 : index
    %159 = vector.load %arg1[%c26_158, %c0_159, %c0_160] : memref<41x56x16xbf16, #tpu.memory_space<vmem>>, vector<1x56x16xbf16>
    %160 = vector.shape_cast %159 : vector<1x56x16xbf16> to vector<56x16xbf16>
    %cst_161 = arith.constant dense<0.000000e+00> : vector<16x16xf32>
    %161 = tpu.matmul %158, %160, %cst_161 {dimension_numbers = #tpu.dot_dimension_numbers<[1], [0], [0], [1], [0, 0, 1, 1], [], []>} : vector<16x56xbf16>, vector<56x16xbf16>, vector<16x16xf32> -> vector<16x16xf32>
    %162 = arith.addf %156, %161 : vector<16x16xf32>
    %c0_162 = arith.constant 0 : index
    %c27 = arith.constant 27 : index
    %c0_163 = arith.constant 0 : index
    %163 = vector.load %arg2[%c0_162, %c27, %c0_163] : memref<1x56x56xbf16, #tpu.memory_space<vmem>>, vector<1x16x56xbf16>
    %164 = vector.shape_cast %163 : vector<1x16x56xbf16> to vector<16x56xbf16>
    %c27_164 = arith.constant 27 : index
    %c0_165 = arith.constant 0 : index
    %c0_166 = arith.constant 0 : index
    %165 = vector.load %arg1[%c27_164, %c0_165, %c0_166] : memref<41x56x16xbf16, #tpu.memory_space<vmem>>, vector<1x56x16xbf16>
    %166 = vector.shape_cast %165 : vector<1x56x16xbf16> to vector<56x16xbf16>
    %cst_167 = arith.constant dense<0.000000e+00> : vector<16x16xf32>
    %167 = tpu.matmul %164, %166, %cst_167 {dimension_numbers = #tpu.dot_dimension_numbers<[1], [0], [0], [1], [0, 0, 1, 1], [], []>} : vector<16x56xbf16>, vector<56x16xbf16>, vector<16x16xf32> -> vector<16x16xf32>
    %168 = arith.addf %162, %167 : vector<16x16xf32>
    %c0_168 = arith.constant 0 : index
    %c28 = arith.constant 28 : index
    %c0_169 = arith.constant 0 : index
    %169 = vector.load %arg2[%c0_168, %c28, %c0_169] : memref<1x56x56xbf16, #tpu.memory_space<vmem>>, vector<1x16x56xbf16>
    %170 = vector.shape_cast %169 : vector<1x16x56xbf16> to vector<16x56xbf16>
    %c28_170 = arith.constant 28 : index
    %c0_171 = arith.constant 0 : index
    %c0_172 = arith.constant 0 : index
    %171 = vector.load %arg1[%c28_170, %c0_171, %c0_172] : memref<41x56x16xbf16, #tpu.memory_space<vmem>>, vector<1x56x16xbf16>
    %172 = vector.shape_cast %171 : vector<1x56x16xbf16> to vector<56x16xbf16>
    %cst_173 = arith.constant dense<0.000000e+00> : vector<16x16xf32>
    %173 = tpu.matmul %170, %172, %cst_173 {dimension_numbers = #tpu.dot_dimension_numbers<[1], [0], [0], [1], [0, 0, 1, 1], [], []>} : vector<16x56xbf16>, vector<56x16xbf16>, vector<16x16xf32> -> vector<16x16xf32>
    %174 = arith.addf %168, %173 : vector<16x16xf32>
    %c0_174 = arith.constant 0 : index
    %c29 = arith.constant 29 : index
    %c0_175 = arith.constant 0 : index
    %175 = vector.load %arg2[%c0_174, %c29, %c0_175] : memref<1x56x56xbf16, #tpu.memory_space<vmem>>, vector<1x16x56xbf16>
    %176 = vector.shape_cast %175 : vector<1x16x56xbf16> to vector<16x56xbf16>
    %c29_176 = arith.constant 29 : index
    %c0_177 = arith.constant 0 : index
    %c0_178 = arith.constant 0 : index
    %177 = vector.load %arg1[%c29_176, %c0_177, %c0_178] : memref<41x56x16xbf16, #tpu.memory_space<vmem>>, vector<1x56x16xbf16>
    %178 = vector.shape_cast %177 : vector<1x56x16xbf16> to vector<56x16xbf16>
    %cst_179 = arith.constant dense<0.000000e+00> : vector<16x16xf32>
    %179 = tpu.matmul %176, %178, %cst_179 {dimension_numbers = #tpu.dot_dimension_numbers<[1], [0], [0], [1], [0, 0, 1, 1], [], []>} : vector<16x56xbf16>, vector<56x16xbf16>, vector<16x16xf32> -> vector<16x16xf32>
    %180 = arith.addf %174, %179 : vector<16x16xf32>
    %c0_180 = arith.constant 0 : index
    %c30 = arith.constant 30 : index
    %c0_181 = arith.constant 0 : index
    %181 = vector.load %arg2[%c0_180, %c30, %c0_181] : memref<1x56x56xbf16, #tpu.memory_space<vmem>>, vector<1x16x56xbf16>
    %182 = vector.shape_cast %181 : vector<1x16x56xbf16> to vector<16x56xbf16>
    %c30_182 = arith.constant 30 : index
    %c0_183 = arith.constant 0 : index
    %c0_184 = arith.constant 0 : index
    %183 = vector.load %arg1[%c30_182, %c0_183, %c0_184] : memref<41x56x16xbf16, #tpu.memory_space<vmem>>, vector<1x56x16xbf16>
    %184 = vector.shape_cast %183 : vector<1x56x16xbf16> to vector<56x16xbf16>
    %cst_185 = arith.constant dense<0.000000e+00> : vector<16x16xf32>
    %185 = tpu.matmul %182, %184, %cst_185 {dimension_numbers = #tpu.dot_dimension_numbers<[1], [0], [0], [1], [0, 0, 1, 1], [], []>} : vector<16x56xbf16>, vector<56x16xbf16>, vector<16x16xf32> -> vector<16x16xf32>
    %186 = arith.addf %180, %185 : vector<16x16xf32>
    %c0_186 = arith.constant 0 : index
    %c31 = arith.constant 31 : index
    %c0_187 = arith.constant 0 : index
    %187 = vector.load %arg2[%c0_186, %c31, %c0_187] : memref<1x56x56xbf16, #tpu.memory_space<vmem>>, vector<1x16x56xbf16>
    %188 = vector.shape_cast %187 : vector<1x16x56xbf16> to vector<16x56xbf16>
    %c31_188 = arith.constant 31 : index
    %c0_189 = arith.constant 0 : index
    %c0_190 = arith.constant 0 : index
    %189 = vector.load %arg1[%c31_188, %c0_189, %c0_190] : memref<41x56x16xbf16, #tpu.memory_space<vmem>>, vector<1x56x16xbf16>
    %190 = vector.shape_cast %189 : vector<1x56x16xbf16> to vector<56x16xbf16>
    %cst_191 = arith.constant dense<0.000000e+00> : vector<16x16xf32>
    %191 = tpu.matmul %188, %190, %cst_191 {dimension_numbers = #tpu.dot_dimension_numbers<[1], [0], [0], [1], [0, 0, 1, 1], [], []>} : vector<16x56xbf16>, vector<56x16xbf16>, vector<16x16xf32> -> vector<16x16xf32>
    %192 = arith.addf %186, %191 : vector<16x16xf32>
    %c0_192 = arith.constant 0 : index
    %c32 = arith.constant 32 : index
    %c0_193 = arith.constant 0 : index
    %193 = vector.load %arg2[%c0_192, %c32, %c0_193] : memref<1x56x56xbf16, #tpu.memory_space<vmem>>, vector<1x16x56xbf16>
    %194 = vector.shape_cast %193 : vector<1x16x56xbf16> to vector<16x56xbf16>
    %c32_194 = arith.constant 32 : index
    %c0_195 = arith.constant 0 : index
    %c0_196 = arith.constant 0 : index
    %195 = vector.load %arg1[%c32_194, %c0_195, %c0_196] : memref<41x56x16xbf16, #tpu.memory_space<vmem>>, vector<1x56x16xbf16>
    %196 = vector.shape_cast %195 : vector<1x56x16xbf16> to vector<56x16xbf16>
    %cst_197 = arith.constant dense<0.000000e+00> : vector<16x16xf32>
    %197 = tpu.matmul %194, %196, %cst_197 {dimension_numbers = #tpu.dot_dimension_numbers<[1], [0], [0], [1], [0, 0, 1, 1], [], []>} : vector<16x56xbf16>, vector<56x16xbf16>, vector<16x16xf32> -> vector<16x16xf32>
    %198 = arith.addf %192, %197 : vector<16x16xf32>
    %c0_198 = arith.constant 0 : index
    %c33 = arith.constant 33 : index
    %c0_199 = arith.constant 0 : index
    %199 = vector.load %arg2[%c0_198, %c33, %c0_199] : memref<1x56x56xbf16, #tpu.memory_space<vmem>>, vector<1x16x56xbf16>
    %200 = vector.shape_cast %199 : vector<1x16x56xbf16> to vector<16x56xbf16>
    %c33_200 = arith.constant 33 : index
    %c0_201 = arith.constant 0 : index
    %c0_202 = arith.constant 0 : index
    %201 = vector.load %arg1[%c33_200, %c0_201, %c0_202] : memref<41x56x16xbf16, #tpu.memory_space<vmem>>, vector<1x56x16xbf16>
    %202 = vector.shape_cast %201 : vector<1x56x16xbf16> to vector<56x16xbf16>
    %cst_203 = arith.constant dense<0.000000e+00> : vector<16x16xf32>
    %203 = tpu.matmul %200, %202, %cst_203 {dimension_numbers = #tpu.dot_dimension_numbers<[1], [0], [0], [1], [0, 0, 1, 1], [], []>} : vector<16x56xbf16>, vector<56x16xbf16>, vector<16x16xf32> -> vector<16x16xf32>
    %204 = arith.addf %198, %203 : vector<16x16xf32>
    %c0_204 = arith.constant 0 : index
    %c34 = arith.constant 34 : index
    %c0_205 = arith.constant 0 : index
    %205 = vector.load %arg2[%c0_204, %c34, %c0_205] : memref<1x56x56xbf16, #tpu.memory_space<vmem>>, vector<1x16x56xbf16>
    %206 = vector.shape_cast %205 : vector<1x16x56xbf16> to vector<16x56xbf16>
    %c34_206 = arith.constant 34 : index
    %c0_207 = arith.constant 0 : index
    %c0_208 = arith.constant 0 : index
    %207 = vector.load %arg1[%c34_206, %c0_207, %c0_208] : memref<41x56x16xbf16, #tpu.memory_space<vmem>>, vector<1x56x16xbf16>
    %208 = vector.shape_cast %207 : vector<1x56x16xbf16> to vector<56x16xbf16>
    %cst_209 = arith.constant dense<0.000000e+00> : vector<16x16xf32>
    %209 = tpu.matmul %206, %208, %cst_209 {dimension_numbers = #tpu.dot_dimension_numbers<[1], [0], [0], [1], [0, 0, 1, 1], [], []>} : vector<16x56xbf16>, vector<56x16xbf16>, vector<16x16xf32> -> vector<16x16xf32>
    %210 = arith.addf %204, %209 : vector<16x16xf32>
    %c0_210 = arith.constant 0 : index
    %c35 = arith.constant 35 : index
    %c0_211 = arith.constant 0 : index
    %211 = vector.load %arg2[%c0_210, %c35, %c0_211] : memref<1x56x56xbf16, #tpu.memory_space<vmem>>, vector<1x16x56xbf16>
    %212 = vector.shape_cast %211 : vector<1x16x56xbf16> to vector<16x56xbf16>
    %c35_212 = arith.constant 35 : index
    %c0_213 = arith.constant 0 : index
    %c0_214 = arith.constant 0 : index
    %213 = vector.load %arg1[%c35_212, %c0_213, %c0_214] : memref<41x56x16xbf16, #tpu.memory_space<vmem>>, vector<1x56x16xbf16>
    %214 = vector.shape_cast %213 : vector<1x56x16xbf16> to vector<56x16xbf16>
    %cst_215 = arith.constant dense<0.000000e+00> : vector<16x16xf32>
    %215 = tpu.matmul %212, %214, %cst_215 {dimension_numbers = #tpu.dot_dimension_numbers<[1], [0], [0], [1], [0, 0, 1, 1], [], []>} : vector<16x56xbf16>, vector<56x16xbf16>, vector<16x16xf32> -> vector<16x16xf32>
    %216 = arith.addf %210, %215 : vector<16x16xf32>
    %c0_216 = arith.constant 0 : index
    %c36 = arith.constant 36 : index
    %c0_217 = arith.constant 0 : index
    %217 = vector.load %arg2[%c0_216, %c36, %c0_217] : memref<1x56x56xbf16, #tpu.memory_space<vmem>>, vector<1x16x56xbf16>
    %218 = vector.shape_cast %217 : vector<1x16x56xbf16> to vector<16x56xbf16>
    %c36_218 = arith.constant 36 : index
    %c0_219 = arith.constant 0 : index
    %c0_220 = arith.constant 0 : index
    %219 = vector.load %arg1[%c36_218, %c0_219, %c0_220] : memref<41x56x16xbf16, #tpu.memory_space<vmem>>, vector<1x56x16xbf16>
    %220 = vector.shape_cast %219 : vector<1x56x16xbf16> to vector<56x16xbf16>
    %cst_221 = arith.constant dense<0.000000e+00> : vector<16x16xf32>
    %221 = tpu.matmul %218, %220, %cst_221 {dimension_numbers = #tpu.dot_dimension_numbers<[1], [0], [0], [1], [0, 0, 1, 1], [], []>} : vector<16x56xbf16>, vector<56x16xbf16>, vector<16x16xf32> -> vector<16x16xf32>
    %222 = arith.addf %216, %221 : vector<16x16xf32>
    %c0_222 = arith.constant 0 : index
    %c37 = arith.constant 37 : index
    %c0_223 = arith.constant 0 : index
    %223 = vector.load %arg2[%c0_222, %c37, %c0_223] : memref<1x56x56xbf16, #tpu.memory_space<vmem>>, vector<1x16x56xbf16>
    %224 = vector.shape_cast %223 : vector<1x16x56xbf16> to vector<16x56xbf16>
    %c37_224 = arith.constant 37 : index
    %c0_225 = arith.constant 0 : index
    %c0_226 = arith.constant 0 : index
    %225 = vector.load %arg1[%c37_224, %c0_225, %c0_226] : memref<41x56x16xbf16, #tpu.memory_space<vmem>>, vector<1x56x16xbf16>
    %226 = vector.shape_cast %225 : vector<1x56x16xbf16> to vector<56x16xbf16>
    %cst_227 = arith.constant dense<0.000000e+00> : vector<16x16xf32>
    %227 = tpu.matmul %224, %226, %cst_227 {dimension_numbers = #tpu.dot_dimension_numbers<[1], [0], [0], [1], [0, 0, 1, 1], [], []>} : vector<16x56xbf16>, vector<56x16xbf16>, vector<16x16xf32> -> vector<16x16xf32>
    %228 = arith.addf %222, %227 : vector<16x16xf32>
    %c0_228 = arith.constant 0 : index
    %c38 = arith.constant 38 : index
    %c0_229 = arith.constant 0 : index
    %229 = vector.load %arg2[%c0_228, %c38, %c0_229] : memref<1x56x56xbf16, #tpu.memory_space<vmem>>, vector<1x16x56xbf16>
    %230 = vector.shape_cast %229 : vector<1x16x56xbf16> to vector<16x56xbf16>
    %c38_230 = arith.constant 38 : index
    %c0_231 = arith.constant 0 : index
    %c0_232 = arith.constant 0 : index
    %231 = vector.load %arg1[%c38_230, %c0_231, %c0_232] : memref<41x56x16xbf16, #tpu.memory_space<vmem>>, vector<1x56x16xbf16>
    %232 = vector.shape_cast %231 : vector<1x56x16xbf16> to vector<56x16xbf16>
    %cst_233 = arith.constant dense<0.000000e+00> : vector<16x16xf32>
    %233 = tpu.matmul %230, %232, %cst_233 {dimension_numbers = #tpu.dot_dimension_numbers<[1], [0], [0], [1], [0, 0, 1, 1], [], []>} : vector<16x56xbf16>, vector<56x16xbf16>, vector<16x16xf32> -> vector<16x16xf32>
    %234 = arith.addf %228, %233 : vector<16x16xf32>
    %c0_234 = arith.constant 0 : index
    %c39 = arith.constant 39 : index
    %c0_235 = arith.constant 0 : index
    %235 = vector.load %arg2[%c0_234, %c39, %c0_235] : memref<1x56x56xbf16, #tpu.memory_space<vmem>>, vector<1x16x56xbf16>
    %236 = vector.shape_cast %235 : vector<1x16x56xbf16> to vector<16x56xbf16>
    %c39_236 = arith.constant 39 : index
    %c0_237 = arith.constant 0 : index
    %c0_238 = arith.constant 0 : index
    %237 = vector.load %arg1[%c39_236, %c0_237, %c0_238] : memref<41x56x16xbf16, #tpu.memory_space<vmem>>, vector<1x56x16xbf16>
    %238 = vector.shape_cast %237 : vector<1x56x16xbf16> to vector<56x16xbf16>
    %cst_239 = arith.constant dense<0.000000e+00> : vector<16x16xf32>
    %239 = tpu.matmul %236, %238, %cst_239 {dimension_numbers = #tpu.dot_dimension_numbers<[1], [0], [0], [1], [0, 0, 1, 1], [], []>} : vector<16x56xbf16>, vector<56x16xbf16>, vector<16x16xf32> -> vector<16x16xf32>
    %240 = arith.addf %234, %239 : vector<16x16xf32>
    %c0_240 = arith.constant 0 : index
    %c40 = arith.constant 40 : index
    %c0_241 = arith.constant 0 : index
    %241 = vector.load %arg2[%c0_240, %c40, %c0_241] : memref<1x56x56xbf16, #tpu.memory_space<vmem>>, vector<1x16x56xbf16>
    %242 = vector.shape_cast %241 : vector<1x16x56xbf16> to vector<16x56xbf16>
    %c40_242 = arith.constant 40 : index
    %c0_243 = arith.constant 0 : index
    %c0_244 = arith.constant 0 : index
    %243 = vector.load %arg1[%c40_242, %c0_243, %c0_244] : memref<41x56x16xbf16, #tpu.memory_space<vmem>>, vector<1x56x16xbf16>
    %244 = vector.shape_cast %243 : vector<1x56x16xbf16> to vector<56x16xbf16>
    %cst_245 = arith.constant dense<0.000000e+00> : vector<16x16xf32>
    %245 = tpu.matmul %242, %244, %cst_245 {dimension_numbers = #tpu.dot_dimension_numbers<[1], [0], [0], [1], [0, 0, 1, 1], [], []>} : vector<16x56xbf16>, vector<56x16xbf16>, vector<16x16xf32> -> vector<16x16xf32>
    %246 = arith.addf %240, %245 : vector<16x16xf32>
    %c0_246 = arith.constant 0 : index
    %c0_247 = arith.constant 0 : index
    %c0_248 = arith.constant 0 : index
    %247 = vector.load %arg3[%c0_246, %c0_247, %c0_248] : memref<1x16x16xf32, #tpu.memory_space<vmem>>, vector<1x16x16xf32>
    %248 = vector.shape_cast %247 : vector<1x16x16xf32> to vector<16x16xf32>
    %249 = vector.shape_cast %246 : vector<16x16xf32> to vector<1x16x16xf32>
    tpu.vector_store %arg3[%c0_246, %c0_247, %c0_248], %249 {strides = array<i32>} : memref<1x16x16xf32, #tpu.memory_space<vmem>>, vector<1x16x16xf32>,
    return
  }
  func.func @transform_0(%arg0: i32) -> (i32, i32, i32) {
    %c0_i32 = arith.constant 0 : i32
    %c0_i32_0 = arith.constant 0 : i32
    %c0_i32_1 = arith.constant 0 : i32
    %c0_i32_2 = arith.constant 0 : i32
    return %c0_i32, %c0_i32_0, %c0_i32_1 : i32, i32, i32
  }
  func.func @transform_1(%arg0: i32) -> (i32, i32, i32) {
    %c0_i32 = arith.constant 0 : i32
    %c0_i32_0 = arith.constant 0 : i32
    %c0_i32_1 = arith.constant 0 : i32
    return %arg0, %c0_i32, %c0_i32_0 : i32, i32, i32
  }
  func.func @transform_2(%arg0: i32) -> (i32, i32, i32) {
    %c0_i32 = arith.constant 0 : i32
    %c0_i32_0 = arith.constant 0 : i32
    %c0_i32_1 = arith.constant 0 : i32
    return %arg0, %c0_i32, %c0_i32_0 : i32, i32, i32
  }
}

</mosaic_0001>

<llo_original>
// kernel: tpu_custom_call.1
$region0: #{tpu_custom_call.1}
  #allocation0 [shape = 'u32[]', space=smem, size = 0x4, offset = 0x4, fixed_abs, tag = 'smem constant byte address 0x4 - core index']
  #allocation1 [shape = 'u32[144,128]{1,0:T(1,128)}', space=vmem, size = 0x12000, scoped, tag = 'internal scratch']
  %s0 = inlined_call_operand.vmem [shape: bf16[41,56,16], index: 0, kind: input, shape index: {}]
  %s1 = inlined_call_operand.vmem [shape: bf16[2,56,56], index: 1, kind: input, shape index: {}]
  %s2 = inlined_call_operand.hbm [shape: f32[2,16,16], index: 2, kind: output, shape index: {}]
  %s3 = sld [smem:[#allocation0]]
  $region41: #{tpu_custom_call.1} parent=0
    _
  %s5 = ssub.s32 1, %s3
  %s6 = scalar_select 0, %s5, %s3
  $region1: #{tpu_custom_call.1} parent=0
    #allocation2 [shape = 'u8[16384]{0}', space=vmem, size = 0x4000, scoped, tag = 'output window, operand 0']
    #allocation3 [shape = 's32[2]{0}', space=sflag, size = 0x8, scoped, tag = 'scoped memory for tpu_custom_call.1']
    %7 = vsyncpa [#allocation3], 0
    %s8 = scalar_lea.sflag [#allocation3], 1
    %9 = vsyncpa %s8, 0
    loop: start=0, step=1, limit=4
    $region2: #{tpu_custom_call.1} parent=1 // loop_pre_header
      _
    $region3: #{tpu_custom_call.1} parent=1 // loop_header
      %s11 = sphi 0, %s15
      %p12 = scmp.ge.s32.totalorder %s11, 4
      %s19 = sphi 0, %s19
      %s21 = sphi 0, %s19
      %s22 = sphi 0, %s21
      %s36 = sphi 0, %s22
      %s42 = sphi 0, %s44
      %s45 = sphi 0, %s42
      %s46 = sphi 0, %s45
      %s62 = sphi 0, %s46
      %s68 = sphi 0, %s70
      %s71 = sphi 0, %s68
      %s72 = sphi 0, %s71
      %s88 = sphi 0, %s72
    $region4: #{tpu_custom_call.1} parent=1 // loop_header_branch
      %14 = sbr.rel (%p12) target = $region8
    $region5: #{tpu_custom_call.1} parent=1 // loop_body
      %s16 = ssub.s32 %s11, 1
      %s17 = ssub.s32 %s11, 2
      %s18 = sadd.s32 %s11, 1
      %s20 = sadd.s32 %s19, 1
      %p23 = scmp.eq.s32.totalorder %s11, 1
      %p24 = scmp.ne.s32.totalorder %s19, %s21
      %p25 = scmp.eq.s32.totalorder %s11, 0
      %p26 = por %p24, %p25
      %p27 = scmp.ne.s32.totalorder %s19, %s21
      %p28 = scmp.eq.s32.totalorder %s16, 1
      %p29 = por %p27, %p28
      %p30 = scmp.ne.s32.totalorder %s21, %s22
      %p31 = scmp.eq.s32.totalorder %s16, 0
      %p32 = por %p30, %p31
      %p33 = scmp.ne.s32.totalorder %s21, %s22
      %p34 = scmp.eq.s32.totalorder %s17, 1
      %p35 = por %p33, %p34
      %p37 = scmp.ne.s32.totalorder %s22, %s36
      %p38 = scmp.eq.s32.totalorder %s17, 0
      %p39 = por %p37, %p38
      %s40 = ssub.s32 %s11, %s18
      %p41 = scmp.eq.s32.totalorder %s40, 0
      %s43 = sadd.s32 %s42, 1
      %s44 = scalar_select %p41, %s42, %s43
      %p47 = pneg %p41
      %p48 = scmp.eq.s32.totalorder %s11, 1
      %p49 = por %p47, %p48
      %p50 = scmp.ne.s32.totalorder %s42, %s45
      %p51 = scmp.eq.s32.totalorder %s11, 0
      %p52 = por %p50, %p51
      %p53 = scmp.ne.s32.totalorder %s42, %s45
      %p54 = scmp.eq.s32.totalorder %s16, 1
      %p55 = por %p53, %p54
      %p56 = scmp.ne.s32.totalorder %s45, %s46
      %p57 = scmp.eq.s32.totalorder %s16, 0
      %p58 = por %p56, %p57
      %p59 = scmp.ne.s32.totalorder %s45, %s46
      %p60 = scmp.eq.s32.totalorder %s17, 1
      %p61 = por %p59, %p60
      %p63 = scmp.ne.s32.totalorder %s46, %s62
      %p64 = scmp.eq.s32.totalorder %s17, 0
      %p65 = por %p63, %p64
      %s66 = ssub.s32 %s11, %s18
      %p67 = scmp.eq.s32.totalorder %s66, 0
      %s69 = sadd.s32 %s68, 1
      %s70 = scalar_select %p67, %s68, %s69
      %p73 = pneg %p67
      %p74 = scmp.eq.s32.totalorder %s11, 1
      %p75 = por %p73, %p74
      %p76 = scmp.ne.s32.totalorder %s68, %s71
      %p77 = scmp.eq.s32.totalorder %s11, 0
      %p78 = por %p76, %p77
      %p79 = scmp.ne.s32.totalorder %s68, %s71
      %p80 = scmp.eq.s32.totalorder %s16, 1
      %p81 = por %p79, %p80
      %p82 = scmp.ne.s32.totalorder %s71, %s72
      %p83 = scmp.eq.s32.totalorder %s16, 0
      %p84 = por %p82, %p83
      %p85 = scmp.ne.s32.totalorder %s71, %s72
      %p86 = scmp.eq.s32.totalorder %s17, 1
      %p87 = por %p85, %p86
      %p89 = scmp.ne.s32.totalorder %s72, %s88
      %p90 = scmp.eq.s32.totalorder %s17, 0
      %p91 = por %p89, %p90
      %p92 = scmp.le.s32.totalorder 1, %s11
      %p93 = scmp.lt.s32.totalorder %s11, 3
      %p94 = pnand %p92, %p93
      %p95 = pneg %p94
      // Predicated region
      $region9: #{tpu_custom_call.1} parent=5 // pred_check
        _
      $region10: #{tpu_custom_call.1} parent=5 // pred_check_branch
        %97 = sbr.rel (%p94) target = $region12
      $region11: #{tpu_custom_call.1} parent=5 // pred_region
        %s98 = ssub.s32 %s11, 1
        // Predicated region
        $region13: #{tpu_custom_call.1} parent=11 // pred_check
          %p99 = pneg %p32
        $region14: #{tpu_custom_call.1} parent=11 // pred_check_branch
          %101 = sbr.rel (%p99) target = $region16
        $region15: #{tpu_custom_call.1} parent=11 // pred_region
          _
        $region16: #{tpu_custom_call.1} parent=11 // pred_fallthru
          _
      $region12: #{tpu_custom_call.1} parent=5 // pred_fallthru
        _
      %p102 = scmp.lt.s32.totalorder %s11, 2
      // Predicated region
      $region17: #{tpu_custom_call.1} parent=5 // pred_check
        %p103 = pneg %p102
      $region18: #{tpu_custom_call.1} parent=5 // pred_check_branch
        %105 = sbr.rel (%p103) target = $region20
      $region19: #{tpu_custom_call.1} parent=5 // pred_region
        // Predicated region
        $region21: #{tpu_custom_call.1} parent=19 // pred_check
          %p106 = pneg %p52
        $region22: #{tpu_custom_call.1} parent=19 // pred_check_branch
          %108 = sbr.rel (%p106) target = $region24
        $region23: #{tpu_custom_call.1} parent=19 // pred_region
          %p109 = scmp.lt.s32.totalorder %s11, 1
          %s110 = scalar_select %p109, %s11, 1
          %s111 = smul.addr %s110, 7
          %s112 = smul.addr %s111, 4
          %s113 = scalar_lea.vmem %s1, %s112
        $region24: #{tpu_custom_call.1} parent=19 // pred_fallthru
          _
      $region20: #{tpu_custom_call.1} parent=5 // pred_fallthru
        _
      %p114 = scmp.le.s32.totalorder 1, %s11
      %p115 = scmp.lt.s32.totalorder %s11, 3
      %p116 = pnand %p114, %p115
      %p117 = pneg %p116
      // Predicated region
      $region25: #{tpu_custom_call.1} parent=5 // pred_check
        _
      $region26: #{tpu_custom_call.1} parent=5 // pred_check_branch
        %119 = sbr.rel (%p116) target = $region28
      $region27: #{tpu_custom_call.1} parent=5 // pred_region
        %s120 = ssub.s32 %s11, 1
        %p121 = pneg %p32
        %p122 = pneg %p29
        %p123 = scmp.lt.s32.totalorder %s16, 1
        %s124 = scalar_select %p123, %s16, 1
        %s125 = smul.addr %s124, 7
        %s126 = smul.addr %s125, 4
        %s127 = scalar_lea.vmem %s1, %s126
        %p128 = pneg %p58
        %p129 = pneg %p55
        %p130 = pneg %p84
        %p131 = pneg %p81
        %s132 = sand.u32 %s71, 1
        %s133 = scalar_lea.sflag [#allocation3], %s132
        %s134 = sand.u32 %s71, 1
        %s135 = smul.addr %s134, 16
        %s136 = scalar_lea.vmem [#allocation2], %s135
        %p137 = scmp.lt.s32.totalorder %s16, 1
        %s138 = scalar_select %p137, %s16, 1
        %s139 = smul.addr %s138, 7
        %s140 = smul.addr %s139, 4
        %s141 = scalar_lea.vmem %s1, %s140
        %v143 = vld [vmem:[%s141] sm:$0xf]
        %v144 = vld [vmem:[%s141 + $0x4] sm:$0xf]
        %v145 = vld [vmem:[%s0] sm:$0xf]
        %v146 = vld [vmem:[%s0 + $0x4] sm:$0xf]
        %v147 = vld [vmem:[%s0 + $0x8] sm:$0xf]
        %v148 = vld [vmem:[%s0 + $0xc] sm:$0xf]
        %v149 = vld [vmem:[%s0 + $0x10] sm:$0xf]
        %v150 = vld [vmem:[%s0 + $0x14] sm:$0xf]
        %v151 = vld [vmem:[%s0 + $0x18] sm:$0xf]
        %v152 = vld [vmem:[%s141 + $0x8] sm:$0x1]
        %s153 = scalar_lea.vmem %s0, 28
        %v154 = vld [vmem:[%s153] sm:$0xf]
        %v155 = vld [vmem:[%s153 + $0x4] sm:$0xf]
        %v156 = vld [vmem:[%s153 + $0x8] sm:$0xf]
        %v157 = vld [vmem:[%s153 + $0xc] sm:$0xf]
        %v158 = vld [vmem:[%s153 + $0x10] sm:$0xf]
        %v159 = vld [vmem:[%s153 + $0x14] sm:$0xf]
        %v160 = vld [vmem:[%s153 + $0x18] sm:$0xf]
        %v164 = vunpack.c.l.b16 %v143
        %v165 = vunpack.c.l.b16 %v144
        %v166 = vunpack.c.l.b16 %v152
        %v167 = vpack.c.b16 %v165, %v164
        %v168 = vpack.c.b16 %v166, %v166
        %vm169 = vsmask.f32 7424
        %v171 = vshrl.u32 %v167, 16
        %v173 = vshll.u32 %v167, 16
        %v175 = vrot.slane %v173, 1
        %v176 = vor.u32 %v171, %v175
        %v178 = vshll.u32 %v168, 16
        %v180 = vrot.slane %v178, 1
        %v181 = vsel %vm169, %v176, %v180
        %v189 = vunpack.c.l.b16 %v154
        %v190 = vunpack.c.l.b16 %v155
        %v191 = vunpack.c.l.b16 %v156
        %v192 = vunpack.c.l.b16 %v157
        %v193 = vunpack.c.l.b16 %v158
        %v194 = vunpack.c.l.b16 %v159
        %v195 = vunpack.c.l.b16 %v160
        %v196 = vpack.c.b16 %v190, %v189
        %v197 = vpack.c.b16 %v192, %v191
        %v198 = vpack.c.b16 %v194, %v193
        %v199 = vpack.c.b16 %v195, %v195
        %vm203 = vcmask 457728
        %v205 = vsel %vm203, %v181, 0
        %vm207 = vcmask 1043456
        %v209 = vsel %vm207, %v199, 0
        %211 = vmatprep.subr.bf16.mxu0 0
        %212 = vmatpush1.bf16.msra.mxu0 0
        %213 = vmatprep.subr.bf16.mxu0 0
        %214 = vmatpush1.bf16.msra.mxu0 0
        %215 = vmatprep.subr.bf16.mxu0 0
        %216 = vmatpush1.bf16.msra.mxu0 0
        %217 = vmatprep.subr.bf16.mxu0 0
        %218 = vmatpush1.bf16.msra.mxu0 0
        %219 = vmatprep.subr.bf16.mxu0 0
        %220 = vmatpush1.bf16.msra.mxu0 %v209
        %221 = vmatprep.subr.bf16.mxu0 0
        %222 = vmatpush1.bf16.msra.mxu0 %v198
        %223 = vmatprep.subr.bf16.mxu0 0
        %224 = vmatpush1.bf16.msra.mxu0 %v197
        %225 = vmatprep.subr.bf16.mxu0 0
        %226 = vmatpush1.bf16.msra.mxu0 %v196
        %227 = vmatprep.subr.bf16.mxu0 0
        %228 = vmatpush2.bf16.msra.mxu0 0
        %229 = vmatprep.subr.bf16.mxu0 0
        %230 = vmatpush2.bf16.msra.mxu0 0
        %231 = vmatprep.subr.bf16.mxu0 0
        %232 = vmatpush2.bf16.msra.mxu0 0
        %233 = vmatprep.subr.bf16.mxu0 0
        %234 = vmatpush2.bf16.msra.mxu0 0
        %235 = vmatprep.subr.bf16.mxu0 0
        %236 = vmatpush2.bf16.msra.mxu0 0
        %237 = vmatprep.subr.bf16.mxu0 0
        %238 = vmatpush2.bf16.msra.mxu0 0
        %239 = vmatprep.subr.bf16.mxu0 0
        %240 = vmatpush2.bf16.msra.mxu0 0
        %241 = vmatprep.subr.bf16.mxu0 0
        %242 = vmatpush2.bf16.msra.mxu0 0
        %243 = vmatprep.mubr.bf16.mxu0 0
        %244 = vmatmul.mubr.bf16.gmra.mxu0 %v205
        %v245 = vpop.f32.mrf.mxu0
        %v246 = vadd.f32 0.0, %v245
        %v247 = vpop.f32.mrf.mxu0
        %v248 = vpop.f32.mrf.mxu0
        %v249 = vadd.f32 0.0, %v248
        %v250 = vpop.f32.mrf.mxu0
        %251 = vdwg.mxu0
        %v259 = vunpack.c.l.b16 %v145
        %v260 = vunpack.c.l.b16 %v146
        %v261 = vunpack.c.l.b16 %v147
        %v262 = vunpack.c.l.b16 %v148
        %v263 = vunpack.c.l.b16 %v149
        %v264 = vunpack.c.l.b16 %v150
        %v265 = vunpack.c.l.b16 %v151
        %v266 = vpack.c.b16 %v260, %v259
        %v267 = vpack.c.b16 %v262, %v261
        %v268 = vpack.c.b16 %v264, %v263
        %v269 = vpack.c.b16 %v265, %v265
        %v273 = vsel %vm203, %v167, 0
        %v276 = vsel %vm207, %v269, 0
        %278 = vmatprep.subr.bf16.mxu0 0
        %279 = vmatpush1.bf16.msra.mxu0 0
        %280 = vmatprep.subr.bf16.mxu0 0
        %281 = vmatpush1.bf16.msra.mxu0 0
        %282 = vmatprep.subr.bf16.mxu0 0
        %283 = vmatpush1.bf16.msra.mxu0 0
        %284 = vmatprep.subr.bf16.mxu0 0
        %285 = vmatpush1.bf16.msra.mxu0 0
        %286 = vmatprep.subr.bf16.mxu0 0
        %287 = vmatpush1.bf16.msra.mxu0 %v276
        %288 = vmatprep.subr.bf16.mxu0 0
        %289 = vmatpush1.bf16.msra.mxu0 %v268
        %290 = vmatprep.subr.bf16.mxu0 0
        %291 = vmatpush1.bf16.msra.mxu0 %v267
        %292 = vmatprep.subr.bf16.mxu0 0
        %293 = vmatpush1.bf16.msra.mxu0 %v266
        %294 = vmatprep.subr.bf16.mxu0 0
        %295 = vmatpush2.bf16.msra.mxu0 0
        %296 = vmatprep.subr.bf16.mxu0 0
        %297 = vmatpush2.bf16.msra.mxu0 0
        %298 = vmatprep.subr.bf16.mxu0 0
        %299 = vmatpush2.bf16.msra.mxu0 0
        %300 = vmatprep.subr.bf16.mxu0 0
        %301 = vmatpush2.bf16.msra.mxu0 0
        %302 = vmatprep.subr.bf16.mxu0 0
        %303 = vmatpush2.bf16.msra.mxu0 0
        %304 = vmatprep.subr.bf16.mxu0 0
        %305 = vmatpush2.bf16.msra.mxu0 0
        %306 = vmatprep.subr.bf16.mxu0 0
        %307 = vmatpush2.bf16.msra.mxu0 0
        %308 = vmatprep.subr.bf16.mxu0 0
        %309 = vmatpush2.bf16.msra.mxu0 0
        %310 = vmatprep.mubr.bf16.mxu0 0
        %311 = vmatmul.mubr.bf16.gmra.mxu0 %v273
        %v312 = vpop.f32.mrf.mxu0
        %v313 = vadd.f32 %v246, %v312
        %v314 = vpop.f32.mrf.mxu0
        %v315 = vpop.f32.mrf.mxu0
        %v316 = vadd.f32 %v249, %v315
        %v317 = vpop.f32.mrf.mxu0
        %318 = vdwg.mxu0
        %v319 = vld [vmem:[%s141] sm:$0xe]
        %s320 = scalar_lea.vmem %s0, 56
        %v321 = vld [vmem:[%s320] sm:$0xf]
        %v322 = vld [vmem:[%s320 + $0x4] sm:$0xf]
        %v323 = vld [vmem:[%s320 + $0x8] sm:$0xf]
        %v324 = vld [vmem:[%s320 + $0xc] sm:$0xf]
        %v325 = vld [vmem:[%s320 + $0x10] sm:$0xf]
        %v326 = vld [vmem:[%s320 + $0x14] sm:$0xf]
        %v327 = vld [vmem:[%s320 + $0x18] sm:$0xf]
        %v329 = vunpack.c.l.b16 %v319
        %v330 = vpack.c.b16 %v165, %v329
        %vm331 = vcmask 1046528
        %v332 = vrot.slane %v330, 1
        %v333 = vrot.slane %v168, 1
        %v334 = vsel %vm331, %v332, %v333
        %v342 = vunpack.c.l.b16 %v321
        %v343 = vunpack.c.l.b16 %v322
        %v344 = vunpack.c.l.b16 %v323
        %v345 = vunpack.c.l.b16 %v324
        %v346 = vunpack.c.l.b16 %v325
        %v347 = vunpack.c.l.b16 %v326
        %v348 = vunpack.c.l.b16 %v327
        %v349 = vpack.c.b16 %v343, %v342
        %v350 = vpack.c.b16 %v345, %v344
        %v351 = vpack.c.b16 %v347, %v346
        %v352 = vpack.c.b16 %v348, %v348
        %v357 = vsel %vm203, %v334, 0
        %v360 = vsel %vm207, %v352, 0
        %362 = vmatprep.subr.bf16.mxu0 0
        %363 = vmatpush1.bf16.msra.mxu0 0
        %364 = vmatprep.subr.bf16.mxu0 0
        %365 = vmatpush1.bf16.msra.mxu0 0
        %366 = vmatprep.subr.bf16.mxu0 0
        %367 = vmatpush1.bf16.msra.mxu0 0
        %368 = vmatprep.subr.bf16.mxu0 0
        %369 = vmatpush1.bf16.msra.mxu0 0
        %370 = vmatprep.subr.bf16.mxu0 0
        %371 = vmatpush1.bf16.msra.mxu0 %v360
        %372 = vmatprep.subr.bf16.mxu0 0
        %373 = vmatpush1.bf16.msra.mxu0 %v351
        %374 = vmatprep.subr.bf16.mxu0 0
        %375 = vmatpush1.bf16.msra.mxu0 %v350
        %376 = vmatprep.subr.bf16.mxu0 0
        %377 = vmatpush1.bf16.msra.mxu0 %v349
        %378 = vmatprep.subr.bf16.mxu0 0
        %379 = vmatpush2.bf16.msra.mxu0 0
        %380 = vmatprep.subr.bf16.mxu0 0
        %381 = vmatpush2.bf16.msra.mxu0 0
        %382 = vmatprep.subr.bf16.mxu0 0
        %383 = vmatpush2.bf16.msra.mxu0 0
        %384 = vmatprep.subr.bf16.mxu0 0
        %385 = vmatpush2.bf16.msra.mxu0 0
        %386 = vmatprep.subr.bf16.mxu0 0
        %387 = vmatpush2.bf16.msra.mxu0 0
        %388 = vmatprep.subr.bf16.mxu0 0
        %389 = vmatpush2.bf16.msra.mxu0 0
        %390 = vmatprep.subr.bf16.mxu0 0
        %391 = vmatpush2.bf16.msra.mxu0 0
        %392 = vmatprep.subr.bf16.mxu0 0
        %393 = vmatpush2.bf16.msra.mxu0 0
        %394 = vmatprep.mubr.bf16.mxu0 0
        %395 = vmatmul.mubr.bf16.gmra.mxu0 %v357
        %v396 = vpop.f32.mrf.mxu0
        %v397 = vadd.f32 0.0, %v396
        %v398 = vpop.f32.mrf.mxu0
        %v399 = vpop.f32.mrf.mxu0
        %v400 = vadd.f32 0.0, %v399
        %v401 = vpop.f32.mrf.mxu0
        %402 = vdwg.mxu0
        %v403 = vadd.f32 %v313, %v397
        %v404 = vadd.f32 %v316, %v400
        %v405 = vld [vmem:[%s141 + $0x8] sm:$0x3]
        %s406 = scalar_lea.vmem %s0, 84
        %v407 = vld [vmem:[%s406] sm:$0xf]
        %v408 = vld [vmem:[%s406 + $0x4] sm:$0xf]
        %v409 = vld [vmem:[%s406 + $0x8] sm:$0xf]
        %v410 = vld [vmem:[%s406 + $0xc] sm:$0xf]
        %v411 = vld [vmem:[%s406 + $0x10] sm:$0xf]
        %v412 = vld [vmem:[%s406 + $0x14] sm:$0xf]
        %v413 = vld [vmem:[%s406 + $0x18] sm:$0xf]
        %v415 = vunpack.c.l.b16 %v405
        %v416 = vpack.c.b16 %v415, %v415
        %vm417 = vsmask.f32 6400
        %v419 = vshrl.u32 %v330, 16
        %v421 = vrot.slane %v419, 1
        %v422 = vshll.u32 %v330, 16
        %v424 = vrot.slane %v422, 2
        %v425 = vor.u32 %v421, %v424
        %v427 = vshrl.u32 %v416, 16
        %v429 = vrot.slane %v427, 1
        %v430 = vshll.u32 %v416, 16
        %v432 = vrot.slane %v430, 2
        %v433 = vor.u32 %v429, %v432
        %v434 = vsel %vm417, %v425, %v433
        %v442 = vunpack.c.l.b16 %v407
        %v443 = vunpack.c.l.b16 %v408
        %v444 = vunpack.c.l.b16 %v409
        %v445 = vunpack.c.l.b16 %v410
        %v446 = vunpack.c.l.b16 %v411
        %v447 = vunpack.c.l.b16 %v412
        %v448 = vunpack.c.l.b16 %v413
        %v449 = vpack.c.b16 %v443, %v442
        %v450 = vpack.c.b16 %v445, %v444
        %v451 = vpack.c.b16 %v447, %v446
        %v452 = vpack.c.b16 %v448, %v448
        %v457 = vsel %vm203, %v434, 0
        %v460 = vsel %vm207, %v452, 0
        %462 = vmatprep.subr.bf16.mxu0 0
        %463 = vmatpush1.bf16.msra.mxu0 0
        %464 = vmatprep.subr.bf16.mxu0 0
        %465 = vmatpush1.bf16.msra.mxu0 0
        %466 = vmatprep.subr.bf16.mxu0 0
        %467 = vmatpush1.bf16.msra.mxu0 0
        %468 = vmatprep.subr.bf16.mxu0 0
        %469 = vmatpush1.bf16.msra.mxu0 0
        %470 = vmatprep.subr.bf16.mxu0 0
        %471 = vmatpush1.bf16.msra.mxu0 %v460
        %472 = vmatprep.subr.bf16.mxu0 0
        %473 = vmatpush1.bf16.msra.mxu0 %v451
        %474 = vmatprep.subr.bf16.mxu0 0
        %475 = vmatpush1.bf16.msra.mxu0 %v450
        %476 = vmatprep.subr.bf16.mxu0 0
        %477 = vmatpush1.bf16.msra.mxu0 %v449
        %478 = vmatprep.subr.bf16.mxu0 0
        %479 = vmatpush2.bf16.msra.mxu0 0
        %480 = vmatprep.subr.bf16.mxu0 0
        %481 = vmatpush2.bf16.msra.mxu0 0
        %482 = vmatprep.subr.bf16.mxu0 0
        %483 = vmatpush2.bf16.msra.mxu0 0
        %484 = vmatprep.subr.bf16.mxu0 0
        %485 = vmatpush2.bf16.msra.mxu0 0
        %486 = vmatprep.subr.bf16.mxu0 0
        %487 = vmatpush2.bf16.msra.mxu0 0
        %488 = vmatprep.subr.bf16.mxu0 0
        %489 = vmatpush2.bf16.msra.mxu0 0
        %490 = vmatprep.subr.bf16.mxu0 0
        %491 = vmatpush2.bf16.msra.mxu0 0
        %492 = vmatprep.subr.bf16.mxu0 0
        %493 = vmatpush2.bf16.msra.mxu0 0
        %494 = vmatprep.mubr.bf16.mxu0 0
        %495 = vmatmul.mubr.bf16.gmra.mxu0 %v457
        %v496 = vpop.f32.mrf.mxu0
        %v497 = vadd.f32 0.0, %v496
        %v498 = vpop.f32.mrf.mxu0
        %v499 = vpop.f32.mrf.mxu0
        %v500 = vadd.f32 0.0, %v499
        %v501 = vpop.f32.mrf.mxu0
        %502 = vdwg.mxu0
        %v503 = vadd.f32 %v403, %v497
        %v504 = vadd.f32 %v404, %v500
        %v505 = vld [vmem:[%s141] sm:$0xc]
        %s506 = scalar_lea.vmem %s0, 112
        %v507 = vld [vmem:[%s506] sm:$0xf]
        %v508 = vld [vmem:[%s506 + $0x4] sm:$0xf]
        %v509 = vld [vmem:[%s506 + $0x8] sm:$0xf]
        %v510 = vld [vmem:[%s506 + $0xc] sm:$0xf]
        %v511 = vld [vmem:[%s506 + $0x10] sm:$0xf]
        %v512 = vld [vmem:[%s506 + $0x14] sm:$0xf]
        %v513 = vld [vmem:[%s506 + $0x18] sm:$0xf]
        %v515 = vunpack.c.l.b16 %v505
        %v516 = vpack.c.b16 %v165, %v515
        %vm517 = vcmask 1045504
        %v518 = vrot.slane %v516, 2
        %v519 = vrot.slane %v416, 2
        %v520 = vsel %vm517, %v518, %v519
        %v528 = vunpack.c.l.b16 %v507
        %v529 = vunpack.c.l.b16 %v508
        %v530 = vunpack.c.l.b16 %v509
        %v531 = vunpack.c.l.b16 %v510
        %v532 = vunpack.c.l.b16 %v511
        %v533 = vunpack.c.l.b16 %v512
        %v534 = vunpack.c.l.b16 %v513
        %v535 = vpack.c.b16 %v529, %v528
        %v536 = vpack.c.b16 %v531, %v530
        %v537 = vpack.c.b16 %v533, %v532
        %v538 = vpack.c.b16 %v534, %v534
        %v543 = vsel %vm203, %v520, 0
        %v546 = vsel %vm207, %v538, 0
        %548 = vmatprep.subr.bf16.mxu0 0
        %549 = vmatpush1.bf16.msra.mxu0 0
        %550 = vmatprep.subr.bf16.mxu0 0
        %551 = vmatpush1.bf16.msra.mxu0 0
        %552 = vmatprep.subr.bf16.mxu0 0
        %553 = vmatpush1.bf16.msra.mxu0 0
        %554 = vmatprep.subr.bf16.mxu0 0
        %555 = vmatpush1.bf16.msra.mxu0 0
        %556 = vmatprep.subr.bf16.mxu0 0
        %557 = vmatpush1.bf16.msra.mxu0 %v546
        %558 = vmatprep.subr.bf16.mxu0 0
        %559 = vmatpush1.bf16.msra.mxu0 %v537
        %560 = vmatprep.subr.bf16.mxu0 0
        %561 = vmatpush1.bf16.msra.mxu0 %v536
        %562 = vmatprep.subr.bf16.mxu0 0
        %563 = vmatpush1.bf16.msra.mxu0 %v535
        %564 = vmatprep.subr.bf16.mxu0 0
        %565 = vmatpush2.bf16.msra.mxu0 0
        %566 = vmatprep.subr.bf16.mxu0 0
        %567 = vmatpush2.bf16.msra.mxu0 0
        %568 = vmatprep.subr.bf16.mxu0 0
        %569 = vmatpush2.bf16.msra.mxu0 0
        %570 = vmatprep.subr.bf16.mxu0 0
        %571 = vmatpush2.bf16.msra.mxu0 0
        %572 = vmatprep.subr.bf16.mxu0 0
        %573 = vmatpush2.bf16.msra.mxu0 0
        %574 = vmatprep.subr.bf16.mxu0 0
        %575 = vmatpush2.bf16.msra.mxu0 0
        %576 = vmatprep.subr.bf16.mxu0 0
        %577 = vmatpush2.bf16.msra.mxu0 0
        %578 = vmatprep.subr.bf16.mxu0 0
        %579 = vmatpush2.bf16.msra.mxu0 0
        %580 = vmatprep.mubr.bf16.mxu0 0
        %581 = vmatmul.mubr.bf16.gmra.mxu0 %v543
        %v582 = vpop.f32.mrf.mxu0
        %v583 = vadd.f32 0.0, %v582
        %v584 = vpop.f32.mrf.mxu0
        %v585 = vpop.f32.mrf.mxu0
        %v586 = vadd.f32 0.0, %v585
        %v587 = vpop.f32.mrf.mxu0
        %588 = vdwg.mxu0
        %v589 = vadd.f32 %v503, %v583
        %v590 = vadd.f32 %v504, %v586
        %v591 = vld [vmem:[%s141 + $0x8] sm:$0x7]
        %s592 = scalar_lea.vmem %s0, 140
        %v593 = vld [vmem:[%s592] sm:$0xf]
        %v594 = vld [vmem:[%s592 + $0x4] sm:$0xf]
        %v595 = vld [vmem:[%s592 + $0x8] sm:$0xf]
        %v596 = vld [vmem:[%s592 + $0xc] sm:$0xf]
        %v597 = vld [vmem:[%s592 + $0x10] sm:$0xf]
        %v598 = vld [vmem:[%s592 + $0x14] sm:$0xf]
        %v599 = vld [vmem:[%s592 + $0x18] sm:$0xf]
        %v601 = vunpack.c.l.b16 %v591
        %v602 = vpack.c.b16 %v601, %v601
        %vm603 = vsmask.f32 5376
        %v605 = vshrl.u32 %v516, 16
        %v607 = vrot.slane %v605, 2
        %v608 = vshll.u32 %v516, 16
        %v610 = vrot.slane %v608, 3
        %v611 = vor.u32 %v607, %v610
        %v613 = vshrl.u32 %v602, 16
        %v615 = vrot.slane %v613, 2
        %v616 = vshll.u32 %v602, 16
        %v618 = vrot.slane %v616, 3
        %v619 = vor.u32 %v615, %v618
        %v620 = vsel %vm603, %v611, %v619
        %v628 = vunpack.c.l.b16 %v593
        %v629 = vunpack.c.l.b16 %v594
        %v630 = vunpack.c.l.b16 %v595
        %v631 = vunpack.c.l.b16 %v596
        %v632 = vunpack.c.l.b16 %v597
        %v633 = vunpack.c.l.b16 %v598
        %v634 = vunpack.c.l.b16 %v599
        %v635 = vpack.c.b16 %v629, %v628
        %v636 = vpack.c.b16 %v631, %v630
        %v637 = vpack.c.b16 %v633, %v632
        %v638 = vpack.c.b16 %v634, %v634
        %v643 = vsel %vm203, %v620, 0
        %v646 = vsel %vm207, %v638, 0
        %648 = vmatprep.subr.bf16.mxu0 0
        %649 = vmatpush1.bf16.msra.mxu0 0
        %650 = vmatprep.subr.bf16.mxu0 0
        %651 = vmatpush1.bf16.msra.mxu0 0
        %652 = vmatprep.subr.bf16.mxu0 0
        %653 = vmatpush1.bf16.msra.mxu0 0
        %654 = vmatprep.subr.bf16.mxu0 0
        %655 = vmatpush1.bf16.msra.mxu0 0
        %656 = vmatprep.subr.bf16.mxu0 0
        %657 = vmatpush1.bf16.msra.mxu0 %v646
        %658 = vmatprep.subr.bf16.mxu0 0
        %659 = vmatpush1.bf16.msra.mxu0 %v637
        %660 = vmatprep.subr.bf16.mxu0 0
        %661 = vmatpush1.bf16.msra.mxu0 %v636
        %662 = vmatprep.subr.bf16.mxu0 0
        %663 = vmatpush1.bf16.msra.mxu0 %v635
        %664 = vmatprep.subr.bf16.mxu0 0
        %665 = vmatpush2.bf16.msra.mxu0 0
        %666 = vmatprep.subr.bf16.mxu0 0
        %667 = vmatpush2.bf16.msra.mxu0 0
        %668 = vmatprep.subr.bf16.mxu0 0
        %669 = vmatpush2.bf16.msra.mxu0 0
        %670 = vmatprep.subr.bf16.mxu0 0
        %671 = vmatpush2.bf16.msra.mxu0 0
        %672 = vmatprep.subr.bf16.mxu0 0
        %673 = vmatpush2.bf16.msra.mxu0 0
        %674 = vmatprep.subr.bf16.mxu0 0
        %675 = vmatpush2.bf16.msra.mxu0 0
        %676 = vmatprep.subr.bf16.mxu0 0
        %677 = vmatpush2.bf16.msra.mxu0 0
        %678 = vmatprep.subr.bf16.mxu0 0
        %679 = vmatpush2.bf16.msra.mxu0 0
        %680 = vmatprep.mubr.bf16.mxu0 0
        %681 = vmatmul.mubr.bf16.gmra.mxu0 %v643
        %v682 = vpop.f32.mrf.mxu0
        %v683 = vadd.f32 0.0, %v682
        %v684 = vpop.f32.mrf.mxu0
        %v685 = vpop.f32.mrf.mxu0
        %v686 = vadd.f32 0.0, %v685
        %v687 = vpop.f32.mrf.mxu0
        %688 = vdwg.mxu0
        %v689 = vadd.f32 %v589, %v683
        %v690 = vadd.f32 %v590, %v686
        %v691 = vld [vmem:[%s141] sm:$0x8]
        %s692 = scalar_lea.vmem %s0, 168
        %v693 = vld [vmem:[%s692] sm:$0xf]
        %v694 = vld [vmem:[%s692 + $0x4] sm:$0xf]
        %v695 = vld [vmem:[%s692 + $0x8] sm:$0xf]
        %v696 = vld [vmem:[%s692 + $0xc] sm:$0xf]
        %v697 = vld [vmem:[%s692 + $0x10] sm:$0xf]
        %v698 = vld [vmem:[%s692 + $0x14] sm:$0xf]
        %v699 = vld [vmem:[%s692 + $0x18] sm:$0xf]
        %v701 = vunpack.c.l.b16 %v691
        %v702 = vpack.c.b16 %v165, %v701
        %vm703 = vcmask 1044480
        %v704 = vrot.slane %v702, 3
        %v705 = vrot.slane %v602, 3
        %v706 = vsel %vm703, %v704, %v705
        %v714 = vunpack.c.l.b16 %v693
        %v715 = vunpack.c.l.b16 %v694
        %v716 = vunpack.c.l.b16 %v695
        %v717 = vunpack.c.l.b16 %v696
        %v718 = vunpack.c.l.b16 %v697
        %v719 = vunpack.c.l.b16 %v698
        %v720 = vunpack.c.l.b16 %v699
        %v721 = vpack.c.b16 %v715, %v714
        %v722 = vpack.c.b16 %v717, %v716
        %v723 = vpack.c.b16 %v719, %v718
        %v724 = vpack.c.b16 %v720, %v720
        %v729 = vsel %vm203, %v706, 0
        %v732 = vsel %vm207, %v724, 0
        %734 = vmatprep.subr.bf16.mxu0 0
        %735 = vmatpush1.bf16.msra.mxu0 0
        %736 = vmatprep.subr.bf16.mxu0 0
        %737 = vmatpush1.bf16.msra.mxu0 0
        %738 = vmatprep.subr.bf16.mxu0 0
        %739 = vmatpush1.bf16.msra.mxu0 0
        %740 = vmatprep.subr.bf16.mxu0 0
        %741 = vmatpush1.bf16.msra.mxu0 0
        %742 = vmatprep.subr.bf16.mxu0 0
        %743 = vmatpush1.bf16.msra.mxu0 %v732
        %744 = vmatprep.subr.bf16.mxu0 0
        %745 = vmatpush1.bf16.msra.mxu0 %v723
        %746 = vmatprep.subr.bf16.mxu0 0
        %747 = vmatpush1.bf16.msra.mxu0 %v722
        %748 = vmatprep.subr.bf16.mxu0 0
        %749 = vmatpush1.bf16.msra.mxu0 %v721
        %750 = vmatprep.subr.bf16.mxu0 0
        %751 = vmatpush2.bf16.msra.mxu0 0
        %752 = vmatprep.subr.bf16.mxu0 0
        %753 = vmatpush2.bf16.msra.mxu0 0
        %754 = vmatprep.subr.bf16.mxu0 0
        %755 = vmatpush2.bf16.msra.mxu0 0
        %756 = vmatprep.subr.bf16.mxu0 0
        %757 = vmatpush2.bf16.msra.mxu0 0
        %758 = vmatprep.subr.bf16.mxu0 0
        %759 = vmatpush2.bf16.msra.mxu0 0
        %760 = vmatprep.subr.bf16.mxu0 0
        %761 = vmatpush2.bf16.msra.mxu0 0
        %762 = vmatprep.subr.bf16.mxu0 0
        %763 = vmatpush2.bf16.msra.mxu0 0
        %764 = vmatprep.subr.bf16.mxu0 0
        %765 = vmatpush2.bf16.msra.mxu0 0
        %766 = vmatprep.mubr.bf16.mxu0 0
        %767 = vmatmul.mubr.bf16.gmra.mxu0 %v729
        %v768 = vpop.f32.mrf.mxu0
        %v769 = vadd.f32 0.0, %v768
        %v770 = vpop.f32.mrf.mxu0
        %v771 = vpop.f32.mrf.mxu0
        %v772 = vadd.f32 0.0, %v771
        %v773 = vpop.f32.mrf.mxu0
        %774 = vdwg.mxu0
        %v775 = vadd.f32 %v689, %v769
        %v776 = vadd.f32 %v690, %v772
        %v777 = vld [vmem:[%s141 + $0x8] sm:$0xf]
        %s778 = scalar_lea.vmem %s0, 196
        %v779 = vld [vmem:[%s778] sm:$0xf]
        %v780 = vld [vmem:[%s778 + $0x4] sm:$0xf]
        %v781 = vld [vmem:[%s778 + $0x8] sm:$0xf]
        %v782 = vld [vmem:[%s778 + $0xc] sm:$0xf]
        %v783 = vld [vmem:[%s778 + $0x10] sm:$0xf]
        %v784 = vld [vmem:[%s778 + $0x14] sm:$0xf]
        %v785 = vld [vmem:[%s778 + $0x18] sm:$0xf]
        %v787 = vunpack.c.l.b16 %v777
        %v788 = vpack.c.b16 %v787, %v787
        %vm789 = vsmask.f32 4352
        %v791 = vshrl.u32 %v702, 16
        %v793 = vrot.slane %v791, 3
        %v794 = vshll.u32 %v702, 16
        %v796 = vrot.slane %v794, 4
        %v797 = vor.u32 %v793, %v796
        %v799 = vshrl.u32 %v788, 16
        %v801 = vrot.slane %v799, 3
        %v802 = vshll.u32 %v788, 16
        %v804 = vrot.slane %v802, 4
        %v805 = vor.u32 %v801, %v804
        %v806 = vsel %vm789, %v797, %v805
        %v814 = vunpack.c.l.b16 %v779
        %v815 = vunpack.c.l.b16 %v780
        %v816 = vunpack.c.l.b16 %v781
        %v817 = vunpack.c.l.b16 %v782
        %v818 = vunpack.c.l.b16 %v783
        %v819 = vunpack.c.l.b16 %v784
        %v820 = vunpack.c.l.b16 %v785
        %v821 = vpack.c.b16 %v815, %v814
        %v822 = vpack.c.b16 %v817, %v816
        %v823 = vpack.c.b16 %v819, %v818
        %v824 = vpack.c.b16 %v820, %v820
        %v829 = vsel %vm203, %v806, 0
        %v832 = vsel %vm207, %v824, 0
        %834 = vmatprep.subr.bf16.mxu0 0
        %835 = vmatpush1.bf16.msra.mxu0 0
        %836 = vmatprep.subr.bf16.mxu0 0
        %837 = vmatpush1.bf16.msra.mxu0 0
        %838 = vmatprep.subr.bf16.mxu0 0
        %839 = vmatpush1.bf16.msra.mxu0 0
        %840 = vmatprep.subr.bf16.mxu0 0
        %841 = vmatpush1.bf16.msra.mxu0 0
        %842 = vmatprep.subr.bf16.mxu0 0
        %843 = vmatpush1.bf16.msra.mxu0 %v832
        %844 = vmatprep.subr.bf16.mxu0 0
        %845 = vmatpush1.bf16.msra.mxu0 %v823
        %846 = vmatprep.subr.bf16.mxu0 0
        %847 = vmatpush1.bf16.msra.mxu0 %v822
        %848 = vmatprep.subr.bf16.mxu0 0
        %849 = vmatpush1.bf16.msra.mxu0 %v821
        %850 = vmatprep.subr.bf16.mxu0 0
        %851 = vmatpush2.bf16.msra.mxu0 0
        %852 = vmatprep.subr.bf16.mxu0 0
        %853 = vmatpush2.bf16.msra.mxu0 0
        %854 = vmatprep.subr.bf16.mxu0 0
        %855 = vmatpush2.bf16.msra.mxu0 0
        %856 = vmatprep.subr.bf16.mxu0 0
        %857 = vmatpush2.bf16.msra.mxu0 0
        %858 = vmatprep.subr.bf16.mxu0 0
        %859 = vmatpush2.bf16.msra.mxu0 0
        %860 = vmatprep.subr.bf16.mxu0 0
        %861 = vmatpush2.bf16.msra.mxu0 0
        %862 = vmatprep.subr.bf16.mxu0 0
        %863 = vmatpush2.bf16.msra.mxu0 0
        %864 = vmatprep.subr.bf16.mxu0 0
        %865 = vmatpush2.bf16.msra.mxu0 0
        %866 = vmatprep.mubr.bf16.mxu0 0
        %867 = vmatmul.mubr.bf16.gmra.mxu0 %v829
        %v868 = vpop.f32.mrf.mxu0
        %v869 = vadd.f32 0.0, %v868
        %v870 = vpop.f32.mrf.mxu0
        %v871 = vpop.f32.mrf.mxu0
        %v872 = vadd.f32 0.0, %v871
        %v873 = vpop.f32.mrf.mxu0
        %874 = vdwg.mxu0
        %v875 = vadd.f32 %v775, %v869
        %v876 = vadd.f32 %v776, %v872
        %s877 = scalar_lea.vmem %s0, 224
        %v878 = vld [vmem:[%s877] sm:$0xf]
        %v879 = vld [vmem:[%s877 + $0x4] sm:$0xf]
        %v880 = vld [vmem:[%s877 + $0x8] sm:$0xf]
        %v881 = vld [vmem:[%s877 + $0xc] sm:$0xf]
        %v882 = vld [vmem:[%s877 + $0x10] sm:$0xf]
        %v883 = vld [vmem:[%s877 + $0x14] sm:$0xf]
        %v884 = vld [vmem:[%s877 + $0x18] sm:$0xf]
        %v885 = vpack.c.b16 %v787, %v165
        %v893 = vunpack.c.l.b16 %v878
        %v894 = vunpack.c.l.b16 %v879
        %v895 = vunpack.c.l.b16 %v880
        %v896 = vunpack.c.l.b16 %v881
        %v897 = vunpack.c.l.b16 %v882
        %v898 = vunpack.c.l.b16 %v883
        %v899 = vunpack.c.l.b16 %v884
        %v900 = vpack.c.b16 %v894, %v893
        %v901 = vpack.c.b16 %v896, %v895
        %v902 = vpack.c.b16 %v898, %v897
        %v903 = vpack.c.b16 %v899, %v899
        %v908 = vsel %vm203, %v885, 0
        %v911 = vsel %vm207, %v903, 0
        %913 = vmatprep.subr.bf16.mxu0 0
        %914 = vmatpush1.bf16.msra.mxu0 0
        %915 = vmatprep.subr.bf16.mxu0 0
        %916 = vmatpush1.bf16.msra.mxu0 0
        %917 = vmatprep.subr.bf16.mxu0 0
        %918 = vmatpush1.bf16.msra.mxu0 0
        %919 = vmatprep.subr.bf16.mxu0 0
        %920 = vmatpush1.bf16.msra.mxu0 0
        %921 = vmatprep.subr.bf16.mxu0 0
        %922 = vmatpush1.bf16.msra.mxu0 %v911
        %923 = vmatprep.subr.bf16.mxu0 0
        %924 = vmatpush1.bf16.msra.mxu0 %v902
        %925 = vmatprep.subr.bf16.mxu0 0
        %926 = vmatpush1.bf16.msra.mxu0 %v901
        %927 = vmatprep.subr.bf16.mxu0 0
        %928 = vmatpush1.bf16.msra.mxu0 %v900
        %929 = vmatprep.subr.bf16.mxu0 0
        %930 = vmatpush2.bf16.msra.mxu0 0
        %931 = vmatprep.subr.bf16.mxu0 0
        %932 = vmatpush2.bf16.msra.mxu0 0
        %933 = vmatprep.subr.bf16.mxu0 0
        %934 = vmatpush2.bf16.msra.mxu0 0
        %935 = vmatprep.subr.bf16.mxu0 0
        %936 = vmatpush2.bf16.msra.mxu0 0
        %937 = vmatprep.subr.bf16.mxu0 0
        %938 = vmatpush2.bf16.msra.mxu0 0
        %939 = vmatprep.subr.bf16.mxu0 0
        %940 = vmatpush2.bf16.msra.mxu0 0
        %941 = vmatprep.subr.bf16.mxu0 0
        %942 = vmatpush2.bf16.msra.mxu0 0
        %943 = vmatprep.subr.bf16.mxu0 0
        %944 = vmatpush2.bf16.msra.mxu0 0
        %945 = vmatprep.mubr.bf16.mxu0 0
        %946 = vmatmul.mubr.bf16.gmra.mxu0 %v908
        %v947 = vpop.f32.mrf.mxu0
        %v948 = vadd.f32 0.0, %v947
        %v949 = vpop.f32.mrf.mxu0
        %v950 = vpop.f32.mrf.mxu0
        %v951 = vadd.f32 0.0, %v950
        %v952 = vpop.f32.mrf.mxu0
        %953 = vdwg.mxu0
        %v954 = vadd.f32 %v875, %v948
        %v955 = vadd.f32 %v876, %v951
        %v956 = vld [vmem:[%s141 + $0x4] sm:$0xf]
        %v957 = vld [vmem:[%s141 + $0x8] sm:$0xf]
        %v958 = vld [vmem:[%s141 + $0xc] sm:$0x1]
        %s959 = scalar_lea.vmem %s0, 252
        %v960 = vld [vmem:[%s959] sm:$0xf]
        %v961 = vld [vmem:[%s959 + $0x4] sm:$0xf]
        %v962 = vld [vmem:[%s959 + $0x8] sm:$0xf]
        %v963 = vld [vmem:[%s959 + $0xc] sm:$0xf]
        %v964 = vld [vmem:[%s959 + $0x10] sm:$0xf]
        %v965 = vld [vmem:[%s959 + $0x14] sm:$0xf]
        %v966 = vld [vmem:[%s959 + $0x18] sm:$0xf]
        %v970 = vunpack.c.l.b16 %v956
        %v971 = vunpack.c.l.b16 %v957
        %v972 = vunpack.c.l.b16 %v958
        %v973 = vpack.c.b16 %v971, %v970
        %v974 = vpack.c.b16 %v972, %v972
        %v976 = vshrl.u32 %v973, 16
        %v978 = vshll.u32 %v973, 16
        %v980 = vrot.slane %v978, 1
        %v981 = vor.u32 %v976, %v980
        %v983 = vshll.u32 %v974, 16
        %v985 = vrot.slane %v983, 1
        %v986 = vsel %vm169, %v981, %v985
        %v994 = vunpack.c.l.b16 %v960
        %v995 = vunpack.c.l.b16 %v961
        %v996 = vunpack.c.l.b16 %v962
        %v997 = vunpack.c.l.b16 %v963
        %v998 = vunpack.c.l.b16 %v964
        %v999 = vunpack.c.l.b16 %v965
        %v1000 = vunpack.c.l.b16 %v966
        %v1001 = vpack.c.b16 %v995, %v994
        %v1002 = vpack.c.b16 %v997, %v996
        %v1003 = vpack.c.b16 %v999, %v998
        %v1004 = vpack.c.b16 %v1000, %v1000
        %v1009 = vsel %vm203, %v986, 0
        %v1012 = vsel %vm207, %v1004, 0
        %1014 = vmatprep.subr.bf16.mxu0 0
        %1015 = vmatpush1.bf16.msra.mxu0 0
        %1016 = vmatprep.subr.bf16.mxu0 0
        %1017 = vmatpush1.bf16.msra.mxu0 0
        %1018 = vmatprep.subr.bf16.mxu0 0
        %1019 = vmatpush1.bf16.msra.mxu0 0
        %1020 = vmatprep.subr.bf16.mxu0 0
        %1021 = vmatpush1.bf16.msra.mxu0 0
        %1022 = vmatprep.subr.bf16.mxu0 0
        %1023 = vmatpush1.bf16.msra.mxu0 %v1012
        %1024 = vmatprep.subr.bf16.mxu0 0
        %1025 = vmatpush1.bf16.msra.mxu0 %v1003
        %1026 = vmatprep.subr.bf16.mxu0 0
        %1027 = vmatpush1.bf16.msra.mxu0 %v1002
        %1028 = vmatprep.subr.bf16.mxu0 0
        %1029 = vmatpush1.bf16.msra.mxu0 %v1001
        %1030 = vmatprep.subr.bf16.mxu0 0
        %1031 = vmatpush2.bf16.msra.mxu0 0
        %1032 = vmatprep.subr.bf16.mxu0 0
        %1033 = vmatpush2.bf16.msra.mxu0 0
        %1034 = vmatprep.subr.bf16.mxu0 0
        %1035 = vmatpush2.bf16.msra.mxu0 0
        %1036 = vmatprep.subr.bf16.mxu0 0
        %1037 = vmatpush2.bf16.msra.mxu0 0
        %1038 = vmatprep.subr.bf16.mxu0 0
        %1039 = vmatpush2.bf16.msra.mxu0 0
        %1040 = vmatprep.subr.bf16.mxu0 0
        %1041 = vmatpush2.bf16.msra.mxu0 0
        %1042 = vmatprep.subr.bf16.mxu0 0
        %1043 = vmatpush2.bf16.msra.mxu0 0
        %1044 = vmatprep.subr.bf16.mxu0 0
        %1045 = vmatpush2.bf16.msra.mxu0 0
        %1046 = vmatprep.mubr.bf16.mxu0 0
        %1047 = vmatmul.mubr.bf16.gmra.mxu0 %v1009
        %v1048 = vpop.f32.mrf.mxu0
        %v1049 = vadd.f32 0.0, %v1048
        %v1050 = vpop.f32.mrf.mxu0
        %v1051 = vpop.f32.mrf.mxu0
        %v1052 = vadd.f32 0.0, %v1051
        %v1053 = vpop.f32.mrf.mxu0
        %1054 = vdwg.mxu0
        %v1055 = vadd.f32 %v954, %v1049
        %v1056 = vadd.f32 %v955, %v1052
        %v1057 = vld [vmem:[%s141 + $0x4] sm:$0xe]
        %s1058 = scalar_lea.vmem %s0, 280
        %v1059 = vld [vmem:[%s1058] sm:$0xf]
        %v1060 = vld [vmem:[%s1058 + $0x4] sm:$0xf]
        %v1061 = vld [vmem:[%s1058 + $0x8] sm:$0xf]
        %v1062 = vld [vmem:[%s1058 + $0xc] sm:$0xf]
        %v1063 = vld [vmem:[%s1058 + $0x10] sm:$0xf]
        %v1064 = vld [vmem:[%s1058 + $0x14] sm:$0xf]
        %v1065 = vld [vmem:[%s1058 + $0x18] sm:$0xf]
        %v1067 = vunpack.c.l.b16 %v1057
        %v1068 = vpack.c.b16 %v971, %v1067
        %v1069 = vrot.slane %v1068, 1
        %v1070 = vrot.slane %v974, 1
        %v1071 = vsel %vm331, %v1069, %v1070
        %v1079 = vunpack.c.l.b16 %v1059
        %v1080 = vunpack.c.l.b16 %v1060
        %v1081 = vunpack.c.l.b16 %v1061
        %v1082 = vunpack.c.l.b16 %v1062
        %v1083 = vunpack.c.l.b16 %v1063
        %v1084 = vunpack.c.l.b16 %v1064
        %v1085 = vunpack.c.l.b16 %v1065
        %v1086 = vpack.c.b16 %v1080, %v1079
        %v1087 = vpack.c.b16 %v1082, %v1081
        %v1088 = vpack.c.b16 %v1084, %v1083
        %v1089 = vpack.c.b16 %v1085, %v1085
        %v1094 = vsel %vm203, %v1071, 0
        %v1097 = vsel %vm207, %v1089, 0
        %1099 = vmatprep.subr.bf16.mxu0 0
        %1100 = vmatpush1.bf16.msra.mxu0 0
        %1101 = vmatprep.subr.bf16.mxu0 0
        %1102 = vmatpush1.bf16.msra.mxu0 0
        %1103 = vmatprep.subr.bf16.mxu0 0
        %1104 = vmatpush1.bf16.msra.mxu0 0
        %1105 = vmatprep.subr.bf16.mxu0 0
        %1106 = vmatpush1.bf16.msra.mxu0 0
        %1107 = vmatprep.subr.bf16.mxu0 0
        %1108 = vmatpush1.bf16.msra.mxu0 %v1097
        %1109 = vmatprep.subr.bf16.mxu0 0
        %1110 = vmatpush1.bf16.msra.mxu0 %v1088
        %1111 = vmatprep.subr.bf16.mxu0 0
        %1112 = vmatpush1.bf16.msra.mxu0 %v1087
        %1113 = vmatprep.subr.bf16.mxu0 0
        %1114 = vmatpush1.bf16.msra.mxu0 %v1086
        %1115 = vmatprep.subr.bf16.mxu0 0
        %1116 = vmatpush2.bf16.msra.mxu0 0
        %1117 = vmatprep.subr.bf16.mxu0 0
        %1118 = vmatpush2.bf16.msra.mxu0 0
        %1119 = vmatprep.subr.bf16.mxu0 0
        %1120 = vmatpush2.bf16.msra.mxu0 0
        %1121 = vmatprep.subr.bf16.mxu0 0
        %1122 = vmatpush2.bf16.msra.mxu0 0
        %1123 = vmatprep.subr.bf16.mxu0 0
        %1124 = vmatpush2.bf16.msra.mxu0 0
        %1125 = vmatprep.subr.bf16.mxu0 0
        %1126 = vmatpush2.bf16.msra.mxu0 0
        %1127 = vmatprep.subr.bf16.mxu0 0
        %1128 = vmatpush2.bf16.msra.mxu0 0
        %1129 = vmatprep.subr.bf16.mxu0 0
        %1130 = vmatpush2.bf16.msra.mxu0 0
        %1131 = vmatprep.mubr.bf16.mxu0 0
        %1132 = vmatmul.mubr.bf16.gmra.mxu0 %v1094
        %v1133 = vpop.f32.mrf.mxu0
        %v1134 = vadd.f32 0.0, %v1133
        %v1135 = vpop.f32.mrf.mxu0
        %v1136 = vpop.f32.mrf.mxu0
        %v1137 = vadd.f32 0.0, %v1136
        %v1138 = vpop.f32.mrf.mxu0
        %1139 = vdwg.mxu0
        %v1140 = vadd.f32 %v1055, %v1134
        %v1141 = vadd.f32 %v1056, %v1137
        %v1142 = vld [vmem:[%s141 + $0xc] sm:$0x3]
        %s1143 = scalar_lea.vmem %s0, 308
        %v1144 = vld [vmem:[%s1143] sm:$0xf]
        %v1145 = vld [vmem:[%s1143 + $0x4] sm:$0xf]
        %v1146 = vld [vmem:[%s1143 + $0x8] sm:$0xf]
        %v1147 = vld [vmem:[%s1143 + $0xc] sm:$0xf]
        %v1148 = vld [vmem:[%s1143 + $0x10] sm:$0xf]
        %v1149 = vld [vmem:[%s1143 + $0x14] sm:$0xf]
        %v1150 = vld [vmem:[%s1143 + $0x18] sm:$0xf]
        %v1152 = vunpack.c.l.b16 %v1142
        %v1153 = vpack.c.b16 %v1152, %v1152
        %v1155 = vshrl.u32 %v1068, 16
        %v1157 = vrot.slane %v1155, 1
        %v1158 = vshll.u32 %v1068, 16
        %v1160 = vrot.slane %v1158, 2
        %v1161 = vor.u32 %v1157, %v1160
        %v1163 = vshrl.u32 %v1153, 16
        %v1165 = vrot.slane %v1163, 1
        %v1166 = vshll.u32 %v1153, 16
        %v1168 = vrot.slane %v1166, 2
        %v1169 = vor.u32 %v1165, %v1168
        %v1170 = vsel %vm417, %v1161, %v1169
        %v1178 = vunpack.c.l.b16 %v1144
        %v1179 = vunpack.c.l.b16 %v1145
        %v1180 = vunpack.c.l.b16 %v1146
        %v1181 = vunpack.c.l.b16 %v1147
        %v1182 = vunpack.c.l.b16 %v1148
        %v1183 = vunpack.c.l.b16 %v1149
        %v1184 = vunpack.c.l.b16 %v1150
        %v1185 = vpack.c.b16 %v1179, %v1178
        %v1186 = vpack.c.b16 %v1181, %v1180
        %v1187 = vpack.c.b16 %v1183, %v1182
        %v1188 = vpack.c.b16 %v1184, %v1184
        %v1193 = vsel %vm203, %v1170, 0
        %v1196 = vsel %vm207, %v1188, 0
        %1198 = vmatprep.subr.bf16.mxu0 0
        %1199 = vmatpush1.bf16.msra.mxu0 0
        %1200 = vmatprep.subr.bf16.mxu0 0
        %1201 = vmatpush1.bf16.msra.mxu0 0
        %1202 = vmatprep.subr.bf16.mxu0 0
        %1203 = vmatpush1.bf16.msra.mxu0 0
        %1204 = vmatprep.subr.bf16.mxu0 0
        %1205 = vmatpush1.bf16.msra.mxu0 0
        %1206 = vmatprep.subr.bf16.mxu0 0
        %1207 = vmatpush1.bf16.msra.mxu0 %v1196
        %1208 = vmatprep.subr.bf16.mxu0 0
        %1209 = vmatpush1.bf16.msra.mxu0 %v1187
        %1210 = vmatprep.subr.bf16.mxu0 0
        %1211 = vmatpush1.bf16.msra.mxu0 %v1186
        %1212 = vmatprep.subr.bf16.mxu0 0
        %1213 = vmatpush1.bf16.msra.mxu0 %v1185
        %1214 = vmatprep.subr.bf16.mxu0 0
        %1215 = vmatpush2.bf16.msra.mxu0 0
        %1216 = vmatprep.subr.bf16.mxu0 0
        %1217 = vmatpush2.bf16.msra.mxu0 0
        %1218 = vmatprep.subr.bf16.mxu0 0
        %1219 = vmatpush2.bf16.msra.mxu0 0
        %1220 = vmatprep.subr.bf16.mxu0 0
        %1221 = vmatpush2.bf16.msra.mxu0 0
        %1222 = vmatprep.subr.bf16.mxu0 0
        %1223 = vmatpush2.bf16.msra.mxu0 0
        %1224 = vmatprep.subr.bf16.mxu0 0
        %1225 = vmatpush2.bf16.msra.mxu0 0
        %1226 = vmatprep.subr.bf16.mxu0 0
        %1227 = vmatpush2.bf16.msra.mxu0 0
        %1228 = vmatprep.subr.bf16.mxu0 0
        %1229 = vmatpush2.bf16.msra.mxu0 0
        %1230 = vmatprep.mubr.bf16.mxu0 0
        %1231 = vmatmul.mubr.bf16.gmra.mxu0 %v1193
        %v1232 = vpop.f32.mrf.mxu0
        %v1233 = vadd.f32 0.0, %v1232
        %v1234 = vpop.f32.mrf.mxu0
        %v1235 = vpop.f32.mrf.mxu0
        %v1236 = vadd.f32 0.0, %v1235
        %v1237 = vpop.f32.mrf.mxu0
        %1238 = vdwg.mxu0
        %v1239 = vadd.f32 %v1140, %v1233
        %v1240 = vadd.f32 %v1141, %v1236
        %v1241 = vld [vmem:[%s141 + $0x4] sm:$0xc]
        %s1242 = scalar_lea.vmem %s0, 336
        %v1243 = vld [vmem:[%s1242] sm:$0xf]
        %v1244 = vld [vmem:[%s1242 + $0x4] sm:$0xf]
        %v1245 = vld [vmem:[%s1242 + $0x8] sm:$0xf]
        %v1246 = vld [vmem:[%s1242 + $0xc] sm:$0xf]
        %v1247 = vld [vmem:[%s1242 + $0x10] sm:$0xf]
        %v1248 = vld [vmem:[%s1242 + $0x14] sm:$0xf]
        %v1249 = vld [vmem:[%s1242 + $0x18] sm:$0xf]
        %v1251 = vunpack.c.l.b16 %v1241
        %v1252 = vpack.c.b16 %v971, %v1251
        %v1253 = vrot.slane %v1252, 2
        %v1254 = vrot.slane %v1153, 2
        %v1255 = vsel %vm517, %v1253, %v1254
        %v1263 = vunpack.c.l.b16 %v1243
        %v1264 = vunpack.c.l.b16 %v1244
        %v1265 = vunpack.c.l.b16 %v1245
        %v1266 = vunpack.c.l.b16 %v1246
        %v1267 = vunpack.c.l.b16 %v1247
        %v1268 = vunpack.c.l.b16 %v1248
        %v1269 = vunpack.c.l.b16 %v1249
        %v1270 = vpack.c.b16 %v1264, %v1263
        %v1271 = vpack.c.b16 %v1266, %v1265
        %v1272 = vpack.c.b16 %v1268, %v1267
        %v1273 = vpack.c.b16 %v1269, %v1269
        %v1278 = vsel %vm203, %v1255, 0
        %v1281 = vsel %vm207, %v1273, 0
        %1283 = vmatprep.subr.bf16.mxu0 0
        %1284 = vmatpush1.bf16.msra.mxu0 0
        %1285 = vmatprep.subr.bf16.mxu0 0
        %1286 = vmatpush1.bf16.msra.mxu0 0
        %1287 = vmatprep.subr.bf16.mxu0 0
        %1288 = vmatpush1.bf16.msra.mxu0 0
        %1289 = vmatprep.subr.bf16.mxu0 0
        %1290 = vmatpush1.bf16.msra.mxu0 0
        %1291 = vmatprep.subr.bf16.mxu0 0
        %1292 = vmatpush1.bf16.msra.mxu0 %v1281
        %1293 = vmatprep.subr.bf16.mxu0 0
        %1294 = vmatpush1.bf16.msra.mxu0 %v1272
        %1295 = vmatprep.subr.bf16.mxu0 0
        %1296 = vmatpush1.bf16.msra.mxu0 %v1271
        %1297 = vmatprep.subr.bf16.mxu0 0
        %1298 = vmatpush1.bf16.msra.mxu0 %v1270
        %1299 = vmatprep.subr.bf16.mxu0 0
        %1300 = vmatpush2.bf16.msra.mxu0 0
        %1301 = vmatprep.subr.bf16.mxu0 0
        %1302 = vmatpush2.bf16.msra.mxu0 0
        %1303 = vmatprep.subr.bf16.mxu0 0
        %1304 = vmatpush2.bf16.msra.mxu0 0
        %1305 = vmatprep.subr.bf16.mxu0 0
        %1306 = vmatpush2.bf16.msra.mxu0 0
        %1307 = vmatprep.subr.bf16.mxu0 0
        %1308 = vmatpush2.bf16.msra.mxu0 0
        %1309 = vmatprep.subr.bf16.mxu0 0
        %1310 = vmatpush2.bf16.msra.mxu0 0
        %1311 = vmatprep.subr.bf16.mxu0 0
        %1312 = vmatpush2.bf16.msra.mxu0 0
        %1313 = vmatprep.subr.bf16.mxu0 0
        %1314 = vmatpush2.bf16.msra.mxu0 0
        %1315 = vmatprep.mubr.bf16.mxu0 0
        %1316 = vmatmul.mubr.bf16.gmra.mxu0 %v1278
        %v1317 = vpop.f32.mrf.mxu0
        %v1318 = vadd.f32 0.0, %v1317
        %v1319 = vpop.f32.mrf.mxu0
        %v1320 = vpop.f32.mrf.mxu0
        %v1321 = vadd.f32 0.0, %v1320
        %v1322 = vpop.f32.mrf.mxu0
        %1323 = vdwg.mxu0
        %v1324 = vadd.f32 %v1239, %v1318
        %v1325 = vadd.f32 %v1240, %v1321
        %v1326 = vld [vmem:[%s141 + $0xc] sm:$0x7]
        %s1327 = scalar_lea.vmem %s0, 364
        %v1328 = vld [vmem:[%s1327] sm:$0xf]
        %v1329 = vld [vmem:[%s1327 + $0x4] sm:$0xf]
        %v1330 = vld [vmem:[%s1327 + $0x8] sm:$0xf]
        %v1331 = vld [vmem:[%s1327 + $0xc] sm:$0xf]
        %v1332 = vld [vmem:[%s1327 + $0x10] sm:$0xf]
        %v1333 = vld [vmem:[%s1327 + $0x14] sm:$0xf]
        %v1334 = vld [vmem:[%s1327 + $0x18] sm:$0xf]
        %v1336 = vunpack.c.l.b16 %v1326
        %v1337 = vpack.c.b16 %v1336, %v1336
        %v1339 = vshrl.u32 %v1252, 16
        %v1341 = vrot.slane %v1339, 2
        %v1342 = vshll.u32 %v1252, 16
        %v1344 = vrot.slane %v1342, 3
        %v1345 = vor.u32 %v1341, %v1344
        %v1347 = vshrl.u32 %v1337, 16
        %v1349 = vrot.slane %v1347, 2
        %v1350 = vshll.u32 %v1337, 16
        %v1352 = vrot.slane %v1350, 3
        %v1353 = vor.u32 %v1349, %v1352
        %v1354 = vsel %vm603, %v1345, %v1353
        %v1362 = vunpack.c.l.b16 %v1328
        %v1363 = vunpack.c.l.b16 %v1329
        %v1364 = vunpack.c.l.b16 %v1330
        %v1365 = vunpack.c.l.b16 %v1331
        %v1366 = vunpack.c.l.b16 %v1332
        %v1367 = vunpack.c.l.b16 %v1333
        %v1368 = vunpack.c.l.b16 %v1334
        %v1369 = vpack.c.b16 %v1363, %v1362
        %v1370 = vpack.c.b16 %v1365, %v1364
        %v1371 = vpack.c.b16 %v1367, %v1366
        %v1372 = vpack.c.b16 %v1368, %v1368
        %v1377 = vsel %vm203, %v1354, 0
        %v1380 = vsel %vm207, %v1372, 0
        %1382 = vmatprep.subr.bf16.mxu0 0
        %1383 = vmatpush1.bf16.msra.mxu0 0
        %1384 = vmatprep.subr.bf16.mxu0 0
        %1385 = vmatpush1.bf16.msra.mxu0 0
        %1386 = vmatprep.subr.bf16.mxu0 0
        %1387 = vmatpush1.bf16.msra.mxu0 0
        %1388 = vmatprep.subr.bf16.mxu0 0
        %1389 = vmatpush1.bf16.msra.mxu0 0
        %1390 = vmatprep.subr.bf16.mxu0 0
        %1391 = vmatpush1.bf16.msra.mxu0 %v1380
        %1392 = vmatprep.subr.bf16.mxu0 0
        %1393 = vmatpush1.bf16.msra.mxu0 %v1371
        %1394 = vmatprep.subr.bf16.mxu0 0
        %1395 = vmatpush1.bf16.msra.mxu0 %v1370
        %1396 = vmatprep.subr.bf16.mxu0 0
        %1397 = vmatpush1.bf16.msra.mxu0 %v1369
        %1398 = vmatprep.subr.bf16.mxu0 0
        %1399 = vmatpush2.bf16.msra.mxu0 0
        %1400 = vmatprep.subr.bf16.mxu0 0
        %1401 = vmatpush2.bf16.msra.mxu0 0
        %1402 = vmatprep.subr.bf16.mxu0 0
        %1403 = vmatpush2.bf16.msra.mxu0 0
        %1404 = vmatprep.subr.bf16.mxu0 0
        %1405 = vmatpush2.bf16.msra.mxu0 0
        %1406 = vmatprep.subr.bf16.mxu0 0
        %1407 = vmatpush2.bf16.msra.mxu0 0
        %1408 = vmatprep.subr.bf16.mxu0 0
        %1409 = vmatpush2.bf16.msra.mxu0 0
        %1410 = vmatprep.subr.bf16.mxu0 0
        %1411 = vmatpush2.bf16.msra.mxu0 0
        %1412 = vmatprep.subr.bf16.mxu0 0
        %1413 = vmatpush2.bf16.msra.mxu0 0
        %1414 = vmatprep.mubr.bf16.mxu0 0
        %1415 = vmatmul.mubr.bf16.gmra.mxu0 %v1377
        %v1416 = vpop.f32.mrf.mxu0
        %v1417 = vadd.f32 0.0, %v1416
        %v1418 = vpop.f32.mrf.mxu0
        %v1419 = vpop.f32.mrf.mxu0
        %v1420 = vadd.f32 0.0, %v1419
        %v1421 = vpop.f32.mrf.mxu0
        %1422 = vdwg.mxu0
        %v1423 = vadd.f32 %v1324, %v1417
        %v1424 = vadd.f32 %v1325, %v1420
        %v1425 = vld [vmem:[%s141 + $0x4] sm:$0x8]
        %s1426 = scalar_lea.vmem %s0, 392
        %v1427 = vld [vmem:[%s1426] sm:$0xf]
        %v1428 = vld [vmem:[%s1426 + $0x4] sm:$0xf]
        %v1429 = vld [vmem:[%s1426 + $0x8] sm:$0xf]
        %v1430 = vld [vmem:[%s1426 + $0xc] sm:$0xf]
        %v1431 = vld [vmem:[%s1426 + $0x10] sm:$0xf]
        %v1432 = vld [vmem:[%s1426 + $0x14] sm:$0xf]
        %v1433 = vld [vmem:[%s1426 + $0x18] sm:$0xf]
        %v1435 = vunpack.c.l.b16 %v1425
        %v1436 = vpack.c.b16 %v971, %v1435
        %v1437 = vrot.slane %v1436, 3
        %v1438 = vrot.slane %v1337, 3
        %v1439 = vsel %vm703, %v1437, %v1438
        %v1447 = vunpack.c.l.b16 %v1427
        %v1448 = vunpack.c.l.b16 %v1428
        %v1449 = vunpack.c.l.b16 %v1429
        %v1450 = vunpack.c.l.b16 %v1430
        %v1451 = vunpack.c.l.b16 %v1431
        %v1452 = vunpack.c.l.b16 %v1432
        %v1453 = vunpack.c.l.b16 %v1433
        %v1454 = vpack.c.b16 %v1448, %v1447
        %v1455 = vpack.c.b16 %v1450, %v1449
        %v1456 = vpack.c.b16 %v1452, %v1451
        %v1457 = vpack.c.b16 %v1453, %v1453
        %v1462 = vsel %vm203, %v1439, 0
        %v1465 = vsel %vm207, %v1457, 0
        %1467 = vmatprep.subr.bf16.mxu0 0
        %1468 = vmatpush1.bf16.msra.mxu0 0
        %1469 = vmatprep.subr.bf16.mxu0 0
        %1470 = vmatpush1.bf16.msra.mxu0 0
        %1471 = vmatprep.subr.bf16.mxu0 0
        %1472 = vmatpush1.bf16.msra.mxu0 0
        %1473 = vmatprep.subr.bf16.mxu0 0
        %1474 = vmatpush1.bf16.msra.mxu0 0
        %1475 = vmatprep.subr.bf16.mxu0 0
        %1476 = vmatpush1.bf16.msra.mxu0 %v1465
        %1477 = vmatprep.subr.bf16.mxu0 0
        %1478 = vmatpush1.bf16.msra.mxu0 %v1456
        %1479 = vmatprep.subr.bf16.mxu0 0
        %1480 = vmatpush1.bf16.msra.mxu0 %v1455
        %1481 = vmatprep.subr.bf16.mxu0 0
        %1482 = vmatpush1.bf16.msra.mxu0 %v1454
        %1483 = vmatprep.subr.bf16.mxu0 0
        %1484 = vmatpush2.bf16.msra.mxu0 0
        %1485 = vmatprep.subr.bf16.mxu0 0
        %1486 = vmatpush2.bf16.msra.mxu0 0
        %1487 = vmatprep.subr.bf16.mxu0 0
        %1488 = vmatpush2.bf16.msra.mxu0 0
        %1489 = vmatprep.subr.bf16.mxu0 0
        %1490 = vmatpush2.bf16.msra.mxu0 0
        %1491 = vmatprep.subr.bf16.mxu0 0
        %1492 = vmatpush2.bf16.msra.mxu0 0
        %1493 = vmatprep.subr.bf16.mxu0 0
        %1494 = vmatpush2.bf16.msra.mxu0 0
        %1495 = vmatprep.subr.bf16.mxu0 0
        %1496 = vmatpush2.bf16.msra.mxu0 0
        %1497 = vmatprep.subr.bf16.mxu0 0
        %1498 = vmatpush2.bf16.msra.mxu0 0
        %1499 = vmatprep.mubr.bf16.mxu0 0
        %1500 = vmatmul.mubr.bf16.gmra.mxu0 %v1462
        %v1501 = vpop.f32.mrf.mxu0
        %v1502 = vadd.f32 0.0, %v1501
        %v1503 = vpop.f32.mrf.mxu0
        %v1504 = vpop.f32.mrf.mxu0
        %v1505 = vadd.f32 0.0, %v1504
        %v1506 = vpop.f32.mrf.mxu0
        %1507 = vdwg.mxu0
        %v1508 = vadd.f32 %v1423, %v1502
        %v1509 = vadd.f32 %v1424, %v1505
        %v1510 = vld [vmem:[%s141 + $0xc] sm:$0xf]
        %s1511 = scalar_lea.vmem %s0, 420
        %v1512 = vld [vmem:[%s1511] sm:$0xf]
        %v1513 = vld [vmem:[%s1511 + $0x4] sm:$0xf]
        %v1514 = vld [vmem:[%s1511 + $0x8] sm:$0xf]
        %v1515 = vld [vmem:[%s1511 + $0xc] sm:$0xf]
        %v1516 = vld [vmem:[%s1511 + $0x10] sm:$0xf]
        %v1517 = vld [vmem:[%s1511 + $0x14] sm:$0xf]
        %v1518 = vld [vmem:[%s1511 + $0x18] sm:$0xf]
        %v1520 = vunpack.c.l.b16 %v1510
        %v1521 = vpack.c.b16 %v1520, %v1520
        %v1523 = vshrl.u32 %v1436, 16
        %v1525 = vrot.slane %v1523, 3
        %v1526 = vshll.u32 %v1436, 16
        %v1528 = vrot.slane %v1526, 4
        %v1529 = vor.u32 %v1525, %v1528
        %v1531 = vshrl.u32 %v1521, 16
        %v1533 = vrot.slane %v1531, 3
        %v1534 = vshll.u32 %v1521, 16
        %v1536 = vrot.slane %v1534, 4
        %v1537 = vor.u32 %v1533, %v1536
        %v1538 = vsel %vm789, %v1529, %v1537
        %v1546 = vunpack.c.l.b16 %v1512
        %v1547 = vunpack.c.l.b16 %v1513
        %v1548 = vunpack.c.l.b16 %v1514
        %v1549 = vunpack.c.l.b16 %v1515
        %v1550 = vunpack.c.l.b16 %v1516
        %v1551 = vunpack.c.l.b16 %v1517
        %v1552 = vunpack.c.l.b16 %v1518
        %v1553 = vpack.c.b16 %v1547, %v1546
        %v1554 = vpack.c.b16 %v1549, %v1548
        %v1555 = vpack.c.b16 %v1551, %v1550
        %v1556 = vpack.c.b16 %v1552, %v1552
        %v1561 = vsel %vm203, %v1538, 0
        %v1564 = vsel %vm207, %v1556, 0
        %1566 = vmatprep.subr.bf16.mxu0 0
        %1567 = vmatpush1.bf16.msra.mxu0 0
        %1568 = vmatprep.subr.bf16.mxu0 0
        %1569 = vmatpush1.bf16.msra.mxu0 0
        %1570 = vmatprep.subr.bf16.mxu0 0
        %1571 = vmatpush1.bf16.msra.mxu0 0
        %1572 = vmatprep.subr.bf16.mxu0 0
        %1573 = vmatpush1.bf16.msra.mxu0 0
        %1574 = vmatprep.subr.bf16.mxu0 0
        %1575 = vmatpush1.bf16.msra.mxu0 %v1564
        %1576 = vmatprep.subr.bf16.mxu0 0
        %1577 = vmatpush1.bf16.msra.mxu0 %v1555
        %1578 = vmatprep.subr.bf16.mxu0 0
        %1579 = vmatpush1.bf16.msra.mxu0 %v1554
        %1580 = vmatprep.subr.bf16.mxu0 0
        %1581 = vmatpush1.bf16.msra.mxu0 %v1553
        %1582 = vmatprep.subr.bf16.mxu0 0
        %1583 = vmatpush2.bf16.msra.mxu0 0
        %1584 = vmatprep.subr.bf16.mxu0 0
        %1585 = vmatpush2.bf16.msra.mxu0 0
        %1586 = vmatprep.subr.bf16.mxu0 0
        %1587 = vmatpush2.bf16.msra.mxu0 0
        %1588 = vmatprep.subr.bf16.mxu0 0
        %1589 = vmatpush2.bf16.msra.mxu0 0
        %1590 = vmatprep.subr.bf16.mxu0 0
        %1591 = vmatpush2.bf16.msra.mxu0 0
        %1592 = vmatprep.subr.bf16.mxu0 0
        %1593 = vmatpush2.bf16.msra.mxu0 0
        %1594 = vmatprep.subr.bf16.mxu0 0
        %1595 = vmatpush2.bf16.msra.mxu0 0
        %1596 = vmatprep.subr.bf16.mxu0 0
        %1597 = vmatpush2.bf16.msra.mxu0 0
        %1598 = vmatprep.mubr.bf16.mxu0 0
        %1599 = vmatmul.mubr.bf16.gmra.mxu0 %v1561
        %v1600 = vpop.f32.mrf.mxu0
        %v1601 = vadd.f32 0.0, %v1600
        %v1602 = vpop.f32.mrf.mxu0
        %v1603 = vpop.f32.mrf.mxu0
        %v1604 = vadd.f32 0.0, %v1603
        %v1605 = vpop.f32.mrf.mxu0
        %1606 = vdwg.mxu0
        %v1607 = vadd.f32 %v1508, %v1601
        %v1608 = vadd.f32 %v1509, %v1604
        %s1609 = scalar_lea.vmem %s0, 448
        %v1610 = vld [vmem:[%s1609] sm:$0xf]
        %v1611 = vld [vmem:[%s1609 + $0x4] sm:$0xf]
        %v1612 = vld [vmem:[%s1609 + $0x8] sm:$0xf]
        %v1613 = vld [vmem:[%s1609 + $0xc] sm:$0xf]
        %v1614 = vld [vmem:[%s1609 + $0x10] sm:$0xf]
        %v1615 = vld [vmem:[%s1609 + $0x14] sm:$0xf]
        %v1616 = vld [vmem:[%s1609 + $0x18] sm:$0xf]
        %v1617 = vpack.c.b16 %v1520, %v971
        %v1625 = vunpack.c.l.b16 %v1610
        %v1626 = vunpack.c.l.b16 %v1611
        %v1627 = vunpack.c.l.b16 %v1612
        %v1628 = vunpack.c.l.b16 %v1613
        %v1629 = vunpack.c.l.b16 %v1614
        %v1630 = vunpack.c.l.b16 %v1615
        %v1631 = vunpack.c.l.b16 %v1616
        %v1632 = vpack.c.b16 %v1626, %v1625
        %v1633 = vpack.c.b16 %v1628, %v1627
        %v1634 = vpack.c.b16 %v1630, %v1629
        %v1635 = vpack.c.b16 %v1631, %v1631
        %v1640 = vsel %vm203, %v1617, 0
        %v1643 = vsel %vm207, %v1635, 0
        %1645 = vmatprep.subr.bf16.mxu0 0
        %1646 = vmatpush1.bf16.msra.mxu0 0
        %1647 = vmatprep.subr.bf16.mxu0 0
        %1648 = vmatpush1.bf16.msra.mxu0 0
        %1649 = vmatprep.subr.bf16.mxu0 0
        %1650 = vmatpush1.bf16.msra.mxu0 0
        %1651 = vmatprep.subr.bf16.mxu0 0
        %1652 = vmatpush1.bf16.msra.mxu0 0
        %1653 = vmatprep.subr.bf16.mxu0 0
        %1654 = vmatpush1.bf16.msra.mxu0 %v1643
        %1655 = vmatprep.subr.bf16.mxu0 0
        %1656 = vmatpush1.bf16.msra.mxu0 %v1634
        %1657 = vmatprep.subr.bf16.mxu0 0
        %1658 = vmatpush1.bf16.msra.mxu0 %v1633
        %1659 = vmatprep.subr.bf16.mxu0 0
        %1660 = vmatpush1.bf16.msra.mxu0 %v1632
        %1661 = vmatprep.subr.bf16.mxu0 0
        %1662 = vmatpush2.bf16.msra.mxu0 0
        %1663 = vmatprep.subr.bf16.mxu0 0
        %1664 = vmatpush2.bf16.msra.mxu0 0
        %1665 = vmatprep.subr.bf16.mxu0 0
        %1666 = vmatpush2.bf16.msra.mxu0 0
        %1667 = vmatprep.subr.bf16.mxu0 0
        %1668 = vmatpush2.bf16.msra.mxu0 0
        %1669 = vmatprep.subr.bf16.mxu0 0
        %1670 = vmatpush2.bf16.msra.mxu0 0
        %1671 = vmatprep.subr.bf16.mxu0 0
        %1672 = vmatpush2.bf16.msra.mxu0 0
        %1673 = vmatprep.subr.bf16.mxu0 0
        %1674 = vmatpush2.bf16.msra.mxu0 0
        %1675 = vmatprep.subr.bf16.mxu0 0
        %1676 = vmatpush2.bf16.msra.mxu0 0
        %1677 = vmatprep.mubr.bf16.mxu0 0
        %1678 = vmatmul.mubr.bf16.gmra.mxu0 %v1640
        %v1679 = vpop.f32.mrf.mxu0
        %v1680 = vadd.f32 0.0, %v1679
        %v1681 = vpop.f32.mrf.mxu0
        %v1682 = vpop.f32.mrf.mxu0
        %v1683 = vadd.f32 0.0, %v1682
        %v1684 = vpop.f32.mrf.mxu0
        %1685 = vdwg.mxu0
        %v1686 = vadd.f32 %v1607, %v1680
        %v1687 = vadd.f32 %v1608, %v1683
        %v1688 = vld [vmem:[%s141 + $0x8] sm:$0xf]
        %v1689 = vld [vmem:[%s141 + $0xc] sm:$0xf]
        %v1690 = vld [vmem:[%s141 + $0x10] sm:$0x1]
        %s1691 = scalar_lea.vmem %s0, 476
        %v1692 = vld [vmem:[%s1691] sm:$0xf]
        %v1693 = vld [vmem:[%s1691 + $0x4] sm:$0xf]
        %v1694 = vld [vmem:[%s1691 + $0x8] sm:$0xf]
        %v1695 = vld [vmem:[%s1691 + $0xc] sm:$0xf]
        %v1696 = vld [vmem:[%s1691 + $0x10] sm:$0xf]
        %v1697 = vld [vmem:[%s1691 + $0x14] sm:$0xf]
        %v1698 = vld [vmem:[%s1691 + $0x18] sm:$0xf]
        %v1702 = vunpack.c.l.b16 %v1688
        %v1703 = vunpack.c.l.b16 %v1689
        %v1704 = vunpack.c.l.b16 %v1690
        %v1705 = vpack.c.b16 %v1703, %v1702
        %v1706 = vpack.c.b16 %v1704, %v1704
        %v1708 = vshrl.u32 %v1705, 16
        %v1710 = vshll.u32 %v1705, 16
        %v1712 = vrot.slane %v1710, 1
        %v1713 = vor.u32 %v1708, %v1712
        %v1715 = vshll.u32 %v1706, 16
        %v1717 = vrot.slane %v1715, 1
        %v1718 = vsel %vm169, %v1713, %v1717
        %v1726 = vunpack.c.l.b16 %v1692
        %v1727 = vunpack.c.l.b16 %v1693
        %v1728 = vunpack.c.l.b16 %v1694
        %v1729 = vunpack.c.l.b16 %v1695
        %v1730 = vunpack.c.l.b16 %v1696
        %v1731 = vunpack.c.l.b16 %v1697
        %v1732 = vunpack.c.l.b16 %v1698
        %v1733 = vpack.c.b16 %v1727, %v1726
        %v1734 = vpack.c.b16 %v1729, %v1728
        %v1735 = vpack.c.b16 %v1731, %v1730
        %v1736 = vpack.c.b16 %v1732, %v1732
        %v1741 = vsel %vm203, %v1718, 0
        %v1744 = vsel %vm207, %v1736, 0
        %1746 = vmatprep.subr.bf16.mxu0 0
        %1747 = vmatpush1.bf16.msra.mxu0 0
        %1748 = vmatprep.subr.bf16.mxu0 0
        %1749 = vmatpush1.bf16.msra.mxu0 0
        %1750 = vmatprep.subr.bf16.mxu0 0
        %1751 = vmatpush1.bf16.msra.mxu0 0
        %1752 = vmatprep.subr.bf16.mxu0 0
        %1753 = vmatpush1.bf16.msra.mxu0 0
        %1754 = vmatprep.subr.bf16.mxu0 0
        %1755 = vmatpush1.bf16.msra.mxu0 %v1744
        %1756 = vmatprep.subr.bf16.mxu0 0
        %1757 = vmatpush1.bf16.msra.mxu0 %v1735
        %1758 = vmatprep.subr.bf16.mxu0 0
        %1759 = vmatpush1.bf16.msra.mxu0 %v1734
        %1760 = vmatprep.subr.bf16.mxu0 0
        %1761 = vmatpush1.bf16.msra.mxu0 %v1733
        %1762 = vmatprep.subr.bf16.mxu0 0
        %1763 = vmatpush2.bf16.msra.mxu0 0
        %1764 = vmatprep.subr.bf16.mxu0 0
        %1765 = vmatpush2.bf16.msra.mxu0 0
        %1766 = vmatprep.subr.bf16.mxu0 0
        %1767 = vmatpush2.bf16.msra.mxu0 0
        %1768 = vmatprep.subr.bf16.mxu0 0
        %1769 = vmatpush2.bf16.msra.mxu0 0
        %1770 = vmatprep.subr.bf16.mxu0 0
        %1771 = vmatpush2.bf16.msra.mxu0 0
        %1772 = vmatprep.subr.bf16.mxu0 0
        %1773 = vmatpush2.bf16.msra.mxu0 0
        %1774 = vmatprep.subr.bf16.mxu0 0
        %1775 = vmatpush2.bf16.msra.mxu0 0
        %1776 = vmatprep.subr.bf16.mxu0 0
        %1777 = vmatpush2.bf16.msra.mxu0 0
        %1778 = vmatprep.mubr.bf16.mxu0 0
        %1779 = vmatmul.mubr.bf16.gmra.mxu0 %v1741
        %v1780 = vpop.f32.mrf.mxu0
        %v1781 = vadd.f32 0.0, %v1780
        %v1782 = vpop.f32.mrf.mxu0
        %v1783 = vpop.f32.mrf.mxu0
        %v1784 = vadd.f32 0.0, %v1783
        %v1785 = vpop.f32.mrf.mxu0
        %1786 = vdwg.mxu0
        %v1787 = vadd.f32 %v1686, %v1781
        %v1788 = vadd.f32 %v1687, %v1784
        %v1789 = vld [vmem:[%s141 + $0x8] sm:$0xe]
        %s1790 = scalar_lea.vmem %s0, 504
        %v1791 = vld [vmem:[%s1790] sm:$0xf]
        %v1792 = vld [vmem:[%s1790 + $0x4] sm:$0xf]
        %v1793 = vld [vmem:[%s1790 + $0x8] sm:$0xf]
        %v1794 = vld [vmem:[%s1790 + $0xc] sm:$0xf]
        %v1795 = vld [vmem:[%s1790 + $0x10] sm:$0xf]
        %v1796 = vld [vmem:[%s1790 + $0x14] sm:$0xf]
        %v1797 = vld [vmem:[%s1790 + $0x18] sm:$0xf]
        %v1799 = vunpack.c.l.b16 %v1789
        %v1800 = vpack.c.b16 %v1703, %v1799
        %v1801 = vrot.slane %v1800, 1
        %v1802 = vrot.slane %v1706, 1
        %v1803 = vsel %vm331, %v1801, %v1802
        %v1811 = vunpack.c.l.b16 %v1791
        %v1812 = vunpack.c.l.b16 %v1792
        %v1813 = vunpack.c.l.b16 %v1793
        %v1814 = vunpack.c.l.b16 %v1794
        %v1815 = vunpack.c.l.b16 %v1795
        %v1816 = vunpack.c.l.b16 %v1796
        %v1817 = vunpack.c.l.b16 %v1797
        %v1818 = vpack.c.b16 %v1812, %v1811
        %v1819 = vpack.c.b16 %v1814, %v1813
        %v1820 = vpack.c.b16 %v1816, %v1815
        %v1821 = vpack.c.b16 %v1817, %v1817
        %v1826 = vsel %vm203, %v1803, 0
        %v1829 = vsel %vm207, %v1821, 0
        %1831 = vmatprep.subr.bf16.mxu0 0
        %1832 = vmatpush1.bf16.msra.mxu0 0
        %1833 = vmatprep.subr.bf16.mxu0 0
        %1834 = vmatpush1.bf16.msra.mxu0 0
        %1835 = vmatprep.subr.bf16.mxu0 0
        %1836 = vmatpush1.bf16.msra.mxu0 0
        %1837 = vmatprep.subr.bf16.mxu0 0
        %1838 = vmatpush1.bf16.msra.mxu0 0
        %1839 = vmatprep.subr.bf16.mxu0 0
        %1840 = vmatpush1.bf16.msra.mxu0 %v1829
        %1841 = vmatprep.subr.bf16.mxu0 0
        %1842 = vmatpush1.bf16.msra.mxu0 %v1820
        %1843 = vmatprep.subr.bf16.mxu0 0
        %1844 = vmatpush1.bf16.msra.mxu0 %v1819
        %1845 = vmatprep.subr.bf16.mxu0 0
        %1846 = vmatpush1.bf16.msra.mxu0 %v1818
        %1847 = vmatprep.subr.bf16.mxu0 0
        %1848 = vmatpush2.bf16.msra.mxu0 0
        %1849 = vmatprep.subr.bf16.mxu0 0
        %1850 = vmatpush2.bf16.msra.mxu0 0
        %1851 = vmatprep.subr.bf16.mxu0 0
        %1852 = vmatpush2.bf16.msra.mxu0 0
        %1853 = vmatprep.subr.bf16.mxu0 0
        %1854 = vmatpush2.bf16.msra.mxu0 0
        %1855 = vmatprep.subr.bf16.mxu0 0
        %1856 = vmatpush2.bf16.msra.mxu0 0
        %1857 = vmatprep.subr.bf16.mxu0 0
        %1858 = vmatpush2.bf16.msra.mxu0 0
        %1859 = vmatprep.subr.bf16.mxu0 0
        %1860 = vmatpush2.bf16.msra.mxu0 0
        %1861 = vmatprep.subr.bf16.mxu0 0
        %1862 = vmatpush2.bf16.msra.mxu0 0
        %1863 = vmatprep.mubr.bf16.mxu0 0
        %1864 = vmatmul.mubr.bf16.gmra.mxu0 %v1826
        %v1865 = vpop.f32.mrf.mxu0
        %v1866 = vadd.f32 0.0, %v1865
        %v1867 = vpop.f32.mrf.mxu0
        %v1868 = vpop.f32.mrf.mxu0
        %v1869 = vadd.f32 0.0, %v1868
        %v1870 = vpop.f32.mrf.mxu0
        %1871 = vdwg.mxu0
        %v1872 = vadd.f32 %v1787, %v1866
        %v1873 = vadd.f32 %v1788, %v1869
        %v1874 = vld [vmem:[%s141 + $0x10] sm:$0x3]
        %s1875 = scalar_lea.vmem %s0, 532
        %v1876 = vld [vmem:[%s1875] sm:$0xf]
        %v1877 = vld [vmem:[%s1875 + $0x4] sm:$0xf]
        %v1878 = vld [vmem:[%s1875 + $0x8] sm:$0xf]
        %v1879 = vld [vmem:[%s1875 + $0xc] sm:$0xf]
        %v1880 = vld [vmem:[%s1875 + $0x10] sm:$0xf]
        %v1881 = vld [vmem:[%s1875 + $0x14] sm:$0xf]
        %v1882 = vld [vmem:[%s1875 + $0x18] sm:$0xf]
        %v1884 = vunpack.c.l.b16 %v1874
        %v1885 = vpack.c.b16 %v1884, %v1884
        %v1887 = vshrl.u32 %v1800, 16
        %v1889 = vrot.slane %v1887, 1
        %v1890 = vshll.u32 %v1800, 16
        %v1892 = vrot.slane %v1890, 2
        %v1893 = vor.u32 %v1889, %v1892
        %v1895 = vshrl.u32 %v1885, 16
        %v1897 = vrot.slane %v1895, 1
        %v1898 = vshll.u32 %v1885, 16
        %v1900 = vrot.slane %v1898, 2
        %v1901 = vor.u32 %v1897, %v1900
        %v1902 = vsel %vm417, %v1893, %v1901
        %v1910 = vunpack.c.l.b16 %v1876
        %v1911 = vunpack.c.l.b16 %v1877
        %v1912 = vunpack.c.l.b16 %v1878
        %v1913 = vunpack.c.l.b16 %v1879
        %v1914 = vunpack.c.l.b16 %v1880
        %v1915 = vunpack.c.l.b16 %v1881
        %v1916 = vunpack.c.l.b16 %v1882
        %v1917 = vpack.c.b16 %v1911, %v1910
        %v1918 = vpack.c.b16 %v1913, %v1912
        %v1919 = vpack.c.b16 %v1915, %v1914
        %v1920 = vpack.c.b16 %v1916, %v1916
        %v1925 = vsel %vm203, %v1902, 0
        %v1928 = vsel %vm207, %v1920, 0
        %1930 = vmatprep.subr.bf16.mxu0 0
        %1931 = vmatpush1.bf16.msra.mxu0 0
        %1932 = vmatprep.subr.bf16.mxu0 0
        %1933 = vmatpush1.bf16.msra.mxu0 0
        %1934 = vmatprep.subr.bf16.mxu0 0
        %1935 = vmatpush1.bf16.msra.mxu0 0
        %1936 = vmatprep.subr.bf16.mxu0 0
        %1937 = vmatpush1.bf16.msra.mxu0 0
        %1938 = vmatprep.subr.bf16.mxu0 0
        %1939 = vmatpush1.bf16.msra.mxu0 %v1928
        %1940 = vmatprep.subr.bf16.mxu0 0
        %1941 = vmatpush1.bf16.msra.mxu0 %v1919
        %1942 = vmatprep.subr.bf16.mxu0 0
        %1943 = vmatpush1.bf16.msra.mxu0 %v1918
        %1944 = vmatprep.subr.bf16.mxu0 0
        %1945 = vmatpush1.bf16.msra.mxu0 %v1917
        %1946 = vmatprep.subr.bf16.mxu0 0
        %1947 = vmatpush2.bf16.msra.mxu0 0
        %1948 = vmatprep.subr.bf16.mxu0 0
        %1949 = vmatpush2.bf16.msra.mxu0 0
        %1950 = vmatprep.subr.bf16.mxu0 0
        %1951 = vmatpush2.bf16.msra.mxu0 0
        %1952 = vmatprep.subr.bf16.mxu0 0
        %1953 = vmatpush2.bf16.msra.mxu0 0
        %1954 = vmatprep.subr.bf16.mxu0 0
        %1955 = vmatpush2.bf16.msra.mxu0 0
        %1956 = vmatprep.subr.bf16.mxu0 0
        %1957 = vmatpush2.bf16.msra.mxu0 0
        %1958 = vmatprep.subr.bf16.mxu0 0
        %1959 = vmatpush2.bf16.msra.mxu0 0
        %1960 = vmatprep.subr.bf16.mxu0 0
        %1961 = vmatpush2.bf16.msra.mxu0 0
        %1962 = vmatprep.mubr.bf16.mxu0 0
        %1963 = vmatmul.mubr.bf16.gmra.mxu0 %v1925
        %v1964 = vpop.f32.mrf.mxu0
        %v1965 = vadd.f32 0.0, %v1964
        %v1966 = vpop.f32.mrf.mxu0
        %v1967 = vpop.f32.mrf.mxu0
        %v1968 = vadd.f32 0.0, %v1967
        %v1969 = vpop.f32.mrf.mxu0
        %1970 = vdwg.mxu0
        %v1971 = vadd.f32 %v1872, %v1965
        %v1972 = vadd.f32 %v1873, %v1968
        %v1973 = vld [vmem:[%s141 + $0x8] sm:$0xc]
        %s1974 = scalar_lea.vmem %s0, 560
        %v1975 = vld [vmem:[%s1974] sm:$0xf]
        %v1976 = vld [vmem:[%s1974 + $0x4] sm:$0xf]
        %v1977 = vld [vmem:[%s1974 + $0x8] sm:$0xf]
        %v1978 = vld [vmem:[%s1974 + $0xc] sm:$0xf]
        %v1979 = vld [vmem:[%s1974 + $0x10] sm:$0xf]
        %v1980 = vld [vmem:[%s1974 + $0x14] sm:$0xf]
        %v1981 = vld [vmem:[%s1974 + $0x18] sm:$0xf]
        %v1983 = vunpack.c.l.b16 %v1973
        %v1984 = vpack.c.b16 %v1703, %v1983
        %v1985 = vrot.slane %v1984, 2
        %v1986 = vrot.slane %v1885, 2
        %v1987 = vsel %vm517, %v1985, %v1986
        %v1995 = vunpack.c.l.b16 %v1975
        %v1996 = vunpack.c.l.b16 %v1976
        %v1997 = vunpack.c.l.b16 %v1977
        %v1998 = vunpack.c.l.b16 %v1978
        %v1999 = vunpack.c.l.b16 %v1979
        %v2000 = vunpack.c.l.b16 %v1980
        %v2001 = vunpack.c.l.b16 %v1981
        %v2002 = vpack.c.b16 %v1996, %v1995
        %v2003 = vpack.c.b16 %v1998, %v1997
        %v2004 = vpack.c.b16 %v2000, %v1999
        %v2005 = vpack.c.b16 %v2001, %v2001
        %v2010 = vsel %vm203, %v1987, 0
        %v2013 = vsel %vm207, %v2005, 0
        %2015 = vmatprep.subr.bf16.mxu0 0
        %2016 = vmatpush1.bf16.msra.mxu0 0
        %2017 = vmatprep.subr.bf16.mxu0 0
        %2018 = vmatpush1.bf16.msra.mxu0 0
        %2019 = vmatprep.subr.bf16.mxu0 0
        %2020 = vmatpush1.bf16.msra.mxu0 0
        %2021 = vmatprep.subr.bf16.mxu0 0
        %2022 = vmatpush1.bf16.msra.mxu0 0
        %2023 = vmatprep.subr.bf16.mxu0 0
        %2024 = vmatpush1.bf16.msra.mxu0 %v2013
        %2025 = vmatprep.subr.bf16.mxu0 0
        %2026 = vmatpush1.bf16.msra.mxu0 %v2004
        %2027 = vmatprep.subr.bf16.mxu0 0
        %2028 = vmatpush1.bf16.msra.mxu0 %v2003
        %2029 = vmatprep.subr.bf16.mxu0 0
        %2030 = vmatpush1.bf16.msra.mxu0 %v2002
        %2031 = vmatprep.subr.bf16.mxu0 0
        %2032 = vmatpush2.bf16.msra.mxu0 0
        %2033 = vmatprep.subr.bf16.mxu0 0
        %2034 = vmatpush2.bf16.msra.mxu0 0
        %2035 = vmatprep.subr.bf16.mxu0 0
        %2036 = vmatpush2.bf16.msra.mxu0 0
        %2037 = vmatprep.subr.bf16.mxu0 0
        %2038 = vmatpush2.bf16.msra.mxu0 0
        %2039 = vmatprep.subr.bf16.mxu0 0
        %2040 = vmatpush2.bf16.msra.mxu0 0
        %2041 = vmatprep.subr.bf16.mxu0 0
        %2042 = vmatpush2.bf16.msra.mxu0 0
        %2043 = vmatprep.subr.bf16.mxu0 0
        %2044 = vmatpush2.bf16.msra.mxu0 0
        %2045 = vmatprep.subr.bf16.mxu0 0
        %2046 = vmatpush2.bf16.msra.mxu0 0
        %2047 = vmatprep.mubr.bf16.mxu0 0
        %2048 = vmatmul.mubr.bf16.gmra.mxu0 %v2010
        %v2049 = vpop.f32.mrf.mxu0
        %v2050 = vadd.f32 0.0, %v2049
        %v2051 = vpop.f32.mrf.mxu0
        %v2052 = vpop.f32.mrf.mxu0
        %v2053 = vadd.f32 0.0, %v2052
        %v2054 = vpop.f32.mrf.mxu0
        %2055 = vdwg.mxu0
        %v2056 = vadd.f32 %v1971, %v2050
        %v2057 = vadd.f32 %v1972, %v2053
        %v2058 = vld [vmem:[%s141 + $0x10] sm:$0x7]
        %s2059 = scalar_lea.vmem %s0, 588
        %v2060 = vld [vmem:[%s2059] sm:$0xf]
        %v2061 = vld [vmem:[%s2059 + $0x4] sm:$0xf]
        %v2062 = vld [vmem:[%s2059 + $0x8] sm:$0xf]
        %v2063 = vld [vmem:[%s2059 + $0xc] sm:$0xf]
        %v2064 = vld [vmem:[%s2059 + $0x10] sm:$0xf]
        %v2065 = vld [vmem:[%s2059 + $0x14] sm:$0xf]
        %v2066 = vld [vmem:[%s2059 + $0x18] sm:$0xf]
        %v2068 = vunpack.c.l.b16 %v2058
        %v2069 = vpack.c.b16 %v2068, %v2068
        %v2071 = vshrl.u32 %v1984, 16
        %v2073 = vrot.slane %v2071, 2
        %v2074 = vshll.u32 %v1984, 16
        %v2076 = vrot.slane %v2074, 3
        %v2077 = vor.u32 %v2073, %v2076
        %v2079 = vshrl.u32 %v2069, 16
        %v2081 = vrot.slane %v2079, 2
        %v2082 = vshll.u32 %v2069, 16
        %v2084 = vrot.slane %v2082, 3
        %v2085 = vor.u32 %v2081, %v2084
        %v2086 = vsel %vm603, %v2077, %v2085
        %v2094 = vunpack.c.l.b16 %v2060
        %v2095 = vunpack.c.l.b16 %v2061
        %v2096 = vunpack.c.l.b16 %v2062
        %v2097 = vunpack.c.l.b16 %v2063
        %v2098 = vunpack.c.l.b16 %v2064
        %v2099 = vunpack.c.l.b16 %v2065
        %v2100 = vunpack.c.l.b16 %v2066
        %v2101 = vpack.c.b16 %v2095, %v2094
        %v2102 = vpack.c.b16 %v2097, %v2096
        %v2103 = vpack.c.b16 %v2099, %v2098
        %v2104 = vpack.c.b16 %v2100, %v2100
        %v2109 = vsel %vm203, %v2086, 0
        %v2112 = vsel %vm207, %v2104, 0
        %2114 = vmatprep.subr.bf16.mxu0 0
        %2115 = vmatpush1.bf16.msra.mxu0 0
        %2116 = vmatprep.subr.bf16.mxu0 0
        %2117 = vmatpush1.bf16.msra.mxu0 0
        %2118 = vmatprep.subr.bf16.mxu0 0
        %2119 = vmatpush1.bf16.msra.mxu0 0
        %2120 = vmatprep.subr.bf16.mxu0 0
        %2121 = vmatpush1.bf16.msra.mxu0 0
        %2122 = vmatprep.subr.bf16.mxu0 0
        %2123 = vmatpush1.bf16.msra.mxu0 %v2112
        %2124 = vmatprep.subr.bf16.mxu0 0
        %2125 = vmatpush1.bf16.msra.mxu0 %v2103
        %2126 = vmatprep.subr.bf16.mxu0 0
        %2127 = vmatpush1.bf16.msra.mxu0 %v2102
        %2128 = vmatprep.subr.bf16.mxu0 0
        %2129 = vmatpush1.bf16.msra.mxu0 %v2101
        %2130 = vmatprep.subr.bf16.mxu0 0
        %2131 = vmatpush2.bf16.msra.mxu0 0
        %2132 = vmatprep.subr.bf16.mxu0 0
        %2133 = vmatpush2.bf16.msra.mxu0 0
        %2134 = vmatprep.subr.bf16.mxu0 0
        %2135 = vmatpush2.bf16.msra.mxu0 0
        %2136 = vmatprep.subr.bf16.mxu0 0
        %2137 = vmatpush2.bf16.msra.mxu0 0
        %2138 = vmatprep.subr.bf16.mxu0 0
        %2139 = vmatpush2.bf16.msra.mxu0 0
        %2140 = vmatprep.subr.bf16.mxu0 0
        %2141 = vmatpush2.bf16.msra.mxu0 0
        %2142 = vmatprep.subr.bf16.mxu0 0
        %2143 = vmatpush2.bf16.msra.mxu0 0
        %2144 = vmatprep.subr.bf16.mxu0 0
        %2145 = vmatpush2.bf16.msra.mxu0 0
        %2146 = vmatprep.mubr.bf16.mxu0 0
        %2147 = vmatmul.mubr.bf16.gmra.mxu0 %v2109
        %v2148 = vpop.f32.mrf.mxu0
        %v2149 = vadd.f32 0.0, %v2148
        %v2150 = vpop.f32.mrf.mxu0
        %v2151 = vpop.f32.mrf.mxu0
        %v2152 = vadd.f32 0.0, %v2151
        %v2153 = vpop.f32.mrf.mxu0
        %2154 = vdwg.mxu0
        %v2155 = vadd.f32 %v2056, %v2149
        %v2156 = vadd.f32 %v2057, %v2152
        %v2157 = vld [vmem:[%s141 + $0x8] sm:$0x8]
        %s2158 = scalar_lea.vmem %s0, 616
        %v2159 = vld [vmem:[%s2158] sm:$0xf]
        %v2160 = vld [vmem:[%s2158 + $0x4] sm:$0xf]
        %v2161 = vld [vmem:[%s2158 + $0x8] sm:$0xf]
        %v2162 = vld [vmem:[%s2158 + $0xc] sm:$0xf]
        %v2163 = vld [vmem:[%s2158 + $0x10] sm:$0xf]
        %v2164 = vld [vmem:[%s2158 + $0x14] sm:$0xf]
        %v2165 = vld [vmem:[%s2158 + $0x18] sm:$0xf]
        %v2167 = vunpack.c.l.b16 %v2157
        %v2168 = vpack.c.b16 %v1703, %v2167
        %v2169 = vrot.slane %v2168, 3
        %v2170 = vrot.slane %v2069, 3
        %v2171 = vsel %vm703, %v2169, %v2170
        %v2179 = vunpack.c.l.b16 %v2159
        %v2180 = vunpack.c.l.b16 %v2160
        %v2181 = vunpack.c.l.b16 %v2161
        %v2182 = vunpack.c.l.b16 %v2162
        %v2183 = vunpack.c.l.b16 %v2163
        %v2184 = vunpack.c.l.b16 %v2164
        %v2185 = vunpack.c.l.b16 %v2165
        %v2186 = vpack.c.b16 %v2180, %v2179
        %v2187 = vpack.c.b16 %v2182, %v2181
        %v2188 = vpack.c.b16 %v2184, %v2183
        %v2189 = vpack.c.b16 %v2185, %v2185
        %v2194 = vsel %vm203, %v2171, 0
        %v2197 = vsel %vm207, %v2189, 0
        %2199 = vmatprep.subr.bf16.mxu0 0
        %2200 = vmatpush1.bf16.msra.mxu0 0
        %2201 = vmatprep.subr.bf16.mxu0 0
        %2202 = vmatpush1.bf16.msra.mxu0 0
        %2203 = vmatprep.subr.bf16.mxu0 0
        %2204 = vmatpush1.bf16.msra.mxu0 0
        %2205 = vmatprep.subr.bf16.mxu0 0
        %2206 = vmatpush1.bf16.msra.mxu0 0
        %2207 = vmatprep.subr.bf16.mxu0 0
        %2208 = vmatpush1.bf16.msra.mxu0 %v2197
        %2209 = vmatprep.subr.bf16.mxu0 0
        %2210 = vmatpush1.bf16.msra.mxu0 %v2188
        %2211 = vmatprep.subr.bf16.mxu0 0
        %2212 = vmatpush1.bf16.msra.mxu0 %v2187
        %2213 = vmatprep.subr.bf16.mxu0 0
        %2214 = vmatpush1.bf16.msra.mxu0 %v2186
        %2215 = vmatprep.subr.bf16.mxu0 0
        %2216 = vmatpush2.bf16.msra.mxu0 0
        %2217 = vmatprep.subr.bf16.mxu0 0
        %2218 = vmatpush2.bf16.msra.mxu0 0
        %2219 = vmatprep.subr.bf16.mxu0 0
        %2220 = vmatpush2.bf16.msra.mxu0 0
        %2221 = vmatprep.subr.bf16.mxu0 0
        %2222 = vmatpush2.bf16.msra.mxu0 0
        %2223 = vmatprep.subr.bf16.mxu0 0
        %2224 = vmatpush2.bf16.msra.mxu0 0
        %2225 = vmatprep.subr.bf16.mxu0 0
        %2226 = vmatpush2.bf16.msra.mxu0 0
        %2227 = vmatprep.subr.bf16.mxu0 0
        %2228 = vmatpush2.bf16.msra.mxu0 0
        %2229 = vmatprep.subr.bf16.mxu0 0
        %2230 = vmatpush2.bf16.msra.mxu0 0
        %2231 = vmatprep.mubr.bf16.mxu0 0
        %2232 = vmatmul.mubr.bf16.gmra.mxu0 %v2194
        %v2233 = vpop.f32.mrf.mxu0
        %v2234 = vadd.f32 0.0, %v2233
        %v2235 = vpop.f32.mrf.mxu0
        %v2236 = vpop.f32.mrf.mxu0
        %v2237 = vadd.f32 0.0, %v2236
        %v2238 = vpop.f32.mrf.mxu0
        %2239 = vdwg.mxu0
        %v2240 = vadd.f32 %v2155, %v2234
        %v2241 = vadd.f32 %v2156, %v2237
        %v2242 = vld [vmem:[%s141 + $0x10] sm:$0xf]
        %s2243 = scalar_lea.vmem %s0, 644
        %v2244 = vld [vmem:[%s2243] sm:$0xf]
        %v2245 = vld [vmem:[%s2243 + $0x4] sm:$0xf]
        %v2246 = vld [vmem:[%s2243 + $0x8] sm:$0xf]
        %v2247 = vld [vmem:[%s2243 + $0xc] sm:$0xf]
        %v2248 = vld [vmem:[%s2243 + $0x10] sm:$0xf]
        %v2249 = vld [vmem:[%s2243 + $0x14] sm:$0xf]
        %v2250 = vld [vmem:[%s2243 + $0x18] sm:$0xf]
        %v2252 = vunpack.c.l.b16 %v2242
        %v2253 = vpack.c.b16 %v2252, %v2252
        %v2255 = vshrl.u32 %v2168, 16
        %v2257 = vrot.slane %v2255, 3
        %v2258 = vshll.u32 %v2168, 16
        %v2260 = vrot.slane %v2258, 4
        %v2261 = vor.u32 %v2257, %v2260
        %v2263 = vshrl.u32 %v2253, 16
        %v2265 = vrot.slane %v2263, 3
        %v2266 = vshll.u32 %v2253, 16
        %v2268 = vrot.slane %v2266, 4
        %v2269 = vor.u32 %v2265, %v2268
        %v2270 = vsel %vm789, %v2261, %v2269
        %v2278 = vunpack.c.l.b16 %v2244
        %v2279 = vunpack.c.l.b16 %v2245
        %v2280 = vunpack.c.l.b16 %v2246
        %v2281 = vunpack.c.l.b16 %v2247
        %v2282 = vunpack.c.l.b16 %v2248
        %v2283 = vunpack.c.l.b16 %v2249
        %v2284 = vunpack.c.l.b16 %v2250
        %v2285 = vpack.c.b16 %v2279, %v2278
        %v2286 = vpack.c.b16 %v2281, %v2280
        %v2287 = vpack.c.b16 %v2283, %v2282
        %v2288 = vpack.c.b16 %v2284, %v2284
        %v2293 = vsel %vm203, %v2270, 0
        %v2296 = vsel %vm207, %v2288, 0
        %2298 = vmatprep.subr.bf16.mxu0 0
        %2299 = vmatpush1.bf16.msra.mxu0 0
        %2300 = vmatprep.subr.bf16.mxu0 0
        %2301 = vmatpush1.bf16.msra.mxu0 0
        %2302 = vmatprep.subr.bf16.mxu0 0
        %2303 = vmatpush1.bf16.msra.mxu0 0
        %2304 = vmatprep.subr.bf16.mxu0 0
        %2305 = vmatpush1.bf16.msra.mxu0 0
        %2306 = vmatprep.subr.bf16.mxu0 0
        %2307 = vmatpush1.bf16.msra.mxu0 %v2296
        %2308 = vmatprep.subr.bf16.mxu0 0
        %2309 = vmatpush1.bf16.msra.mxu0 %v2287
        %2310 = vmatprep.subr.bf16.mxu0 0
        %2311 = vmatpush1.bf16.msra.mxu0 %v2286
        %2312 = vmatprep.subr.bf16.mxu0 0
        %2313 = vmatpush1.bf16.msra.mxu0 %v2285
        %2314 = vmatprep.subr.bf16.mxu0 0
        %2315 = vmatpush2.bf16.msra.mxu0 0
        %2316 = vmatprep.subr.bf16.mxu0 0
        %2317 = vmatpush2.bf16.msra.mxu0 0
        %2318 = vmatprep.subr.bf16.mxu0 0
        %2319 = vmatpush2.bf16.msra.mxu0 0
        %2320 = vmatprep.subr.bf16.mxu0 0
        %2321 = vmatpush2.bf16.msra.mxu0 0
        %2322 = vmatprep.subr.bf16.mxu0 0
        %2323 = vmatpush2.bf16.msra.mxu0 0
        %2324 = vmatprep.subr.bf16.mxu0 0
        %2325 = vmatpush2.bf16.msra.mxu0 0
        %2326 = vmatprep.subr.bf16.mxu0 0
        %2327 = vmatpush2.bf16.msra.mxu0 0
        %2328 = vmatprep.subr.bf16.mxu0 0
        %2329 = vmatpush2.bf16.msra.mxu0 0
        %2330 = vmatprep.mubr.bf16.mxu0 0
        %2331 = vmatmul.mubr.bf16.gmra.mxu0 %v2293
        %v2332 = vpop.f32.mrf.mxu0
        %v2333 = vadd.f32 0.0, %v2332
        %v2334 = vpop.f32.mrf.mxu0
        %v2335 = vpop.f32.mrf.mxu0
        %v2336 = vadd.f32 0.0, %v2335
        %v2337 = vpop.f32.mrf.mxu0
        %2338 = vdwg.mxu0
        %v2339 = vadd.f32 %v2240, %v2333
        %v2340 = vadd.f32 %v2241, %v2336
        %s2341 = scalar_lea.vmem %s0, 672
        %v2342 = vld [vmem:[%s2341] sm:$0xf]
        %v2343 = vld [vmem:[%s2341 + $0x4] sm:$0xf]
        %v2344 = vld [vmem:[%s2341 + $0x8] sm:$0xf]
        %v2345 = vld [vmem:[%s2341 + $0xc] sm:$0xf]
        %v2346 = vld [vmem:[%s2341 + $0x10] sm:$0xf]
        %v2347 = vld [vmem:[%s2341 + $0x14] sm:$0xf]
        %v2348 = vld [vmem:[%s2341 + $0x18] sm:$0xf]
        %v2349 = vpack.c.b16 %v2252, %v1703
        %v2357 = vunpack.c.l.b16 %v2342
        %v2358 = vunpack.c.l.b16 %v2343
        %v2359 = vunpack.c.l.b16 %v2344
        %v2360 = vunpack.c.l.b16 %v2345
        %v2361 = vunpack.c.l.b16 %v2346
        %v2362 = vunpack.c.l.b16 %v2347
        %v2363 = vunpack.c.l.b16 %v2348
        %v2364 = vpack.c.b16 %v2358, %v2357
        %v2365 = vpack.c.b16 %v2360, %v2359
        %v2366 = vpack.c.b16 %v2362, %v2361
        %v2367 = vpack.c.b16 %v2363, %v2363
        %v2372 = vsel %vm203, %v2349, 0
        %v2375 = vsel %vm207, %v2367, 0
        %2377 = vmatprep.subr.bf16.mxu0 0
        %2378 = vmatpush1.bf16.msra.mxu0 0
        %2379 = vmatprep.subr.bf16.mxu0 0
        %2380 = vmatpush1.bf16.msra.mxu0 0
        %2381 = vmatprep.subr.bf16.mxu0 0
        %2382 = vmatpush1.bf16.msra.mxu0 0
        %2383 = vmatprep.subr.bf16.mxu0 0
        %2384 = vmatpush1.bf16.msra.mxu0 0
        %2385 = vmatprep.subr.bf16.mxu0 0
        %2386 = vmatpush1.bf16.msra.mxu0 %v2375
        %2387 = vmatprep.subr.bf16.mxu0 0
        %2388 = vmatpush1.bf16.msra.mxu0 %v2366
        %2389 = vmatprep.subr.bf16.mxu0 0
        %2390 = vmatpush1.bf16.msra.mxu0 %v2365
        %2391 = vmatprep.subr.bf16.mxu0 0
        %2392 = vmatpush1.bf16.msra.mxu0 %v2364
        %2393 = vmatprep.subr.bf16.mxu0 0
        %2394 = vmatpush2.bf16.msra.mxu0 0
        %2395 = vmatprep.subr.bf16.mxu0 0
        %2396 = vmatpush2.bf16.msra.mxu0 0
        %2397 = vmatprep.subr.bf16.mxu0 0
        %2398 = vmatpush2.bf16.msra.mxu0 0
        %2399 = vmatprep.subr.bf16.mxu0 0
        %2400 = vmatpush2.bf16.msra.mxu0 0
        %2401 = vmatprep.subr.bf16.mxu0 0
        %2402 = vmatpush2.bf16.msra.mxu0 0
        %2403 = vmatprep.subr.bf16.mxu0 0
        %2404 = vmatpush2.bf16.msra.mxu0 0
        %2405 = vmatprep.subr.bf16.mxu0 0
        %2406 = vmatpush2.bf16.msra.mxu0 0
        %2407 = vmatprep.subr.bf16.mxu0 0
        %2408 = vmatpush2.bf16.msra.mxu0 0
        %2409 = vmatprep.mubr.bf16.mxu0 0
        %2410 = vmatmul.mubr.bf16.gmra.mxu0 %v2372
        %v2411 = vpop.f32.mrf.mxu0
        %v2412 = vadd.f32 0.0, %v2411
        %v2413 = vpop.f32.mrf.mxu0
        %v2414 = vpop.f32.mrf.mxu0
        %v2415 = vadd.f32 0.0, %v2414
        %v2416 = vpop.f32.mrf.mxu0
        %2417 = vdwg.mxu0
        %v2418 = vadd.f32 %v2339, %v2412
        %v2419 = vadd.f32 %v2340, %v2415
        %v2420 = vld [vmem:[%s141 + $0xc] sm:$0xf]
        %v2421 = vld [vmem:[%s141 + $0x10] sm:$0xf]
        %v2422 = vld [vmem:[%s141 + $0x14] sm:$0x1]
        %s2423 = scalar_lea.vmem %s0, 700
        %v2424 = vld [vmem:[%s2423] sm:$0xf]
        %v2425 = vld [vmem:[%s2423 + $0x4] sm:$0xf]
        %v2426 = vld [vmem:[%s2423 + $0x8] sm:$0xf]
        %v2427 = vld [vmem:[%s2423 + $0xc] sm:$0xf]
        %v2428 = vld [vmem:[%s2423 + $0x10] sm:$0xf]
        %v2429 = vld [vmem:[%s2423 + $0x14] sm:$0xf]
        %v2430 = vld [vmem:[%s2423 + $0x18] sm:$0xf]
        %v2434 = vunpack.c.l.b16 %v2420
        %v2435 = vunpack.c.l.b16 %v2421
        %v2436 = vunpack.c.l.b16 %v2422
        %v2437 = vpack.c.b16 %v2435, %v2434
        %v2438 = vpack.c.b16 %v2436, %v2436
        %v2440 = vshrl.u32 %v2437, 16
        %v2442 = vshll.u32 %v2437, 16
        %v2444 = vrot.slane %v2442, 1
        %v2445 = vor.u32 %v2440, %v2444
        %v2447 = vshll.u32 %v2438, 16
        %v2449 = vrot.slane %v2447, 1
        %v2450 = vsel %vm169, %v2445, %v2449
        %v2458 = vunpack.c.l.b16 %v2424
        %v2459 = vunpack.c.l.b16 %v2425
        %v2460 = vunpack.c.l.b16 %v2426
        %v2461 = vunpack.c.l.b16 %v2427
        %v2462 = vunpack.c.l.b16 %v2428
        %v2463 = vunpack.c.l.b16 %v2429
        %v2464 = vunpack.c.l.b16 %v2430
        %v2465 = vpack.c.b16 %v2459, %v2458
        %v2466 = vpack.c.b16 %v2461, %v2460
        %v2467 = vpack.c.b16 %v2463, %v2462
        %v2468 = vpack.c.b16 %v2464, %v2464
        %v2473 = vsel %vm203, %v2450, 0
        %v2476 = vsel %vm207, %v2468, 0
        %2478 = vmatprep.subr.bf16.mxu0 0
        %2479 = vmatpush1.bf16.msra.mxu0 0
        %2480 = vmatprep.subr.bf16.mxu0 0
        %2481 = vmatpush1.bf16.msra.mxu0 0
        %2482 = vmatprep.subr.bf16.mxu0 0
        %2483 = vmatpush1.bf16.msra.mxu0 0
        %2484 = vmatprep.subr.bf16.mxu0 0
        %2485 = vmatpush1.bf16.msra.mxu0 0
        %2486 = vmatprep.subr.bf16.mxu0 0
        %2487 = vmatpush1.bf16.msra.mxu0 %v2476
        %2488 = vmatprep.subr.bf16.mxu0 0
        %2489 = vmatpush1.bf16.msra.mxu0 %v2467
        %2490 = vmatprep.subr.bf16.mxu0 0
        %2491 = vmatpush1.bf16.msra.mxu0 %v2466
        %2492 = vmatprep.subr.bf16.mxu0 0
        %2493 = vmatpush1.bf16.msra.mxu0 %v2465
        %2494 = vmatprep.subr.bf16.mxu0 0
        %2495 = vmatpush2.bf16.msra.mxu0 0
        %2496 = vmatprep.subr.bf16.mxu0 0
        %2497 = vmatpush2.bf16.msra.mxu0 0
        %2498 = vmatprep.subr.bf16.mxu0 0
        %2499 = vmatpush2.bf16.msra.mxu0 0
        %2500 = vmatprep.subr.bf16.mxu0 0
        %2501 = vmatpush2.bf16.msra.mxu0 0
        %2502 = vmatprep.subr.bf16.mxu0 0
        %2503 = vmatpush2.bf16.msra.mxu0 0
        %2504 = vmatprep.subr.bf16.mxu0 0
        %2505 = vmatpush2.bf16.msra.mxu0 0
        %2506 = vmatprep.subr.bf16.mxu0 0
        %2507 = vmatpush2.bf16.msra.mxu0 0
        %2508 = vmatprep.subr.bf16.mxu0 0
        %2509 = vmatpush2.bf16.msra.mxu0 0
        %2510 = vmatprep.mubr.bf16.mxu0 0
        %2511 = vmatmul.mubr.bf16.gmra.mxu0 %v2473
        %v2512 = vpop.f32.mrf.mxu0
        %v2513 = vadd.f32 0.0, %v2512
        %v2514 = vpop.f32.mrf.mxu0
        %v2515 = vpop.f32.mrf.mxu0
        %v2516 = vadd.f32 0.0, %v2515
        %v2517 = vpop.f32.mrf.mxu0
        %2518 = vdwg.mxu0
        %v2519 = vadd.f32 %v2418, %v2513
        %v2520 = vadd.f32 %v2419, %v2516
        %v2521 = vld [vmem:[%s141 + $0xc] sm:$0xe]
        %s2522 = scalar_lea.vmem %s0, 728
        %v2523 = vld [vmem:[%s2522] sm:$0xf]
        %v2524 = vld [vmem:[%s2522 + $0x4] sm:$0xf]
        %v2525 = vld [vmem:[%s2522 + $0x8] sm:$0xf]
        %v2526 = vld [vmem:[%s2522 + $0xc] sm:$0xf]
        %v2527 = vld [vmem:[%s2522 + $0x10] sm:$0xf]
        %v2528 = vld [vmem:[%s2522 + $0x14] sm:$0xf]
        %v2529 = vld [vmem:[%s2522 + $0x18] sm:$0xf]
        %v2531 = vunpack.c.l.b16 %v2521
        %v2532 = vpack.c.b16 %v2435, %v2531
        %v2533 = vrot.slane %v2532, 1
        %v2534 = vrot.slane %v2438, 1
        %v2535 = vsel %vm331, %v2533, %v2534
        %v2543 = vunpack.c.l.b16 %v2523
        %v2544 = vunpack.c.l.b16 %v2524
        %v2545 = vunpack.c.l.b16 %v2525
        %v2546 = vunpack.c.l.b16 %v2526
        %v2547 = vunpack.c.l.b16 %v2527
        %v2548 = vunpack.c.l.b16 %v2528
        %v2549 = vunpack.c.l.b16 %v2529
        %v2550 = vpack.c.b16 %v2544, %v2543
        %v2551 = vpack.c.b16 %v2546, %v2545
        %v2552 = vpack.c.b16 %v2548, %v2547
        %v2553 = vpack.c.b16 %v2549, %v2549
        %v2558 = vsel %vm203, %v2535, 0
        %v2561 = vsel %vm207, %v2553, 0
        %2563 = vmatprep.subr.bf16.mxu0 0
        %2564 = vmatpush1.bf16.msra.mxu0 0
        %2565 = vmatprep.subr.bf16.mxu0 0
        %2566 = vmatpush1.bf16.msra.mxu0 0
        %2567 = vmatprep.subr.bf16.mxu0 0
        %2568 = vmatpush1.bf16.msra.mxu0 0
        %2569 = vmatprep.subr.bf16.mxu0 0
        %2570 = vmatpush1.bf16.msra.mxu0 0
        %2571 = vmatprep.subr.bf16.mxu0 0
        %2572 = vmatpush1.bf16.msra.mxu0 %v2561
        %2573 = vmatprep.subr.bf16.mxu0 0
        %2574 = vmatpush1.bf16.msra.mxu0 %v2552
        %2575 = vmatprep.subr.bf16.mxu0 0
        %2576 = vmatpush1.bf16.msra.mxu0 %v2551
        %2577 = vmatprep.subr.bf16.mxu0 0
        %2578 = vmatpush1.bf16.msra.mxu0 %v2550
        %2579 = vmatprep.subr.bf16.mxu0 0
        %2580 = vmatpush2.bf16.msra.mxu0 0
        %2581 = vmatprep.subr.bf16.mxu0 0
        %2582 = vmatpush2.bf16.msra.mxu0 0
        %2583 = vmatprep.subr.bf16.mxu0 0
        %2584 = vmatpush2.bf16.msra.mxu0 0
        %2585 = vmatprep.subr.bf16.mxu0 0
        %2586 = vmatpush2.bf16.msra.mxu0 0
        %2587 = vmatprep.subr.bf16.mxu0 0
        %2588 = vmatpush2.bf16.msra.mxu0 0
        %2589 = vmatprep.subr.bf16.mxu0 0
        %2590 = vmatpush2.bf16.msra.mxu0 0
        %2591 = vmatprep.subr.bf16.mxu0 0
        %2592 = vmatpush2.bf16.msra.mxu0 0
        %2593 = vmatprep.subr.bf16.mxu0 0
        %2594 = vmatpush2.bf16.msra.mxu0 0
        %2595 = vmatprep.mubr.bf16.mxu0 0
        %2596 = vmatmul.mubr.bf16.gmra.mxu0 %v2558
        %v2597 = vpop.f32.mrf.mxu0
        %v2598 = vadd.f32 0.0, %v2597
        %v2599 = vpop.f32.mrf.mxu0
        %v2600 = vpop.f32.mrf.mxu0
        %v2601 = vadd.f32 0.0, %v2600
        %v2602 = vpop.f32.mrf.mxu0
        %2603 = vdwg.mxu0
        %v2604 = vadd.f32 %v2519, %v2598
        %v2605 = vadd.f32 %v2520, %v2601
        %v2606 = vld [vmem:[%s141 + $0x14] sm:$0x3]
        %s2607 = scalar_lea.vmem %s0, 756
        %v2608 = vld [vmem:[%s2607] sm:$0xf]
        %v2609 = vld [vmem:[%s2607 + $0x4] sm:$0xf]
        %v2610 = vld [vmem:[%s2607 + $0x8] sm:$0xf]
        %v2611 = vld [vmem:[%s2607 + $0xc] sm:$0xf]
        %v2612 = vld [vmem:[%s2607 + $0x10] sm:$0xf]
        %v2613 = vld [vmem:[%s2607 + $0x14] sm:$0xf]
        %v2614 = vld [vmem:[%s2607 + $0x18] sm:$0xf]
        %v2616 = vunpack.c.l.b16 %v2606
        %v2617 = vpack.c.b16 %v2616, %v2616
        %v2619 = vshrl.u32 %v2532, 16
        %v2621 = vrot.slane %v2619, 1
        %v2622 = vshll.u32 %v2532, 16
        %v2624 = vrot.slane %v2622, 2
        %v2625 = vor.u32 %v2621, %v2624
        %v2627 = vshrl.u32 %v2617, 16
        %v2629 = vrot.slane %v2627, 1
        %v2630 = vshll.u32 %v2617, 16
        %v2632 = vrot.slane %v2630, 2
        %v2633 = vor.u32 %v2629, %v2632
        %v2634 = vsel %vm417, %v2625, %v2633
        %v2642 = vunpack.c.l.b16 %v2608
        %v2643 = vunpack.c.l.b16 %v2609
        %v2644 = vunpack.c.l.b16 %v2610
        %v2645 = vunpack.c.l.b16 %v2611
        %v2646 = vunpack.c.l.b16 %v2612
        %v2647 = vunpack.c.l.b16 %v2613
        %v2648 = vunpack.c.l.b16 %v2614
        %v2649 = vpack.c.b16 %v2643, %v2642
        %v2650 = vpack.c.b16 %v2645, %v2644
        %v2651 = vpack.c.b16 %v2647, %v2646
        %v2652 = vpack.c.b16 %v2648, %v2648
        %v2657 = vsel %vm203, %v2634, 0
        %v2660 = vsel %vm207, %v2652, 0
        %2662 = vmatprep.subr.bf16.mxu0 0
        %2663 = vmatpush1.bf16.msra.mxu0 0
        %2664 = vmatprep.subr.bf16.mxu0 0
        %2665 = vmatpush1.bf16.msra.mxu0 0
        %2666 = vmatprep.subr.bf16.mxu0 0
        %2667 = vmatpush1.bf16.msra.mxu0 0
        %2668 = vmatprep.subr.bf16.mxu0 0
        %2669 = vmatpush1.bf16.msra.mxu0 0
        %2670 = vmatprep.subr.bf16.mxu0 0
        %2671 = vmatpush1.bf16.msra.mxu0 %v2660
        %2672 = vmatprep.subr.bf16.mxu0 0
        %2673 = vmatpush1.bf16.msra.mxu0 %v2651
        %2674 = vmatprep.subr.bf16.mxu0 0
        %2675 = vmatpush1.bf16.msra.mxu0 %v2650
        %2676 = vmatprep.subr.bf16.mxu0 0
        %2677 = vmatpush1.bf16.msra.mxu0 %v2649
        %2678 = vmatprep.subr.bf16.mxu0 0
        %2679 = vmatpush2.bf16.msra.mxu0 0
        %2680 = vmatprep.subr.bf16.mxu0 0
        %2681 = vmatpush2.bf16.msra.mxu0 0
        %2682 = vmatprep.subr.bf16.mxu0 0
        %2683 = vmatpush2.bf16.msra.mxu0 0
        %2684 = vmatprep.subr.bf16.mxu0 0
        %2685 = vmatpush2.bf16.msra.mxu0 0
        %2686 = vmatprep.subr.bf16.mxu0 0
        %2687 = vmatpush2.bf16.msra.mxu0 0
        %2688 = vmatprep.subr.bf16.mxu0 0
        %2689 = vmatpush2.bf16.msra.mxu0 0
        %2690 = vmatprep.subr.bf16.mxu0 0
        %2691 = vmatpush2.bf16.msra.mxu0 0
        %2692 = vmatprep.subr.bf16.mxu0 0
        %2693 = vmatpush2.bf16.msra.mxu0 0
        %2694 = vmatprep.mubr.bf16.mxu0 0
        %2695 = vmatmul.mubr.bf16.gmra.mxu0 %v2657
        %v2696 = vpop.f32.mrf.mxu0
        %v2697 = vadd.f32 0.0, %v2696
        %v2698 = vpop.f32.mrf.mxu0
        %v2699 = vpop.f32.mrf.mxu0
        %v2700 = vadd.f32 0.0, %v2699
        %v2701 = vpop.f32.mrf.mxu0
        %2702 = vdwg.mxu0
        %v2703 = vadd.f32 %v2604, %v2697
        %v2704 = vadd.f32 %v2605, %v2700
        %v2705 = vld [vmem:[%s141 + $0xc] sm:$0xc]
        %s2706 = scalar_lea.vmem %s0, 784
        %v2707 = vld [vmem:[%s2706] sm:$0xf]
        %v2708 = vld [vmem:[%s2706 + $0x4] sm:$0xf]
        %v2709 = vld [vmem:[%s2706 + $0x8] sm:$0xf]
        %v2710 = vld [vmem:[%s2706 + $0xc] sm:$0xf]
        %v2711 = vld [vmem:[%s2706 + $0x10] sm:$0xf]
        %v2712 = vld [vmem:[%s2706 + $0x14] sm:$0xf]
        %v2713 = vld [vmem:[%s2706 + $0x18] sm:$0xf]
        %v2715 = vunpack.c.l.b16 %v2705
        %v2716 = vpack.c.b16 %v2435, %v2715
        %v2717 = vrot.slane %v2716, 2
        %v2718 = vrot.slane %v2617, 2
        %v2719 = vsel %vm517, %v2717, %v2718
        %v2727 = vunpack.c.l.b16 %v2707
        %v2728 = vunpack.c.l.b16 %v2708
        %v2729 = vunpack.c.l.b16 %v2709
        %v2730 = vunpack.c.l.b16 %v2710
        %v2731 = vunpack.c.l.b16 %v2711
        %v2732 = vunpack.c.l.b16 %v2712
        %v2733 = vunpack.c.l.b16 %v2713
        %v2734 = vpack.c.b16 %v2728, %v2727
        %v2735 = vpack.c.b16 %v2730, %v2729
        %v2736 = vpack.c.b16 %v2732, %v2731
        %v2737 = vpack.c.b16 %v2733, %v2733
        %v2742 = vsel %vm203, %v2719, 0
        %v2745 = vsel %vm207, %v2737, 0
        %2747 = vmatprep.subr.bf16.mxu0 0
        %2748 = vmatpush1.bf16.msra.mxu0 0
        %2749 = vmatprep.subr.bf16.mxu0 0
        %2750 = vmatpush1.bf16.msra.mxu0 0
        %2751 = vmatprep.subr.bf16.mxu0 0
        %2752 = vmatpush1.bf16.msra.mxu0 0
        %2753 = vmatprep.subr.bf16.mxu0 0
        %2754 = vmatpush1.bf16.msra.mxu0 0
        %2755 = vmatprep.subr.bf16.mxu0 0
        %2756 = vmatpush1.bf16.msra.mxu0 %v2745
        %2757 = vmatprep.subr.bf16.mxu0 0
        %2758 = vmatpush1.bf16.msra.mxu0 %v2736
        %2759 = vmatprep.subr.bf16.mxu0 0
        %2760 = vmatpush1.bf16.msra.mxu0 %v2735
        %2761 = vmatprep.subr.bf16.mxu0 0
        %2762 = vmatpush1.bf16.msra.mxu0 %v2734
        %2763 = vmatprep.subr.bf16.mxu0 0
        %2764 = vmatpush2.bf16.msra.mxu0 0
        %2765 = vmatprep.subr.bf16.mxu0 0
        %2766 = vmatpush2.bf16.msra.mxu0 0
        %2767 = vmatprep.subr.bf16.mxu0 0
        %2768 = vmatpush2.bf16.msra.mxu0 0
        %2769 = vmatprep.subr.bf16.mxu0 0
        %2770 = vmatpush2.bf16.msra.mxu0 0
        %2771 = vmatprep.subr.bf16.mxu0 0
        %2772 = vmatpush2.bf16.msra.mxu0 0
        %2773 = vmatprep.subr.bf16.mxu0 0
        %2774 = vmatpush2.bf16.msra.mxu0 0
        %2775 = vmatprep.subr.bf16.mxu0 0
        %2776 = vmatpush2.bf16.msra.mxu0 0
        %2777 = vmatprep.subr.bf16.mxu0 0
        %2778 = vmatpush2.bf16.msra.mxu0 0
        %2779 = vmatprep.mubr.bf16.mxu0 0
        %2780 = vmatmul.mubr.bf16.gmra.mxu0 %v2742
        %v2781 = vpop.f32.mrf.mxu0
        %v2782 = vadd.f32 0.0, %v2781
        %v2783 = vpop.f32.mrf.mxu0
        %v2784 = vpop.f32.mrf.mxu0
        %v2785 = vadd.f32 0.0, %v2784
        %v2786 = vpop.f32.mrf.mxu0
        %2787 = vdwg.mxu0
        %v2788 = vadd.f32 %v2703, %v2782
        %v2789 = vadd.f32 %v2704, %v2785
        %v2790 = vld [vmem:[%s141 + $0x14] sm:$0x7]
        %s2791 = scalar_lea.vmem %s0, 812
        %v2792 = vld [vmem:[%s2791] sm:$0xf]
        %v2793 = vld [vmem:[%s2791 + $0x4] sm:$0xf]
        %v2794 = vld [vmem:[%s2791 + $0x8] sm:$0xf]
        %v2795 = vld [vmem:[%s2791 + $0xc] sm:$0xf]
        %v2796 = vld [vmem:[%s2791 + $0x10] sm:$0xf]
        %v2797 = vld [vmem:[%s2791 + $0x14] sm:$0xf]
        %v2798 = vld [vmem:[%s2791 + $0x18] sm:$0xf]
        %v2800 = vunpack.c.l.b16 %v2790
        %v2801 = vpack.c.b16 %v2800, %v2800
        %v2803 = vshrl.u32 %v2716, 16
        %v2805 = vrot.slane %v2803, 2
        %v2806 = vshll.u32 %v2716, 16
        %v2808 = vrot.slane %v2806, 3
        %v2809 = vor.u32 %v2805, %v2808
        %v2811 = vshrl.u32 %v2801, 16
        %v2813 = vrot.slane %v2811, 2
        %v2814 = vshll.u32 %v2801, 16
        %v2816 = vrot.slane %v2814, 3
        %v2817 = vor.u32 %v2813, %v2816
        %v2818 = vsel %vm603, %v2809, %v2817
        %v2826 = vunpack.c.l.b16 %v2792
        %v2827 = vunpack.c.l.b16 %v2793
        %v2828 = vunpack.c.l.b16 %v2794
        %v2829 = vunpack.c.l.b16 %v2795
        %v2830 = vunpack.c.l.b16 %v2796
        %v2831 = vunpack.c.l.b16 %v2797
        %v2832 = vunpack.c.l.b16 %v2798
        %v2833 = vpack.c.b16 %v2827, %v2826
        %v2834 = vpack.c.b16 %v2829, %v2828
        %v2835 = vpack.c.b16 %v2831, %v2830
        %v2836 = vpack.c.b16 %v2832, %v2832
        %v2841 = vsel %vm203, %v2818, 0
        %v2844 = vsel %vm207, %v2836, 0
        %2846 = vmatprep.subr.bf16.mxu0 0
        %2847 = vmatpush1.bf16.msra.mxu0 0
        %2848 = vmatprep.subr.bf16.mxu0 0
        %2849 = vmatpush1.bf16.msra.mxu0 0
        %2850 = vmatprep.subr.bf16.mxu0 0
        %2851 = vmatpush1.bf16.msra.mxu0 0
        %2852 = vmatprep.subr.bf16.mxu0 0
        %2853 = vmatpush1.bf16.msra.mxu0 0
        %2854 = vmatprep.subr.bf16.mxu0 0
        %2855 = vmatpush1.bf16.msra.mxu0 %v2844
        %2856 = vmatprep.subr.bf16.mxu0 0
        %2857 = vmatpush1.bf16.msra.mxu0 %v2835
        %2858 = vmatprep.subr.bf16.mxu0 0
        %2859 = vmatpush1.bf16.msra.mxu0 %v2834
        %2860 = vmatprep.subr.bf16.mxu0 0
        %2861 = vmatpush1.bf16.msra.mxu0 %v2833
        %2862 = vmatprep.subr.bf16.mxu0 0
        %2863 = vmatpush2.bf16.msra.mxu0 0
        %2864 = vmatprep.subr.bf16.mxu0 0
        %2865 = vmatpush2.bf16.msra.mxu0 0
        %2866 = vmatprep.subr.bf16.mxu0 0
        %2867 = vmatpush2.bf16.msra.mxu0 0
        %2868 = vmatprep.subr.bf16.mxu0 0
        %2869 = vmatpush2.bf16.msra.mxu0 0
        %2870 = vmatprep.subr.bf16.mxu0 0
        %2871 = vmatpush2.bf16.msra.mxu0 0
        %2872 = vmatprep.subr.bf16.mxu0 0
        %2873 = vmatpush2.bf16.msra.mxu0 0
        %2874 = vmatprep.subr.bf16.mxu0 0
        %2875 = vmatpush2.bf16.msra.mxu0 0
        %2876 = vmatprep.subr.bf16.mxu0 0
        %2877 = vmatpush2.bf16.msra.mxu0 0
        %2878 = vmatprep.mubr.bf16.mxu0 0
        %2879 = vmatmul.mubr.bf16.gmra.mxu0 %v2841
        %v2880 = vpop.f32.mrf.mxu0
        %v2881 = vadd.f32 0.0, %v2880
        %v2882 = vpop.f32.mrf.mxu0
        %v2883 = vpop.f32.mrf.mxu0
        %v2884 = vadd.f32 0.0, %v2883
        %v2885 = vpop.f32.mrf.mxu0
        %2886 = vdwg.mxu0
        %v2887 = vadd.f32 %v2788, %v2881
        %v2888 = vadd.f32 %v2789, %v2884
        %v2889 = vld [vmem:[%s141 + $0xc] sm:$0x8]
        %s2890 = scalar_lea.vmem %s0, 840
        %v2891 = vld [vmem:[%s2890] sm:$0xf]
        %v2892 = vld [vmem:[%s2890 + $0x4] sm:$0xf]
        %v2893 = vld [vmem:[%s2890 + $0x8] sm:$0xf]
        %v2894 = vld [vmem:[%s2890 + $0xc] sm:$0xf]
        %v2895 = vld [vmem:[%s2890 + $0x10] sm:$0xf]
        %v2896 = vld [vmem:[%s2890 + $0x14] sm:$0xf]
        %v2897 = vld [vmem:[%s2890 + $0x18] sm:$0xf]
        %v2899 = vunpack.c.l.b16 %v2889
        %v2900 = vpack.c.b16 %v2435, %v2899
        %v2901 = vrot.slane %v2900, 3
        %v2902 = vrot.slane %v2801, 3
        %v2903 = vsel %vm703, %v2901, %v2902
        %v2911 = vunpack.c.l.b16 %v2891
        %v2912 = vunpack.c.l.b16 %v2892
        %v2913 = vunpack.c.l.b16 %v2893
        %v2914 = vunpack.c.l.b16 %v2894
        %v2915 = vunpack.c.l.b16 %v2895
        %v2916 = vunpack.c.l.b16 %v2896
        %v2917 = vunpack.c.l.b16 %v2897
        %v2918 = vpack.c.b16 %v2912, %v2911
        %v2919 = vpack.c.b16 %v2914, %v2913
        %v2920 = vpack.c.b16 %v2916, %v2915
        %v2921 = vpack.c.b16 %v2917, %v2917
        %v2926 = vsel %vm203, %v2903, 0
        %v2929 = vsel %vm207, %v2921, 0
        %2931 = vmatprep.subr.bf16.mxu0 0
        %2932 = vmatpush1.bf16.msra.mxu0 0
        %2933 = vmatprep.subr.bf16.mxu0 0
        %2934 = vmatpush1.bf16.msra.mxu0 0
        %2935 = vmatprep.subr.bf16.mxu0 0
        %2936 = vmatpush1.bf16.msra.mxu0 0
        %2937 = vmatprep.subr.bf16.mxu0 0
        %2938 = vmatpush1.bf16.msra.mxu0 0
        %2939 = vmatprep.subr.bf16.mxu0 0
        %2940 = vmatpush1.bf16.msra.mxu0 %v2929
        %2941 = vmatprep.subr.bf16.mxu0 0
        %2942 = vmatpush1.bf16.msra.mxu0 %v2920
        %2943 = vmatprep.subr.bf16.mxu0 0
        %2944 = vmatpush1.bf16.msra.mxu0 %v2919
        %2945 = vmatprep.subr.bf16.mxu0 0
        %2946 = vmatpush1.bf16.msra.mxu0 %v2918
        %2947 = vmatprep.subr.bf16.mxu0 0
        %2948 = vmatpush2.bf16.msra.mxu0 0
        %2949 = vmatprep.subr.bf16.mxu0 0
        %2950 = vmatpush2.bf16.msra.mxu0 0
        %2951 = vmatprep.subr.bf16.mxu0 0
        %2952 = vmatpush2.bf16.msra.mxu0 0
        %2953 = vmatprep.subr.bf16.mxu0 0
        %2954 = vmatpush2.bf16.msra.mxu0 0
        %2955 = vmatprep.subr.bf16.mxu0 0
        %2956 = vmatpush2.bf16.msra.mxu0 0
        %2957 = vmatprep.subr.bf16.mxu0 0
        %2958 = vmatpush2.bf16.msra.mxu0 0
        %2959 = vmatprep.subr.bf16.mxu0 0
        %2960 = vmatpush2.bf16.msra.mxu0 0
        %2961 = vmatprep.subr.bf16.mxu0 0
        %2962 = vmatpush2.bf16.msra.mxu0 0
        %2963 = vmatprep.mubr.bf16.mxu0 0
        %2964 = vmatmul.mubr.bf16.gmra.mxu0 %v2926
        %v2965 = vpop.f32.mrf.mxu0
        %v2966 = vadd.f32 0.0, %v2965
        %v2967 = vpop.f32.mrf.mxu0
        %v2968 = vpop.f32.mrf.mxu0
        %v2969 = vadd.f32 0.0, %v2968
        %v2970 = vpop.f32.mrf.mxu0
        %2971 = vdwg.mxu0
        %v2972 = vadd.f32 %v2887, %v2966
        %v2973 = vadd.f32 %v2888, %v2969
        %v2974 = vld [vmem:[%s141 + $0x14] sm:$0xf]
        %s2975 = scalar_lea.vmem %s0, 868
        %v2976 = vld [vmem:[%s2975] sm:$0xf]
        %v2977 = vld [vmem:[%s2975 + $0x4] sm:$0xf]
        %v2978 = vld [vmem:[%s2975 + $0x8] sm:$0xf]
        %v2979 = vld [vmem:[%s2975 + $0xc] sm:$0xf]
        %v2980 = vld [vmem:[%s2975 + $0x10] sm:$0xf]
        %v2981 = vld [vmem:[%s2975 + $0x14] sm:$0xf]
        %v2982 = vld [vmem:[%s2975 + $0x18] sm:$0xf]
        %v2984 = vunpack.c.l.b16 %v2974
        %v2985 = vpack.c.b16 %v2984, %v2984
        %v2987 = vshrl.u32 %v2900, 16
        %v2989 = vrot.slane %v2987, 3
        %v2990 = vshll.u32 %v2900, 16
        %v2992 = vrot.slane %v2990, 4
        %v2993 = vor.u32 %v2989, %v2992
        %v2995 = vshrl.u32 %v2985, 16
        %v2997 = vrot.slane %v2995, 3
        %v2998 = vshll.u32 %v2985, 16
        %v3000 = vrot.slane %v2998, 4
        %v3001 = vor.u32 %v2997, %v3000
        %v3002 = vsel %vm789, %v2993, %v3001
        %v3010 = vunpack.c.l.b16 %v2976
        %v3011 = vunpack.c.l.b16 %v2977
        %v3012 = vunpack.c.l.b16 %v2978
        %v3013 = vunpack.c.l.b16 %v2979
        %v3014 = vunpack.c.l.b16 %v2980
        %v3015 = vunpack.c.l.b16 %v2981
        %v3016 = vunpack.c.l.b16 %v2982
        %v3017 = vpack.c.b16 %v3011, %v3010
        %v3018 = vpack.c.b16 %v3013, %v3012
        %v3019 = vpack.c.b16 %v3015, %v3014
        %v3020 = vpack.c.b16 %v3016, %v3016
        %v3025 = vsel %vm203, %v3002, 0
        %v3028 = vsel %vm207, %v3020, 0
        %3030 = vmatprep.subr.bf16.mxu0 0
        %3031 = vmatpush1.bf16.msra.mxu0 0
        %3032 = vmatprep.subr.bf16.mxu0 0
        %3033 = vmatpush1.bf16.msra.mxu0 0
        %3034 = vmatprep.subr.bf16.mxu0 0
        %3035 = vmatpush1.bf16.msra.mxu0 0
        %3036 = vmatprep.subr.bf16.mxu0 0
        %3037 = vmatpush1.bf16.msra.mxu0 0
        %3038 = vmatprep.subr.bf16.mxu0 0
        %3039 = vmatpush1.bf16.msra.mxu0 %v3028
        %3040 = vmatprep.subr.bf16.mxu0 0
        %3041 = vmatpush1.bf16.msra.mxu0 %v3019
        %3042 = vmatprep.subr.bf16.mxu0 0
        %3043 = vmatpush1.bf16.msra.mxu0 %v3018
        %3044 = vmatprep.subr.bf16.mxu0 0
        %3045 = vmatpush1.bf16.msra.mxu0 %v3017
        %3046 = vmatprep.subr.bf16.mxu0 0
        %3047 = vmatpush2.bf16.msra.mxu0 0
        %3048 = vmatprep.subr.bf16.mxu0 0
        %3049 = vmatpush2.bf16.msra.mxu0 0
        %3050 = vmatprep.subr.bf16.mxu0 0
        %3051 = vmatpush2.bf16.msra.mxu0 0
        %3052 = vmatprep.subr.bf16.mxu0 0
        %3053 = vmatpush2.bf16.msra.mxu0 0
        %3054 = vmatprep.subr.bf16.mxu0 0
        %3055 = vmatpush2.bf16.msra.mxu0 0
        %3056 = vmatprep.subr.bf16.mxu0 0
        %3057 = vmatpush2.bf16.msra.mxu0 0
        %3058 = vmatprep.subr.bf16.mxu0 0
        %3059 = vmatpush2.bf16.msra.mxu0 0
        %3060 = vmatprep.subr.bf16.mxu0 0
        %3061 = vmatpush2.bf16.msra.mxu0 0
        %3062 = vmatprep.mubr.bf16.mxu0 0
        %3063 = vmatmul.mubr.bf16.gmra.mxu0 %v3025
        %v3064 = vpop.f32.mrf.mxu0
        %v3065 = vadd.f32 0.0, %v3064
        %v3066 = vpop.f32.mrf.mxu0
        %v3067 = vpop.f32.mrf.mxu0
        %v3068 = vadd.f32 0.0, %v3067
        %v3069 = vpop.f32.mrf.mxu0
        %3070 = vdwg.mxu0
        %v3071 = vadd.f32 %v2972, %v3065
        %v3072 = vadd.f32 %v2973, %v3068
        %s3073 = scalar_lea.vmem %s0, 896
        %v3074 = vld [vmem:[%s3073] sm:$0xf]
        %v3075 = vld [vmem:[%s3073 + $0x4] sm:$0xf]
        %v3076 = vld [vmem:[%s3073 + $0x8] sm:$0xf]
        %v3077 = vld [vmem:[%s3073 + $0xc] sm:$0xf]
        %v3078 = vld [vmem:[%s3073 + $0x10] sm:$0xf]
        %v3079 = vld [vmem:[%s3073 + $0x14] sm:$0xf]
        %v3080 = vld [vmem:[%s3073 + $0x18] sm:$0xf]
        %v3081 = vpack.c.b16 %v2984, %v2435
        %v3089 = vunpack.c.l.b16 %v3074
        %v3090 = vunpack.c.l.b16 %v3075
        %v3091 = vunpack.c.l.b16 %v3076
        %v3092 = vunpack.c.l.b16 %v3077
        %v3093 = vunpack.c.l.b16 %v3078
        %v3094 = vunpack.c.l.b16 %v3079
        %v3095 = vunpack.c.l.b16 %v3080
        %v3096 = vpack.c.b16 %v3090, %v3089
        %v3097 = vpack.c.b16 %v3092, %v3091
        %v3098 = vpack.c.b16 %v3094, %v3093
        %v3099 = vpack.c.b16 %v3095, %v3095
        %v3104 = vsel %vm203, %v3081, 0
        %v3107 = vsel %vm207, %v3099, 0
        %3109 = vmatprep.subr.bf16.mxu0 0
        %3110 = vmatpush1.bf16.msra.mxu0 0
        %3111 = vmatprep.subr.bf16.mxu0 0
        %3112 = vmatpush1.bf16.msra.mxu0 0
        %3113 = vmatprep.subr.bf16.mxu0 0
        %3114 = vmatpush1.bf16.msra.mxu0 0
        %3115 = vmatprep.subr.bf16.mxu0 0
        %3116 = vmatpush1.bf16.msra.mxu0 0
        %3117 = vmatprep.subr.bf16.mxu0 0
        %3118 = vmatpush1.bf16.msra.mxu0 %v3107
        %3119 = vmatprep.subr.bf16.mxu0 0
        %3120 = vmatpush1.bf16.msra.mxu0 %v3098
        %3121 = vmatprep.subr.bf16.mxu0 0
        %3122 = vmatpush1.bf16.msra.mxu0 %v3097
        %3123 = vmatprep.subr.bf16.mxu0 0
        %3124 = vmatpush1.bf16.msra.mxu0 %v3096
        %3125 = vmatprep.subr.bf16.mxu0 0
        %3126 = vmatpush2.bf16.msra.mxu0 0
        %3127 = vmatprep.subr.bf16.mxu0 0
        %3128 = vmatpush2.bf16.msra.mxu0 0
        %3129 = vmatprep.subr.bf16.mxu0 0
        %3130 = vmatpush2.bf16.msra.mxu0 0
        %3131 = vmatprep.subr.bf16.mxu0 0
        %3132 = vmatpush2.bf16.msra.mxu0 0
        %3133 = vmatprep.subr.bf16.mxu0 0
        %3134 = vmatpush2.bf16.msra.mxu0 0
        %3135 = vmatprep.subr.bf16.mxu0 0
        %3136 = vmatpush2.bf16.msra.mxu0 0
        %3137 = vmatprep.subr.bf16.mxu0 0
        %3138 = vmatpush2.bf16.msra.mxu0 0
        %3139 = vmatprep.subr.bf16.mxu0 0
        %3140 = vmatpush2.bf16.msra.mxu0 0
        %3141 = vmatprep.mubr.bf16.mxu0 0
        %3142 = vmatmul.mubr.bf16.gmra.mxu0 %v3104
        %v3143 = vpop.f32.mrf.mxu0
        %v3144 = vadd.f32 0.0, %v3143
        %v3145 = vpop.f32.mrf.mxu0
        %v3146 = vpop.f32.mrf.mxu0
        %v3147 = vadd.f32 0.0, %v3146
        %v3148 = vpop.f32.mrf.mxu0
        %3149 = vdwg.mxu0
        %v3150 = vadd.f32 %v3071, %v3144
        %v3151 = vadd.f32 %v3072, %v3147
        %v3152 = vld [vmem:[%s141 + $0x10] sm:$0xf]
        %v3153 = vld [vmem:[%s141 + $0x14] sm:$0xf]
        %v3154 = vld [vmem:[%s141 + $0x18] sm:$0x1]
        %s3155 = scalar_lea.vmem %s0, 924
        %v3156 = vld [vmem:[%s3155] sm:$0xf]
        %v3157 = vld [vmem:[%s3155 + $0x4] sm:$0xf]
        %v3158 = vld [vmem:[%s3155 + $0x8] sm:$0xf]
        %v3159 = vld [vmem:[%s3155 + $0xc] sm:$0xf]
        %v3160 = vld [vmem:[%s3155 + $0x10] sm:$0xf]
        %v3161 = vld [vmem:[%s3155 + $0x14] sm:$0xf]
        %v3162 = vld [vmem:[%s3155 + $0x18] sm:$0xf]
        %v3166 = vunpack.c.l.b16 %v3152
        %v3167 = vunpack.c.l.b16 %v3153
        %v3168 = vunpack.c.l.b16 %v3154
        %v3169 = vpack.c.b16 %v3167, %v3166
        %v3170 = vpack.c.b16 %v3168, %v3168
        %v3172 = vshrl.u32 %v3169, 16
        %v3174 = vshll.u32 %v3169, 16
        %v3176 = vrot.slane %v3174, 1
        %v3177 = vor.u32 %v3172, %v3176
        %v3179 = vshll.u32 %v3170, 16
        %v3181 = vrot.slane %v3179, 1
        %v3182 = vsel %vm169, %v3177, %v3181
        %v3190 = vunpack.c.l.b16 %v3156
        %v3191 = vunpack.c.l.b16 %v3157
        %v3192 = vunpack.c.l.b16 %v3158
        %v3193 = vunpack.c.l.b16 %v3159
        %v3194 = vunpack.c.l.b16 %v3160
        %v3195 = vunpack.c.l.b16 %v3161
        %v3196 = vunpack.c.l.b16 %v3162
        %v3197 = vpack.c.b16 %v3191, %v3190
        %v3198 = vpack.c.b16 %v3193, %v3192
        %v3199 = vpack.c.b16 %v3195, %v3194
        %v3200 = vpack.c.b16 %v3196, %v3196
        %v3205 = vsel %vm203, %v3182, 0
        %v3208 = vsel %vm207, %v3200, 0
        %3210 = vmatprep.subr.bf16.mxu0 0
        %3211 = vmatpush1.bf16.msra.mxu0 0
        %3212 = vmatprep.subr.bf16.mxu0 0
        %3213 = vmatpush1.bf16.msra.mxu0 0
        %3214 = vmatprep.subr.bf16.mxu0 0
        %3215 = vmatpush1.bf16.msra.mxu0 0
        %3216 = vmatprep.subr.bf16.mxu0 0
        %3217 = vmatpush1.bf16.msra.mxu0 0
        %3218 = vmatprep.subr.bf16.mxu0 0
        %3219 = vmatpush1.bf16.msra.mxu0 %v3208
        %3220 = vmatprep.subr.bf16.mxu0 0
        %3221 = vmatpush1.bf16.msra.mxu0 %v3199
        %3222 = vmatprep.subr.bf16.mxu0 0
        %3223 = vmatpush1.bf16.msra.mxu0 %v3198
        %3224 = vmatprep.subr.bf16.mxu0 0
        %3225 = vmatpush1.bf16.msra.mxu0 %v3197
        %3226 = vmatprep.subr.bf16.mxu0 0
        %3227 = vmatpush2.bf16.msra.mxu0 0
        %3228 = vmatprep.subr.bf16.mxu0 0
        %3229 = vmatpush2.bf16.msra.mxu0 0
        %3230 = vmatprep.subr.bf16.mxu0 0
        %3231 = vmatpush2.bf16.msra.mxu0 0
        %3232 = vmatprep.subr.bf16.mxu0 0
        %3233 = vmatpush2.bf16.msra.mxu0 0
        %3234 = vmatprep.subr.bf16.mxu0 0
        %3235 = vmatpush2.bf16.msra.mxu0 0
        %3236 = vmatprep.subr.bf16.mxu0 0
        %3237 = vmatpush2.bf16.msra.mxu0 0
        %3238 = vmatprep.subr.bf16.mxu0 0
        %3239 = vmatpush2.bf16.msra.mxu0 0
        %3240 = vmatprep.subr.bf16.mxu0 0
        %3241 = vmatpush2.bf16.msra.mxu0 0
        %3242 = vmatprep.mubr.bf16.mxu0 0
        %3243 = vmatmul.mubr.bf16.gmra.mxu0 %v3205
        %v3244 = vpop.f32.mrf.mxu0
        %v3245 = vadd.f32 0.0, %v3244
        %v3246 = vpop.f32.mrf.mxu0
        %v3247 = vpop.f32.mrf.mxu0
        %v3248 = vadd.f32 0.0, %v3247
        %v3249 = vpop.f32.mrf.mxu0
        %3250 = vdwg.mxu0
        %v3251 = vadd.f32 %v3150, %v3245
        %v3252 = vadd.f32 %v3151, %v3248
        %v3253 = vld [vmem:[%s141 + $0x10] sm:$0xe]
        %s3254 = scalar_lea.vmem %s0, 952
        %v3255 = vld [vmem:[%s3254] sm:$0xf]
        %v3256 = vld [vmem:[%s3254 + $0x4] sm:$0xf]
        %v3257 = vld [vmem:[%s3254 + $0x8] sm:$0xf]
        %v3258 = vld [vmem:[%s3254 + $0xc] sm:$0xf]
        %v3259 = vld [vmem:[%s3254 + $0x10] sm:$0xf]
        %v3260 = vld [vmem:[%s3254 + $0x14] sm:$0xf]
        %v3261 = vld [vmem:[%s3254 + $0x18] sm:$0xf]
        %v3263 = vunpack.c.l.b16 %v3253
        %v3264 = vpack.c.b16 %v3167, %v3263
        %v3265 = vrot.slane %v3264, 1
        %v3266 = vrot.slane %v3170, 1
        %v3267 = vsel %vm331, %v3265, %v3266
        %v3275 = vunpack.c.l.b16 %v3255
        %v3276 = vunpack.c.l.b16 %v3256
        %v3277 = vunpack.c.l.b16 %v3257
        %v3278 = vunpack.c.l.b16 %v3258
        %v3279 = vunpack.c.l.b16 %v3259
        %v3280 = vunpack.c.l.b16 %v3260
        %v3281 = vunpack.c.l.b16 %v3261
        %v3282 = vpack.c.b16 %v3276, %v3275
        %v3283 = vpack.c.b16 %v3278, %v3277
        %v3284 = vpack.c.b16 %v3280, %v3279
        %v3285 = vpack.c.b16 %v3281, %v3281
        %v3290 = vsel %vm203, %v3267, 0
        %v3293 = vsel %vm207, %v3285, 0
        %3295 = vmatprep.subr.bf16.mxu0 0
        %3296 = vmatpush1.bf16.msra.mxu0 0
        %3297 = vmatprep.subr.bf16.mxu0 0
        %3298 = vmatpush1.bf16.msra.mxu0 0
        %3299 = vmatprep.subr.bf16.mxu0 0
        %3300 = vmatpush1.bf16.msra.mxu0 0
        %3301 = vmatprep.subr.bf16.mxu0 0
        %3302 = vmatpush1.bf16.msra.mxu0 0
        %3303 = vmatprep.subr.bf16.mxu0 0
        %3304 = vmatpush1.bf16.msra.mxu0 %v3293
        %3305 = vmatprep.subr.bf16.mxu0 0
        %3306 = vmatpush1.bf16.msra.mxu0 %v3284
        %3307 = vmatprep.subr.bf16.mxu0 0
        %3308 = vmatpush1.bf16.msra.mxu0 %v3283
        %3309 = vmatprep.subr.bf16.mxu0 0
        %3310 = vmatpush1.bf16.msra.mxu0 %v3282
        %3311 = vmatprep.subr.bf16.mxu0 0
        %3312 = vmatpush2.bf16.msra.mxu0 0
        %3313 = vmatprep.subr.bf16.mxu0 0
        %3314 = vmatpush2.bf16.msra.mxu0 0
        %3315 = vmatprep.subr.bf16.mxu0 0
        %3316 = vmatpush2.bf16.msra.mxu0 0
        %3317 = vmatprep.subr.bf16.mxu0 0
        %3318 = vmatpush2.bf16.msra.mxu0 0
        %3319 = vmatprep.subr.bf16.mxu0 0
        %3320 = vmatpush2.bf16.msra.mxu0 0
        %3321 = vmatprep.subr.bf16.mxu0 0
        %3322 = vmatpush2.bf16.msra.mxu0 0
        %3323 = vmatprep.subr.bf16.mxu0 0
        %3324 = vmatpush2.bf16.msra.mxu0 0
        %3325 = vmatprep.subr.bf16.mxu0 0
        %3326 = vmatpush2.bf16.msra.mxu0 0
        %3327 = vmatprep.mubr.bf16.mxu0 0
        %3328 = vmatmul.mubr.bf16.gmra.mxu0 %v3290
        %v3329 = vpop.f32.mrf.mxu0
        %v3330 = vadd.f32 0.0, %v3329
        %v3331 = vpop.f32.mrf.mxu0
        %v3332 = vpop.f32.mrf.mxu0
        %v3333 = vadd.f32 0.0, %v3332
        %v3334 = vpop.f32.mrf.mxu0
        %3335 = vdwg.mxu0
        %v3336 = vadd.f32 %v3251, %v3330
        %v3337 = vadd.f32 %v3252, %v3333
        %v3338 = vld [vmem:[%s141 + $0x18] sm:$0x3]
        %s3339 = scalar_lea.vmem %s0, 980
        %v3340 = vld [vmem:[%s3339] sm:$0xf]
        %v3341 = vld [vmem:[%s3339 + $0x4] sm:$0xf]
        %v3342 = vld [vmem:[%s3339 + $0x8] sm:$0xf]
        %v3343 = vld [vmem:[%s3339 + $0xc] sm:$0xf]
        %v3344 = vld [vmem:[%s3339 + $0x10] sm:$0xf]
        %v3345 = vld [vmem:[%s3339 + $0x14] sm:$0xf]
        %v3346 = vld [vmem:[%s3339 + $0x18] sm:$0xf]
        %v3348 = vunpack.c.l.b16 %v3338
        %v3349 = vpack.c.b16 %v3348, %v3348
        %v3351 = vshrl.u32 %v3264, 16
        %v3353 = vrot.slane %v3351, 1
        %v3354 = vshll.u32 %v3264, 16
        %v3356 = vrot.slane %v3354, 2
        %v3357 = vor.u32 %v3353, %v3356
        %v3359 = vshrl.u32 %v3349, 16
        %v3361 = vrot.slane %v3359, 1
        %v3362 = vshll.u32 %v3349, 16
        %v3364 = vrot.slane %v3362, 2
        %v3365 = vor.u32 %v3361, %v3364
        %v3366 = vsel %vm417, %v3357, %v3365
        %v3374 = vunpack.c.l.b16 %v3340
        %v3375 = vunpack.c.l.b16 %v3341
        %v3376 = vunpack.c.l.b16 %v3342
        %v3377 = vunpack.c.l.b16 %v3343
        %v3378 = vunpack.c.l.b16 %v3344
        %v3379 = vunpack.c.l.b16 %v3345
        %v3380 = vunpack.c.l.b16 %v3346
        %v3381 = vpack.c.b16 %v3375, %v3374
        %v3382 = vpack.c.b16 %v3377, %v3376
        %v3383 = vpack.c.b16 %v3379, %v3378
        %v3384 = vpack.c.b16 %v3380, %v3380
        %v3389 = vsel %vm203, %v3366, 0
        %v3392 = vsel %vm207, %v3384, 0
        %3394 = vmatprep.subr.bf16.mxu0 0
        %3395 = vmatpush1.bf16.msra.mxu0 0
        %3396 = vmatprep.subr.bf16.mxu0 0
        %3397 = vmatpush1.bf16.msra.mxu0 0
        %3398 = vmatprep.subr.bf16.mxu0 0
        %3399 = vmatpush1.bf16.msra.mxu0 0
        %3400 = vmatprep.subr.bf16.mxu0 0
        %3401 = vmatpush1.bf16.msra.mxu0 0
        %3402 = vmatprep.subr.bf16.mxu0 0
        %3403 = vmatpush1.bf16.msra.mxu0 %v3392
        %3404 = vmatprep.subr.bf16.mxu0 0
        %3405 = vmatpush1.bf16.msra.mxu0 %v3383
        %3406 = vmatprep.subr.bf16.mxu0 0
        %3407 = vmatpush1.bf16.msra.mxu0 %v3382
        %3408 = vmatprep.subr.bf16.mxu0 0
        %3409 = vmatpush1.bf16.msra.mxu0 %v3381
        %3410 = vmatprep.subr.bf16.mxu0 0
        %3411 = vmatpush2.bf16.msra.mxu0 0
        %3412 = vmatprep.subr.bf16.mxu0 0
        %3413 = vmatpush2.bf16.msra.mxu0 0
        %3414 = vmatprep.subr.bf16.mxu0 0
        %3415 = vmatpush2.bf16.msra.mxu0 0
        %3416 = vmatprep.subr.bf16.mxu0 0
        %3417 = vmatpush2.bf16.msra.mxu0 0
        %3418 = vmatprep.subr.bf16.mxu0 0
        %3419 = vmatpush2.bf16.msra.mxu0 0
        %3420 = vmatprep.subr.bf16.mxu0 0
        %3421 = vmatpush2.bf16.msra.mxu0 0
        %3422 = vmatprep.subr.bf16.mxu0 0
        %3423 = vmatpush2.bf16.msra.mxu0 0
        %3424 = vmatprep.subr.bf16.mxu0 0
        %3425 = vmatpush2.bf16.msra.mxu0 0
        %3426 = vmatprep.mubr.bf16.mxu0 0
        %3427 = vmatmul.mubr.bf16.gmra.mxu0 %v3389
        %v3428 = vpop.f32.mrf.mxu0
        %v3429 = vadd.f32 0.0, %v3428
        %v3430 = vpop.f32.mrf.mxu0
        %v3431 = vpop.f32.mrf.mxu0
        %v3432 = vadd.f32 0.0, %v3431
        %v3433 = vpop.f32.mrf.mxu0
        %3434 = vdwg.mxu0
        %v3435 = vadd.f32 %v3336, %v3429
        %v3436 = vadd.f32 %v3337, %v3432
        %v3437 = vld [vmem:[%s141 + $0x10] sm:$0xc]
        %s3438 = scalar_lea.vmem %s0, 1008
        %v3439 = vld [vmem:[%s3438] sm:$0xf]
        %v3440 = vld [vmem:[%s3438 + $0x4] sm:$0xf]
        %v3441 = vld [vmem:[%s3438 + $0x8] sm:$0xf]
        %v3442 = vld [vmem:[%s3438 + $0xc] sm:$0xf]
        %v3443 = vld [vmem:[%s3438 + $0x10] sm:$0xf]
        %v3444 = vld [vmem:[%s3438 + $0x14] sm:$0xf]
        %v3445 = vld [vmem:[%s3438 + $0x18] sm:$0xf]
        %v3447 = vunpack.c.l.b16 %v3437
        %v3448 = vpack.c.b16 %v3167, %v3447
        %v3449 = vrot.slane %v3448, 2
        %v3450 = vrot.slane %v3349, 2
        %v3451 = vsel %vm517, %v3449, %v3450
        %v3459 = vunpack.c.l.b16 %v3439
        %v3460 = vunpack.c.l.b16 %v3440
        %v3461 = vunpack.c.l.b16 %v3441
        %v3462 = vunpack.c.l.b16 %v3442
        %v3463 = vunpack.c.l.b16 %v3443
        %v3464 = vunpack.c.l.b16 %v3444
        %v3465 = vunpack.c.l.b16 %v3445
        %v3466 = vpack.c.b16 %v3460, %v3459
        %v3467 = vpack.c.b16 %v3462, %v3461
        %v3468 = vpack.c.b16 %v3464, %v3463
        %v3469 = vpack.c.b16 %v3465, %v3465
        %v3474 = vsel %vm203, %v3451, 0
        %v3477 = vsel %vm207, %v3469, 0
        %3479 = vmatprep.subr.bf16.mxu0 0
        %3480 = vmatpush1.bf16.msra.mxu0 0
        %3481 = vmatprep.subr.bf16.mxu0 0
        %3482 = vmatpush1.bf16.msra.mxu0 0
        %3483 = vmatprep.subr.bf16.mxu0 0
        %3484 = vmatpush1.bf16.msra.mxu0 0
        %3485 = vmatprep.subr.bf16.mxu0 0
        %3486 = vmatpush1.bf16.msra.mxu0 0
        %3487 = vmatprep.subr.bf16.mxu0 0
        %3488 = vmatpush1.bf16.msra.mxu0 %v3477
        %3489 = vmatprep.subr.bf16.mxu0 0
        %3490 = vmatpush1.bf16.msra.mxu0 %v3468
        %3491 = vmatprep.subr.bf16.mxu0 0
        %3492 = vmatpush1.bf16.msra.mxu0 %v3467
        %3493 = vmatprep.subr.bf16.mxu0 0
        %3494 = vmatpush1.bf16.msra.mxu0 %v3466
        %3495 = vmatprep.subr.bf16.mxu0 0
        %3496 = vmatpush2.bf16.msra.mxu0 0
        %3497 = vmatprep.subr.bf16.mxu0 0
        %3498 = vmatpush2.bf16.msra.mxu0 0
        %3499 = vmatprep.subr.bf16.mxu0 0
        %3500 = vmatpush2.bf16.msra.mxu0 0
        %3501 = vmatprep.subr.bf16.mxu0 0
        %3502 = vmatpush2.bf16.msra.mxu0 0
        %3503 = vmatprep.subr.bf16.mxu0 0
        %3504 = vmatpush2.bf16.msra.mxu0 0
        %3505 = vmatprep.subr.bf16.mxu0 0
        %3506 = vmatpush2.bf16.msra.mxu0 0
        %3507 = vmatprep.subr.bf16.mxu0 0
        %3508 = vmatpush2.bf16.msra.mxu0 0
        %3509 = vmatprep.subr.bf16.mxu0 0
        %3510 = vmatpush2.bf16.msra.mxu0 0
        %3511 = vmatprep.mubr.bf16.mxu0 0
        %3512 = vmatmul.mubr.bf16.gmra.mxu0 %v3474
        %v3513 = vpop.f32.mrf.mxu0
        %v3514 = vadd.f32 0.0, %v3513
        %v3515 = vpop.f32.mrf.mxu0
        %v3516 = vpop.f32.mrf.mxu0
        %v3517 = vadd.f32 0.0, %v3516
        %v3518 = vpop.f32.mrf.mxu0
        %3519 = vdwg.mxu0
        %v3520 = vadd.f32 %v3435, %v3514
        %v3521 = vadd.f32 %v3436, %v3517
        %v3522 = vld [vmem:[%s141 + $0x18] sm:$0x7]
        %s3523 = scalar_lea.vmem %s0, 1036
        %v3524 = vld [vmem:[%s3523] sm:$0xf]
        %v3525 = vld [vmem:[%s3523 + $0x4] sm:$0xf]
        %v3526 = vld [vmem:[%s3523 + $0x8] sm:$0xf]
        %v3527 = vld [vmem:[%s3523 + $0xc] sm:$0xf]
        %v3528 = vld [vmem:[%s3523 + $0x10] sm:$0xf]
        %v3529 = vld [vmem:[%s3523 + $0x14] sm:$0xf]
        %v3530 = vld [vmem:[%s3523 + $0x18] sm:$0xf]
        %v3532 = vunpack.c.l.b16 %v3522
        %v3533 = vpack.c.b16 %v3532, %v3532
        %v3535 = vshrl.u32 %v3448, 16
        %v3537 = vrot.slane %v3535, 2
        %v3538 = vshll.u32 %v3448, 16
        %v3540 = vrot.slane %v3538, 3
        %v3541 = vor.u32 %v3537, %v3540
        %v3543 = vshrl.u32 %v3533, 16
        %v3545 = vrot.slane %v3543, 2
        %v3546 = vshll.u32 %v3533, 16
        %v3548 = vrot.slane %v3546, 3
        %v3549 = vor.u32 %v3545, %v3548
        %v3550 = vsel %vm603, %v3541, %v3549
        %v3558 = vunpack.c.l.b16 %v3524
        %v3559 = vunpack.c.l.b16 %v3525
        %v3560 = vunpack.c.l.b16 %v3526
        %v3561 = vunpack.c.l.b16 %v3527
        %v3562 = vunpack.c.l.b16 %v3528
        %v3563 = vunpack.c.l.b16 %v3529
        %v3564 = vunpack.c.l.b16 %v3530
        %v3565 = vpack.c.b16 %v3559, %v3558
        %v3566 = vpack.c.b16 %v3561, %v3560
        %v3567 = vpack.c.b16 %v3563, %v3562
        %v3568 = vpack.c.b16 %v3564, %v3564
        %v3573 = vsel %vm203, %v3550, 0
        %v3576 = vsel %vm207, %v3568, 0
        %3578 = vmatprep.subr.bf16.mxu0 0
        %3579 = vmatpush1.bf16.msra.mxu0 0
        %3580 = vmatprep.subr.bf16.mxu0 0
        %3581 = vmatpush1.bf16.msra.mxu0 0
        %3582 = vmatprep.subr.bf16.mxu0 0
        %3583 = vmatpush1.bf16.msra.mxu0 0
        %3584 = vmatprep.subr.bf16.mxu0 0
        %3585 = vmatpush1.bf16.msra.mxu0 0
        %3586 = vmatprep.subr.bf16.mxu0 0
        %3587 = vmatpush1.bf16.msra.mxu0 %v3576
        %3588 = vmatprep.subr.bf16.mxu0 0
        %3589 = vmatpush1.bf16.msra.mxu0 %v3567
        %3590 = vmatprep.subr.bf16.mxu0 0
        %3591 = vmatpush1.bf16.msra.mxu0 %v3566
        %3592 = vmatprep.subr.bf16.mxu0 0
        %3593 = vmatpush1.bf16.msra.mxu0 %v3565
        %3594 = vmatprep.subr.bf16.mxu0 0
        %3595 = vmatpush2.bf16.msra.mxu0 0
        %3596 = vmatprep.subr.bf16.mxu0 0
        %3597 = vmatpush2.bf16.msra.mxu0 0
        %3598 = vmatprep.subr.bf16.mxu0 0
        %3599 = vmatpush2.bf16.msra.mxu0 0
        %3600 = vmatprep.subr.bf16.mxu0 0
        %3601 = vmatpush2.bf16.msra.mxu0 0
        %3602 = vmatprep.subr.bf16.mxu0 0
        %3603 = vmatpush2.bf16.msra.mxu0 0
        %3604 = vmatprep.subr.bf16.mxu0 0
        %3605 = vmatpush2.bf16.msra.mxu0 0
        %3606 = vmatprep.subr.bf16.mxu0 0
        %3607 = vmatpush2.bf16.msra.mxu0 0
        %3608 = vmatprep.subr.bf16.mxu0 0
        %3609 = vmatpush2.bf16.msra.mxu0 0
        %3610 = vmatprep.mubr.bf16.mxu0 0
        %3611 = vmatmul.mubr.bf16.gmra.mxu0 %v3573
        %v3612 = vpop.f32.mrf.mxu0
        %v3613 = vadd.f32 0.0, %v3612
        %v3614 = vpop.f32.mrf.mxu0
        %v3615 = vpop.f32.mrf.mxu0
        %v3616 = vadd.f32 0.0, %v3615
        %v3617 = vpop.f32.mrf.mxu0
        %3618 = vdwg.mxu0
        %v3619 = vadd.f32 %v3520, %v3613
        %v3620 = vadd.f32 %v3521, %v3616
        %v3621 = vld [vmem:[%s141 + $0x10] sm:$0x8]
        %s3622 = scalar_lea.vmem %s0, 1064
        %v3623 = vld [vmem:[%s3622] sm:$0xf]
        %v3624 = vld [vmem:[%s3622 + $0x4] sm:$0xf]
        %v3625 = vld [vmem:[%s3622 + $0x8] sm:$0xf]
        %v3626 = vld [vmem:[%s3622 + $0xc] sm:$0xf]
        %v3627 = vld [vmem:[%s3622 + $0x10] sm:$0xf]
        %v3628 = vld [vmem:[%s3622 + $0x14] sm:$0xf]
        %v3629 = vld [vmem:[%s3622 + $0x18] sm:$0xf]
        %v3631 = vunpack.c.l.b16 %v3621
        %v3632 = vpack.c.b16 %v3167, %v3631
        %v3633 = vrot.slane %v3632, 3
        %v3634 = vrot.slane %v3533, 3
        %v3635 = vsel %vm703, %v3633, %v3634
        %v3643 = vunpack.c.l.b16 %v3623
        %v3644 = vunpack.c.l.b16 %v3624
        %v3645 = vunpack.c.l.b16 %v3625
        %v3646 = vunpack.c.l.b16 %v3626
        %v3647 = vunpack.c.l.b16 %v3627
        %v3648 = vunpack.c.l.b16 %v3628
        %v3649 = vunpack.c.l.b16 %v3629
        %v3650 = vpack.c.b16 %v3644, %v3643
        %v3651 = vpack.c.b16 %v3646, %v3645
        %v3652 = vpack.c.b16 %v3648, %v3647
        %v3653 = vpack.c.b16 %v3649, %v3649
        %v3658 = vsel %vm203, %v3635, 0
        %v3661 = vsel %vm207, %v3653, 0
        %3663 = vmatprep.subr.bf16.mxu0 0
        %3664 = vmatpush1.bf16.msra.mxu0 0
        %3665 = vmatprep.subr.bf16.mxu0 0
        %3666 = vmatpush1.bf16.msra.mxu0 0
        %3667 = vmatprep.subr.bf16.mxu0 0
        %3668 = vmatpush1.bf16.msra.mxu0 0
        %3669 = vmatprep.subr.bf16.mxu0 0
        %3670 = vmatpush1.bf16.msra.mxu0 0
        %3671 = vmatprep.subr.bf16.mxu0 0
        %3672 = vmatpush1.bf16.msra.mxu0 %v3661
        %3673 = vmatprep.subr.bf16.mxu0 0
        %3674 = vmatpush1.bf16.msra.mxu0 %v3652
        %3675 = vmatprep.subr.bf16.mxu0 0
        %3676 = vmatpush1.bf16.msra.mxu0 %v3651
        %3677 = vmatprep.subr.bf16.mxu0 0
        %3678 = vmatpush1.bf16.msra.mxu0 %v3650
        %3679 = vmatprep.subr.bf16.mxu0 0
        %3680 = vmatpush2.bf16.msra.mxu0 0
        %3681 = vmatprep.subr.bf16.mxu0 0
        %3682 = vmatpush2.bf16.msra.mxu0 0
        %3683 = vmatprep.subr.bf16.mxu0 0
        %3684 = vmatpush2.bf16.msra.mxu0 0
        %3685 = vmatprep.subr.bf16.mxu0 0
        %3686 = vmatpush2.bf16.msra.mxu0 0
        %3687 = vmatprep.subr.bf16.mxu0 0
        %3688 = vmatpush2.bf16.msra.mxu0 0
        %3689 = vmatprep.subr.bf16.mxu0 0
        %3690 = vmatpush2.bf16.msra.mxu0 0
        %3691 = vmatprep.subr.bf16.mxu0 0
        %3692 = vmatpush2.bf16.msra.mxu0 0
        %3693 = vmatprep.subr.bf16.mxu0 0
        %3694 = vmatpush2.bf16.msra.mxu0 0
        %3695 = vmatprep.mubr.bf16.mxu0 0
        %3696 = vmatmul.mubr.bf16.gmra.mxu0 %v3658
        %v3697 = vpop.f32.mrf.mxu0
        %v3698 = vadd.f32 0.0, %v3697
        %v3699 = vpop.f32.mrf.mxu0
        %v3700 = vpop.f32.mrf.mxu0
        %v3701 = vadd.f32 0.0, %v3700
        %v3702 = vpop.f32.mrf.mxu0
        %3703 = vdwg.mxu0
        %v3704 = vadd.f32 %v3619, %v3698
        %v3705 = vadd.f32 %v3620, %v3701
        %v3706 = vld [vmem:[%s141 + $0x18] sm:$0xf]
        %s3707 = scalar_lea.vmem %s0, 1092
        %v3708 = vld [vmem:[%s3707] sm:$0xf]
        %v3709 = vld [vmem:[%s3707 + $0x4] sm:$0xf]
        %v3710 = vld [vmem:[%s3707 + $0x8] sm:$0xf]
        %v3711 = vld [vmem:[%s3707 + $0xc] sm:$0xf]
        %v3712 = vld [vmem:[%s3707 + $0x10] sm:$0xf]
        %v3713 = vld [vmem:[%s3707 + $0x14] sm:$0xf]
        %v3714 = vld [vmem:[%s3707 + $0x18] sm:$0xf]
        %v3716 = vunpack.c.l.b16 %v3706
        %v3717 = vpack.c.b16 %v3716, %v3716
        %v3719 = vshrl.u32 %v3632, 16
        %v3721 = vrot.slane %v3719, 3
        %v3722 = vshll.u32 %v3632, 16
        %v3724 = vrot.slane %v3722, 4
        %v3725 = vor.u32 %v3721, %v3724
        %v3727 = vshrl.u32 %v3717, 16
        %v3729 = vrot.slane %v3727, 3
        %v3730 = vshll.u32 %v3717, 16
        %v3732 = vrot.slane %v3730, 4
        %v3733 = vor.u32 %v3729, %v3732
        %v3734 = vsel %vm789, %v3725, %v3733
        %v3742 = vunpack.c.l.b16 %v3708
        %v3743 = vunpack.c.l.b16 %v3709
        %v3744 = vunpack.c.l.b16 %v3710
        %v3745 = vunpack.c.l.b16 %v3711
        %v3746 = vunpack.c.l.b16 %v3712
        %v3747 = vunpack.c.l.b16 %v3713
        %v3748 = vunpack.c.l.b16 %v3714
        %v3749 = vpack.c.b16 %v3743, %v3742
        %v3750 = vpack.c.b16 %v3745, %v3744
        %v3751 = vpack.c.b16 %v3747, %v3746
        %v3752 = vpack.c.b16 %v3748, %v3748
        %v3757 = vsel %vm203, %v3734, 0
        %v3760 = vsel %vm207, %v3752, 0
        %3762 = vmatprep.subr.bf16.mxu0 0
        %3763 = vmatpush1.bf16.msra.mxu0 0
        %3764 = vmatprep.subr.bf16.mxu0 0
        %3765 = vmatpush1.bf16.msra.mxu0 0
        %3766 = vmatprep.subr.bf16.mxu0 0
        %3767 = vmatpush1.bf16.msra.mxu0 0
        %3768 = vmatprep.subr.bf16.mxu0 0
        %3769 = vmatpush1.bf16.msra.mxu0 0
        %3770 = vmatprep.subr.bf16.mxu0 0
        %3771 = vmatpush1.bf16.msra.mxu0 %v3760
        %3772 = vmatprep.subr.bf16.mxu0 0
        %3773 = vmatpush1.bf16.msra.mxu0 %v3751
        %3774 = vmatprep.subr.bf16.mxu0 0
        %3775 = vmatpush1.bf16.msra.mxu0 %v3750
        %3776 = vmatprep.subr.bf16.mxu0 0
        %3777 = vmatpush1.bf16.msra.mxu0 %v3749
        %3778 = vmatprep.subr.bf16.mxu0 0
        %3779 = vmatpush2.bf16.msra.mxu0 0
        %3780 = vmatprep.subr.bf16.mxu0 0
        %3781 = vmatpush2.bf16.msra.mxu0 0
        %3782 = vmatprep.subr.bf16.mxu0 0
        %3783 = vmatpush2.bf16.msra.mxu0 0
        %3784 = vmatprep.subr.bf16.mxu0 0
        %3785 = vmatpush2.bf16.msra.mxu0 0
        %3786 = vmatprep.subr.bf16.mxu0 0
        %3787 = vmatpush2.bf16.msra.mxu0 0
        %3788 = vmatprep.subr.bf16.mxu0 0
        %3789 = vmatpush2.bf16.msra.mxu0 0
        %3790 = vmatprep.subr.bf16.mxu0 0
        %3791 = vmatpush2.bf16.msra.mxu0 0
        %3792 = vmatprep.subr.bf16.mxu0 0
        %3793 = vmatpush2.bf16.msra.mxu0 0
        %3794 = vmatprep.mubr.bf16.mxu0 0
        %3795 = vmatmul.mubr.bf16.gmra.mxu0 %v3757
        %v3796 = vpop.f32.mrf.mxu0
        %v3797 = vadd.f32 0.0, %v3796
        %v3798 = vpop.f32.mrf.mxu0
        %v3799 = vpop.f32.mrf.mxu0
        %v3800 = vadd.f32 0.0, %v3799
        %v3801 = vpop.f32.mrf.mxu0
        %3802 = vdwg.mxu0
        %v3803 = vadd.f32 %v3704, %v3797
        %v3804 = vadd.f32 %v3705, %v3800
        %s3805 = scalar_lea.vmem %s0, 1120
        %v3806 = vld [vmem:[%s3805] sm:$0xf]
        %v3807 = vld [vmem:[%s3805 + $0x4] sm:$0xf]
        %v3808 = vld [vmem:[%s3805 + $0x8] sm:$0xf]
        %v3809 = vld [vmem:[%s3805 + $0xc] sm:$0xf]
        %v3810 = vld [vmem:[%s3805 + $0x10] sm:$0xf]
        %v3811 = vld [vmem:[%s3805 + $0x14] sm:$0xf]
        %v3812 = vld [vmem:[%s3805 + $0x18] sm:$0xf]
        %v3813 = vpack.c.b16 %v3716, %v3167
        %v3821 = vunpack.c.l.b16 %v3806
        %v3822 = vunpack.c.l.b16 %v3807
        %v3823 = vunpack.c.l.b16 %v3808
        %v3824 = vunpack.c.l.b16 %v3809
        %v3825 = vunpack.c.l.b16 %v3810
        %v3826 = vunpack.c.l.b16 %v3811
        %v3827 = vunpack.c.l.b16 %v3812
        %v3828 = vpack.c.b16 %v3822, %v3821
        %v3829 = vpack.c.b16 %v3824, %v3823
        %v3830 = vpack.c.b16 %v3826, %v3825
        %v3831 = vpack.c.b16 %v3827, %v3827
        %v3836 = vsel %vm203, %v3813, 0
        %v3839 = vsel %vm207, %v3831, 0
        %3841 = vmatprep.subr.bf16.mxu0 0
        %3842 = vmatpush1.bf16.msra.mxu0 0
        %3843 = vmatprep.subr.bf16.mxu0 0
        %3844 = vmatpush1.bf16.msra.mxu0 0
        %3845 = vmatprep.subr.bf16.mxu0 0
        %3846 = vmatpush1.bf16.msra.mxu0 0
        %3847 = vmatprep.subr.bf16.mxu0 0
        %3848 = vmatpush1.bf16.msra.mxu0 0
        %3849 = vmatprep.subr.bf16.mxu0 0
        %3850 = vmatpush1.bf16.msra.mxu0 %v3839
        %3851 = vmatprep.subr.bf16.mxu0 0
        %3852 = vmatpush1.bf16.msra.mxu0 %v3830
        %3853 = vmatprep.subr.bf16.mxu0 0
        %3854 = vmatpush1.bf16.msra.mxu0 %v3829
        %3855 = vmatprep.subr.bf16.mxu0 0
        %3856 = vmatpush1.bf16.msra.mxu0 %v3828
        %3857 = vmatprep.subr.bf16.mxu0 0
        %3858 = vmatpush2.bf16.msra.mxu0 0
        %3859 = vmatprep.subr.bf16.mxu0 0
        %3860 = vmatpush2.bf16.msra.mxu0 0
        %3861 = vmatprep.subr.bf16.mxu0 0
        %3862 = vmatpush2.bf16.msra.mxu0 0
        %3863 = vmatprep.subr.bf16.mxu0 0
        %3864 = vmatpush2.bf16.msra.mxu0 0
        %3865 = vmatprep.subr.bf16.mxu0 0
        %3866 = vmatpush2.bf16.msra.mxu0 0
        %3867 = vmatprep.subr.bf16.mxu0 0
        %3868 = vmatpush2.bf16.msra.mxu0 0
        %3869 = vmatprep.subr.bf16.mxu0 0
        %3870 = vmatpush2.bf16.msra.mxu0 0
        %3871 = vmatprep.subr.bf16.mxu0 0
        %3872 = vmatpush2.bf16.msra.mxu0 0
        %3873 = vmatprep.mubr.bf16.mxu0 0
        %3874 = vmatmul.mubr.bf16.gmra.mxu0 %v3836
        %v3875 = vpop.f32.mrf.mxu0
        %v3876 = vadd.f32 0.0, %v3875
        %v3877 = vpop.f32.mrf.mxu0
        %v3878 = vpop.f32.mrf.mxu0
        %v3879 = vadd.f32 0.0, %v3878
        %v3880 = vpop.f32.mrf.mxu0
        %3881 = vdwg.mxu0
        %v3882 = vadd.f32 %v3803, %v3876
        %v3883 = vadd.f32 %v3804, %v3879
        %vm3884 = vcmask 130048
        %3885 = vst.msk [vmem:[%s136] sm:$0xff] %vm3884, %v3882
        %3886 = vst.msk [vmem:[%s136 + $0x8] sm:$0xff] %vm3884, %v3883
        %s3887 = sand.u32 %s71, 1
        %s3888 = scalar_lea.sflag [#allocation3], %s3887
        %s3889 = sand.u32 %s71, 1
        %s3890 = smul.addr %s3889, 16
        %s3891 = scalar_lea.vmem [#allocation2], %s3890
        // Predicated region
        $region29: #{tpu_custom_call.1} parent=27 // pred_check
          %p3892 = pneg %p81
        $region30: #{tpu_custom_call.1} parent=27 // pred_check_branch
          %3894 = sbr.rel (%p3892) target = $region32
        $region31: #{tpu_custom_call.1} parent=27 // pred_region
          %s3896 = ssub.s32 256, 256
          %3897 = vsyncadd %s3888, %s3896
          %s3898 = smul.addr %s16, 2
          %s3899 = smul.addr %s3898, 128
          %s3900 = scalar_lea.hbm %s2, %s3899
          %s3901 = sshll.u32 %s3891, 4
          %s3902 = int_to_ptr.vmem [resolvable:$true] %s3901
          %3907 = dma.vmem_to_hbm [thread:$0]  %s3902, 256, %s3900, %s3888, 128, 128, 8
        $region32: #{tpu_custom_call.1} parent=27 // pred_fallthru
          _
      $region28: #{tpu_custom_call.1} parent=5 // pred_fallthru
        _
      %p3908 = scmp.le.s32.totalorder 2, %s11
      // Predicated region
      $region33: #{tpu_custom_call.1} parent=5 // pred_check
        %p3909 = pneg %p3908
      $region34: #{tpu_custom_call.1} parent=5 // pred_check_branch
        %3911 = sbr.rel (%p3909) target = $region36
      $region35: #{tpu_custom_call.1} parent=5 // pred_region
        %s3912 = ssub.s32 %s11, 2
        // Predicated region
        $region37: #{tpu_custom_call.1} parent=35 // pred_check
          %p3913 = pneg %p87
        $region38: #{tpu_custom_call.1} parent=35 // pred_check_branch
          %3915 = sbr.rel (%p3913) target = $region40
        $region39: #{tpu_custom_call.1} parent=35 // pred_region
          %s3916 = sand.u32 %s72, 1
          %s3917 = scalar_lea.sflag [#allocation3], %s3916
          %s3918 = sand.u32 %s72, 1
          %s3919 = smul.addr %s3918, 16
          %s3920 = scalar_lea.vmem [#allocation2], %s3919
          %3921 = dma.done %s3917, 256
        $region40: #{tpu_custom_call.1} parent=35 // pred_fallthru
          _
      $region36: #{tpu_custom_call.1} parent=5 // pred_fallthru
        _
    $region6: #{tpu_custom_call.1} parent=1 // loop_footer
      %s15 = sadd.s32 1, %s11
    $region7: #{tpu_custom_call.1} parent=1 // loop_footer_branch
      %10 = sbr.rel target = $region3
    $region8: #{tpu_custom_call.1} parent=1 // loop_exit
      _
    %3922 = vsyncpa [#allocation3], 1
    %s3923 = scalar_lea.sflag [#allocation3], 1
    %3924 = vsyncpa %s3923, 1

</llo_original>
